<compile_context>
chip_gen: v5e
topology: v5e:2x2
jax: 0.10.0
libtpu: 0.0.40
codegen_flags: <defaults>
</compile_context>

<pallas_src>
import functools

import jax
import jax.numpy as jnp
from jax.experimental import pallas as pl
from jax.experimental.pallas import tpu as pltpu

EPS = 1e-5
_VMEM_LIMIT = 32 * 1024 * 1024  # safe scoped limit on v5e / v6e / v7x


def cnn_forward(x, w, b, gamma, beta, alpha, *, k):
    """x: (N, C_in, L) f32, L even, k odd.  Returns (N, C_out, L // 2) f32."""
    n, c_in, length = x.shape
    c_out = w.shape[0]
    assert k % 2 == 1, "kernel assumes odd conv kernel size (module default k=3)"
    assert length % 2 == 0, "MaxPool1d(2) pairing requires an even length"
    pad = k // 2
    l2 = length // 2              # pooled output length
    l_half = l2 + pad             # per-phase (even/odd) padded length

    # Whole problem is processed in one kernel invocation; guard VMEM footprint.
    in_bytes = 2 * c_in * n * l_half * 4
    out_bytes = c_out * n * l2 * 4
    assert 2 * (in_bytes + out_bytes) < 16 * 1024 * 1024, (
        "problem too large for the single-invocation kernel; "
        "TODO(synk): add 2-phase batch/length tiling")

    # ---- host-side glue: pad + even/odd de-interleave ----
    # x_eo[q, ci, b, d] = x_pad[b, ci, 2*d + q]
    x_p = jnp.pad(x, ((0, 0), (0, 0), (pad, pad)))                    # (N, C_in, L+2p)
    x_eo = x_p.reshape(n, c_in, l_half, 2).transpose(3, 1, 0, 2)      # (2, C_in, N, l_half)

    # Per-channel scalars -> SMEM (flat 1-D to avoid 2-D SMEM padding blowup).
    w_flat = w.reshape(c_out * c_in * k).astype(jnp.float32)
    b_arr = b.astype(jnp.float32).reshape(c_out)
    g_arr = gamma.astype(jnp.float32).reshape(c_out)
    be_arr = beta.astype(jnp.float32).reshape(c_out)
    a_arr = jnp.asarray(alpha, jnp.float32).reshape(-1)[:1]           # shared alpha

    count = float(n * length)
    ck = c_in * k

    def kernel(x_ref, w_ref, b_ref, g_ref, be_ref, a_ref, out_ref):
        a = a_ref[0]                                    # PReLU alpha (hoisted)

        # Hoisted shifted slices: k+1 distinct (phase q, lane offset d) views,
        # each loaded once for all input channels and all samples.
        xs = []
        for s in range(k + 1):
            q, d = s % 2, s // 2
            xs.append(x_ref[q, :, :, d:d + l2])         # (C_in, N, l2)

        # Conv for both output phases, all samples at once: per (phase, c_out)
        # accumulator of shape (N, l2); scalar(SMEM) * tile VPU FMAs.
        acc = [[jnp.zeros((n, l2), jnp.float32) for _ in range(c_out)]
               for _ in range(2)]
        for t in range(2):
            for j in range(k):
                s = t + j
                for ci in range(c_in):
                    x_sl = xs[s][ci]                    # (N, l2)
                    col = ci * k + j
                    for co in range(c_out):
                        acc[t][co] = acc[t][co] + w_ref[co * ck + col] * x_sl

        # Per channel: bias, train-mode BN stats over (N, L), affine, PReLU,
        # MaxPool1d(2) (max over the two phases), single tile store.
        for co in range(c_out):
            y0 = acc[0][co] + b_ref[co]                 # conv @ even positions
            y1 = acc[1][co] + b_ref[co]                 # conv @ odd positions
            r0 = jnp.sum(y0, axis=1, keepdims=True)     # (N, 1) lane reduce
            r1 = jnp.sum(y1, axis=1, keepdims=True)
            q0 = jnp.sum(y0 * y0, axis=1, keepdims=True)
            q1 = jnp.sum(y1 * y1, axis=1, keepdims=True)
            ssum = jnp.sum(r0 + r1, axis=0, keepdims=True)   # (1, 1)
            ssq = jnp.sum(q0 + q1, axis=0, keepdims=True)    # (1, 1)
            mean = ssum / count
            var = jnp.maximum(ssq / count - mean * mean, 0.0)  # clamp cancellation
            scale = g_ref[co] * jax.lax.rsqrt(var + EPS)       # (1, 1)
            shift = be_ref[co] - mean * scale                  # (1, 1)
            z0 = y0 * scale + shift
            z1 = y1 * scale + shift
            p0 = jnp.where(z0 >= 0.0, z0, a * z0)              # PReLU
            p1 = jnp.where(z1 >= 0.0, z1, a * z1)
            out_ref[co] = jnp.maximum(p0, p1).astype(out_ref.dtype)

    out_cnl = pl.pallas_call(
        kernel,
        out_shape=jax.ShapeDtypeStruct((c_out, n, l2), jnp.float32),
        grid=(1,),
        in_specs=[
            pl.BlockSpec((2, c_in, n, l_half), lambda i: (0, 0, 0, 0)),
            pl.BlockSpec(memory_space=pltpu.MemorySpace.SMEM),   # conv weight
            pl.BlockSpec(memory_space=pltpu.MemorySpace.SMEM),   # conv bias
            pl.BlockSpec(memory_space=pltpu.MemorySpace.SMEM),   # BN gamma
            pl.BlockSpec(memory_space=pltpu.MemorySpace.SMEM),   # BN beta
            pl.BlockSpec(memory_space=pltpu.MemorySpace.SMEM),   # PReLU alpha
        ],
        out_specs=pl.BlockSpec((c_out, n, l2), lambda i: (0, 0, 0)),
        compiler_params=pltpu.CompilerParams(
            dimension_semantics=("arbitrary",), vmem_limit_bytes=_VMEM_LIMIT),
    )(x_eo, w_flat, b_arr, g_arr, be_arr, a_arr)

    # Restore the module's (N, C_out, L/2) layout (host-side layout plumbing).
    return out_cnl.transpose(1, 0, 2)


def _reference(x, w, b, gamma, beta, alpha, *, k):
    """Pure-JAX reference of the module's train-mode forward."""
    pad = k // 2
    n, c_in, length = x.shape
    c_out = w.shape[0]
    x_p = jnp.pad(x, ((0, 0), (0, 0), (pad, pad)))
    y = jnp.zeros((n, c_out, length), jnp.float32)
    for j in range(k):
        y = y + jnp.einsum("oc,ncl->nol", w[:, :, j], x_p[:, :, j:j + length])
    y = y + b[None, :, None]
    mean = jnp.mean(y, axis=(0, 2), keepdims=True)
    var = jnp.mean((y - mean) ** 2, axis=(0, 2), keepdims=True)
    yh = (y - mean) * jax.lax.rsqrt(var + EPS)
    yh = yh * gamma[None, :, None] + beta[None, :, None]
    act = jnp.where(yh >= 0, yh, alpha * yh)
    return jnp.max(act.reshape(n, c_out, length // 2, 2), axis=-1)


if __name__ == "__main__":
    N, C_IN, C_OUT, L, K = 2, 4, 8, 16, 3

    key = jax.random.PRNGKey(0)
    kx, kw, kb = jax.random.split(key, 3)

    x = jax.random.normal(kx, (N, C_IN, L), dtype=jnp.float32)
    # Deterministic synthetic parameters (shapes follow the nn.Module __init__).
    w = 0.1 * jax.random.normal(kw, (C_OUT, C_IN, K), dtype=jnp.float32)   # Conv1d weight
    b = 0.1 * jax.random.normal(kb, (C_OUT,), dtype=jnp.float32)           # Conv1d bias
    gamma = jnp.ones((C_OUT,), jnp.float32)                                # BatchNorm weight
    beta = jnp.zeros((C_OUT,), jnp.float32)                                # BatchNorm bias
    alpha = 0.25                                                           # PReLU default

    fwd = jax.jit(functools.partial(cnn_forward, k=K))
    out = fwd(x, w, b, gamma, beta, alpha)
    jax.block_until_ready(out)

    assert out.shape == (N, C_OUT, L // 2), out.shape

    ref = _reference(x, w, b, gamma, beta, alpha, k=K)
    err = float(jnp.max(jnp.abs(out - ref)))
    assert err < 1e-4, f"max abs error vs reference: {err}"

    print("KERNEL_OK")
</pallas_src>

<mosaic_0001>
module attributes {stable_mosaic.version = 11 : i64} {
  func.func @kernel(%arg0: i32, %arg1: memref<2x4x2x9xf32, #tpu.memory_space<vmem>>, %arg2: memref<96xf32, #tpu.memory_space<smem>>, %arg3: memref<8xf32, #tpu.memory_space<smem>>, %arg4: memref<8xf32, #tpu.memory_space<smem>>, %arg5: memref<8xf32, #tpu.memory_space<smem>>, %arg6: memref<1xf32, #tpu.memory_space<smem>>, %arg7: memref<8x2x8xf32, #tpu.memory_space<vmem>>) attributes {dimension_semantics = [#tpu.dimension_semantics<arbitrary>], iteration_bounds = array<i64: 1>, scalar_prefetch = 0 : i64, scratch_operands = 0 : i64, tpu.core_type = #tpu.core_type<tc>, window_params = [{pipeline_mode = #tpu.pipeline_mode<synchronous>, transform_indices = @transform_0, window_bounds = array<i64: 2, 4, 2, 9>}, {transform_indices = @transform_1, window_bounds = array<i64: 96>}, {transform_indices = @transform_2, window_bounds = array<i64: 8>}, {transform_indices = @transform_3, window_bounds = array<i64: 8>}, {transform_indices = @transform_4, window_bounds = array<i64: 8>}, {transform_indices = @transform_5, window_bounds = array<i64: 1>}, {pipeline_mode = #tpu.pipeline_mode<synchronous>, transform_indices = @transform_6, window_bounds = array<i64: 8, 2, 8>}]} {
    %c0 = arith.constant 0 : index
    %0 = memref.load %arg6[%c0] : memref<1xf32, #tpu.memory_space<smem>>
    %c0_0 = arith.constant 0 : index
    %c0_1 = arith.constant 0 : index
    %c0_2 = arith.constant 0 : index
    %c0_3 = arith.constant 0 : index
    %1 = vector.load %arg1[%c0_0, %c0_1, %c0_2, %c0_3] : memref<2x4x2x9xf32, #tpu.memory_space<vmem>>, vector<1x4x2x8xf32>
    %2 = vector.shape_cast %1 : vector<1x4x2x8xf32> to vector<4x2x8xf32>
    %c1 = arith.constant 1 : index
    %c0_4 = arith.constant 0 : index
    %c0_5 = arith.constant 0 : index
    %c0_6 = arith.constant 0 : index
    %3 = vector.load %arg1[%c1, %c0_4, %c0_5, %c0_6] : memref<2x4x2x9xf32, #tpu.memory_space<vmem>>, vector<1x4x2x8xf32>
    %4 = vector.shape_cast %3 : vector<1x4x2x8xf32> to vector<4x2x8xf32>
    %c0_7 = arith.constant 0 : index
    %c0_8 = arith.constant 0 : index
    %c0_9 = arith.constant 0 : index
    %c1_10 = arith.constant 1 : index
    %5 = vector.load %arg1[%c0_7, %c0_8, %c0_9, %c1_10] : memref<2x4x2x9xf32, #tpu.memory_space<vmem>>, vector<1x4x2x8xf32>
    %6 = vector.shape_cast %5 : vector<1x4x2x8xf32> to vector<4x2x8xf32>
    %c1_11 = arith.constant 1 : index
    %c0_12 = arith.constant 0 : index
    %c0_13 = arith.constant 0 : index
    %c1_14 = arith.constant 1 : index
    %7 = vector.load %arg1[%c1_11, %c0_12, %c0_13, %c1_14] : memref<2x4x2x9xf32, #tpu.memory_space<vmem>>, vector<1x4x2x8xf32>
    %8 = vector.shape_cast %7 : vector<1x4x2x8xf32> to vector<4x2x8xf32>
    %cst = arith.constant 0.000000e+00 : f32
    %9 = vector.broadcast %cst : f32 to vector<2x8xf32>
    %cst_15 = arith.constant 0.000000e+00 : f32
    %10 = vector.broadcast %cst_15 : f32 to vector<2x8xf32>
    %cst_16 = arith.constant 0.000000e+00 : f32
    %11 = vector.broadcast %cst_16 : f32 to vector<2x8xf32>
    %cst_17 = arith.constant 0.000000e+00 : f32
    %12 = vector.broadcast %cst_17 : f32 to vector<2x8xf32>
    %cst_18 = arith.constant 0.000000e+00 : f32
    %13 = vector.broadcast %cst_18 : f32 to vector<2x8xf32>
    %cst_19 = arith.constant 0.000000e+00 : f32
    %14 = vector.broadcast %cst_19 : f32 to vector<2x8xf32>
    %cst_20 = arith.constant 0.000000e+00 : f32
    %15 = vector.broadcast %cst_20 : f32 to vector<2x8xf32>
    %cst_21 = arith.constant 0.000000e+00 : f32
    %16 = vector.broadcast %cst_21 : f32 to vector<2x8xf32>
    %cst_22 = arith.constant 0.000000e+00 : f32
    %17 = vector.broadcast %cst_22 : f32 to vector<2x8xf32>
    %cst_23 = arith.constant 0.000000e+00 : f32
    %18 = vector.broadcast %cst_23 : f32 to vector<2x8xf32>
    %cst_24 = arith.constant 0.000000e+00 : f32
    %19 = vector.broadcast %cst_24 : f32 to vector<2x8xf32>
    %cst_25 = arith.constant 0.000000e+00 : f32
    %20 = vector.broadcast %cst_25 : f32 to vector<2x8xf32>
    %cst_26 = arith.constant 0.000000e+00 : f32
    %21 = vector.broadcast %cst_26 : f32 to vector<2x8xf32>
    %cst_27 = arith.constant 0.000000e+00 : f32
    %22 = vector.broadcast %cst_27 : f32 to vector<2x8xf32>
    %cst_28 = arith.constant 0.000000e+00 : f32
    %23 = vector.broadcast %cst_28 : f32 to vector<2x8xf32>
    %cst_29 = arith.constant 0.000000e+00 : f32
    %24 = vector.broadcast %cst_29 : f32 to vector<2x8xf32>
    %25 = vector.extract_strided_slice %2 {offsets = [0, 0, 0], sizes = [1, 2, 8], strides = [1, 1, 1]} : vector<4x2x8xf32> to vector<1x2x8xf32>
    %26 = vector.shape_cast %25 : vector<1x2x8xf32> to vector<2x8xf32>
    %c0_30 = arith.constant 0 : index
    %27 = memref.load %arg2[%c0_30] : memref<96xf32, #tpu.memory_space<smem>>
    %28 = vector.broadcast %27 : f32 to vector<2x8xf32>
    %29 = arith.mulf %28, %26 : vector<2x8xf32>
    %30 = arith.addf %9, %29 : vector<2x8xf32>
    %c12 = arith.constant 12 : index
    %31 = memref.load %arg2[%c12] : memref<96xf32, #tpu.memory_space<smem>>
    %32 = vector.broadcast %31 : f32 to vector<2x8xf32>
    %33 = arith.mulf %32, %26 : vector<2x8xf32>
    %34 = arith.addf %10, %33 : vector<2x8xf32>
    %c24 = arith.constant 24 : index
    %35 = memref.load %arg2[%c24] : memref<96xf32, #tpu.memory_space<smem>>
    %36 = vector.broadcast %35 : f32 to vector<2x8xf32>
    %37 = arith.mulf %36, %26 : vector<2x8xf32>
    %38 = arith.addf %11, %37 : vector<2x8xf32>
    %c36 = arith.constant 36 : index
    %39 = memref.load %arg2[%c36] : memref<96xf32, #tpu.memory_space<smem>>
    %40 = vector.broadcast %39 : f32 to vector<2x8xf32>
    %41 = arith.mulf %40, %26 : vector<2x8xf32>
    %42 = arith.addf %12, %41 : vector<2x8xf32>
    %c48 = arith.constant 48 : index
    %43 = memref.load %arg2[%c48] : memref<96xf32, #tpu.memory_space<smem>>
    %44 = vector.broadcast %43 : f32 to vector<2x8xf32>
    %45 = arith.mulf %44, %26 : vector<2x8xf32>
    %46 = arith.addf %13, %45 : vector<2x8xf32>
    %c60 = arith.constant 60 : index
    %47 = memref.load %arg2[%c60] : memref<96xf32, #tpu.memory_space<smem>>
    %48 = vector.broadcast %47 : f32 to vector<2x8xf32>
    %49 = arith.mulf %48, %26 : vector<2x8xf32>
    %50 = arith.addf %14, %49 : vector<2x8xf32>
    %c72 = arith.constant 72 : index
    %51 = memref.load %arg2[%c72] : memref<96xf32, #tpu.memory_space<smem>>
    %52 = vector.broadcast %51 : f32 to vector<2x8xf32>
    %53 = arith.mulf %52, %26 : vector<2x8xf32>
    %54 = arith.addf %15, %53 : vector<2x8xf32>
    %c84 = arith.constant 84 : index
    %55 = memref.load %arg2[%c84] : memref<96xf32, #tpu.memory_space<smem>>
    %56 = vector.broadcast %55 : f32 to vector<2x8xf32>
    %57 = arith.mulf %56, %26 : vector<2x8xf32>
    %58 = arith.addf %16, %57 : vector<2x8xf32>
    %59 = vector.extract_strided_slice %2 {offsets = [1, 0, 0], sizes = [1, 2, 8], strides = [1, 1, 1]} : vector<4x2x8xf32> to vector<1x2x8xf32>
    %60 = vector.shape_cast %59 : vector<1x2x8xf32> to vector<2x8xf32>
    %c3 = arith.constant 3 : index
    %61 = memref.load %arg2[%c3] : memref<96xf32, #tpu.memory_space<smem>>
    %62 = vector.broadcast %61 : f32 to vector<2x8xf32>
    %63 = arith.mulf %62, %60 : vector<2x8xf32>
    %64 = arith.addf %30, %63 : vector<2x8xf32>
    %c15 = arith.constant 15 : index
    %65 = memref.load %arg2[%c15] : memref<96xf32, #tpu.memory_space<smem>>
    %66 = vector.broadcast %65 : f32 to vector<2x8xf32>
    %67 = arith.mulf %66, %60 : vector<2x8xf32>
    %68 = arith.addf %34, %67 : vector<2x8xf32>
    %c27 = arith.constant 27 : index
    %69 = memref.load %arg2[%c27] : memref<96xf32, #tpu.memory_space<smem>>
    %70 = vector.broadcast %69 : f32 to vector<2x8xf32>
    %71 = arith.mulf %70, %60 : vector<2x8xf32>
    %72 = arith.addf %38, %71 : vector<2x8xf32>
    %c39 = arith.constant 39 : index
    %73 = memref.load %arg2[%c39] : memref<96xf32, #tpu.memory_space<smem>>
    %74 = vector.broadcast %73 : f32 to vector<2x8xf32>
    %75 = arith.mulf %74, %60 : vector<2x8xf32>
    %76 = arith.addf %42, %75 : vector<2x8xf32>
    %c51 = arith.constant 51 : index
    %77 = memref.load %arg2[%c51] : memref<96xf32, #tpu.memory_space<smem>>
    %78 = vector.broadcast %77 : f32 to vector<2x8xf32>
    %79 = arith.mulf %78, %60 : vector<2x8xf32>
    %80 = arith.addf %46, %79 : vector<2x8xf32>
    %c63 = arith.constant 63 : index
    %81 = memref.load %arg2[%c63] : memref<96xf32, #tpu.memory_space<smem>>
    %82 = vector.broadcast %81 : f32 to vector<2x8xf32>
    %83 = arith.mulf %82, %60 : vector<2x8xf32>
    %84 = arith.addf %50, %83 : vector<2x8xf32>
    %c75 = arith.constant 75 : index
    %85 = memref.load %arg2[%c75] : memref<96xf32, #tpu.memory_space<smem>>
    %86 = vector.broadcast %85 : f32 to vector<2x8xf32>
    %87 = arith.mulf %86, %60 : vector<2x8xf32>
    %88 = arith.addf %54, %87 : vector<2x8xf32>
    %c87 = arith.constant 87 : index
    %89 = memref.load %arg2[%c87] : memref<96xf32, #tpu.memory_space<smem>>
    %90 = vector.broadcast %89 : f32 to vector<2x8xf32>
    %91 = arith.mulf %90, %60 : vector<2x8xf32>
    %92 = arith.addf %58, %91 : vector<2x8xf32>
    %93 = vector.extract_strided_slice %2 {offsets = [2, 0, 0], sizes = [1, 2, 8], strides = [1, 1, 1]} : vector<4x2x8xf32> to vector<1x2x8xf32>
    %94 = vector.shape_cast %93 : vector<1x2x8xf32> to vector<2x8xf32>
    %c6 = arith.constant 6 : index
    %95 = memref.load %arg2[%c6] : memref<96xf32, #tpu.memory_space<smem>>
    %96 = vector.broadcast %95 : f32 to vector<2x8xf32>
    %97 = arith.mulf %96, %94 : vector<2x8xf32>
    %98 = arith.addf %64, %97 : vector<2x8xf32>
    %c18 = arith.constant 18 : index
    %99 = memref.load %arg2[%c18] : memref<96xf32, #tpu.memory_space<smem>>
    %100 = vector.broadcast %99 : f32 to vector<2x8xf32>
    %101 = arith.mulf %100, %94 : vector<2x8xf32>
    %102 = arith.addf %68, %101 : vector<2x8xf32>
    %c30 = arith.constant 30 : index
    %103 = memref.load %arg2[%c30] : memref<96xf32, #tpu.memory_space<smem>>
    %104 = vector.broadcast %103 : f32 to vector<2x8xf32>
    %105 = arith.mulf %104, %94 : vector<2x8xf32>
    %106 = arith.addf %72, %105 : vector<2x8xf32>
    %c42 = arith.constant 42 : index
    %107 = memref.load %arg2[%c42] : memref<96xf32, #tpu.memory_space<smem>>
    %108 = vector.broadcast %107 : f32 to vector<2x8xf32>
    %109 = arith.mulf %108, %94 : vector<2x8xf32>
    %110 = arith.addf %76, %109 : vector<2x8xf32>
    %c54 = arith.constant 54 : index
    %111 = memref.load %arg2[%c54] : memref<96xf32, #tpu.memory_space<smem>>
    %112 = vector.broadcast %111 : f32 to vector<2x8xf32>
    %113 = arith.mulf %112, %94 : vector<2x8xf32>
    %114 = arith.addf %80, %113 : vector<2x8xf32>
    %c66 = arith.constant 66 : index
    %115 = memref.load %arg2[%c66] : memref<96xf32, #tpu.memory_space<smem>>
    %116 = vector.broadcast %115 : f32 to vector<2x8xf32>
    %117 = arith.mulf %116, %94 : vector<2x8xf32>
    %118 = arith.addf %84, %117 : vector<2x8xf32>
    %c78 = arith.constant 78 : index
    %119 = memref.load %arg2[%c78] : memref<96xf32, #tpu.memory_space<smem>>
    %120 = vector.broadcast %119 : f32 to vector<2x8xf32>
    %121 = arith.mulf %120, %94 : vector<2x8xf32>
    %122 = arith.addf %88, %121 : vector<2x8xf32>
    %c90 = arith.constant 90 : index
    %123 = memref.load %arg2[%c90] : memref<96xf32, #tpu.memory_space<smem>>
    %124 = vector.broadcast %123 : f32 to vector<2x8xf32>
    %125 = arith.mulf %124, %94 : vector<2x8xf32>
    %126 = arith.addf %92, %125 : vector<2x8xf32>
    %127 = vector.extract_strided_slice %2 {offsets = [3, 0, 0], sizes = [1, 2, 8], strides = [1, 1, 1]} : vector<4x2x8xf32> to vector<1x2x8xf32>
    %128 = vector.shape_cast %127 : vector<1x2x8xf32> to vector<2x8xf32>
    %c9 = arith.constant 9 : index
    %129 = memref.load %arg2[%c9] : memref<96xf32, #tpu.memory_space<smem>>
    %130 = vector.broadcast %129 : f32 to vector<2x8xf32>
    %131 = arith.mulf %130, %128 : vector<2x8xf32>
    %132 = arith.addf %98, %131 : vector<2x8xf32>
    %c21 = arith.constant 21 : index
    %133 = memref.load %arg2[%c21] : memref<96xf32, #tpu.memory_space<smem>>
    %134 = vector.broadcast %133 : f32 to vector<2x8xf32>
    %135 = arith.mulf %134, %128 : vector<2x8xf32>
    %136 = arith.addf %102, %135 : vector<2x8xf32>
    %c33 = arith.constant 33 : index
    %137 = memref.load %arg2[%c33] : memref<96xf32, #tpu.memory_space<smem>>
    %138 = vector.broadcast %137 : f32 to vector<2x8xf32>
    %139 = arith.mulf %138, %128 : vector<2x8xf32>
    %140 = arith.addf %106, %139 : vector<2x8xf32>
    %c45 = arith.constant 45 : index
    %141 = memref.load %arg2[%c45] : memref<96xf32, #tpu.memory_space<smem>>
    %142 = vector.broadcast %141 : f32 to vector<2x8xf32>
    %143 = arith.mulf %142, %128 : vector<2x8xf32>
    %144 = arith.addf %110, %143 : vector<2x8xf32>
    %c57 = arith.constant 57 : index
    %145 = memref.load %arg2[%c57] : memref<96xf32, #tpu.memory_space<smem>>
    %146 = vector.broadcast %145 : f32 to vector<2x8xf32>
    %147 = arith.mulf %146, %128 : vector<2x8xf32>
    %148 = arith.addf %114, %147 : vector<2x8xf32>
    %c69 = arith.constant 69 : index
    %149 = memref.load %arg2[%c69] : memref<96xf32, #tpu.memory_space<smem>>
    %150 = vector.broadcast %149 : f32 to vector<2x8xf32>
    %151 = arith.mulf %150, %128 : vector<2x8xf32>
    %152 = arith.addf %118, %151 : vector<2x8xf32>
    %c81 = arith.constant 81 : index
    %153 = memref.load %arg2[%c81] : memref<96xf32, #tpu.memory_space<smem>>
    %154 = vector.broadcast %153 : f32 to vector<2x8xf32>
    %155 = arith.mulf %154, %128 : vector<2x8xf32>
    %156 = arith.addf %122, %155 : vector<2x8xf32>
    %c93 = arith.constant 93 : index
    %157 = memref.load %arg2[%c93] : memref<96xf32, #tpu.memory_space<smem>>
    %158 = vector.broadcast %157 : f32 to vector<2x8xf32>
    %159 = arith.mulf %158, %128 : vector<2x8xf32>
    %160 = arith.addf %126, %159 : vector<2x8xf32>
    %161 = vector.extract_strided_slice %4 {offsets = [0, 0, 0], sizes = [1, 2, 8], strides = [1, 1, 1]} : vector<4x2x8xf32> to vector<1x2x8xf32>
    %162 = vector.shape_cast %161 : vector<1x2x8xf32> to vector<2x8xf32>
    %c1_31 = arith.constant 1 : index
    %163 = memref.load %arg2[%c1_31] : memref<96xf32, #tpu.memory_space<smem>>
    %164 = vector.broadcast %163 : f32 to vector<2x8xf32>
    %165 = arith.mulf %164, %162 : vector<2x8xf32>
    %166 = arith.addf %132, %165 : vector<2x8xf32>
    %c13 = arith.constant 13 : index
    %167 = memref.load %arg2[%c13] : memref<96xf32, #tpu.memory_space<smem>>
    %168 = vector.broadcast %167 : f32 to vector<2x8xf32>
    %169 = arith.mulf %168, %162 : vector<2x8xf32>
    %170 = arith.addf %136, %169 : vector<2x8xf32>
    %c25 = arith.constant 25 : index
    %171 = memref.load %arg2[%c25] : memref<96xf32, #tpu.memory_space<smem>>
    %172 = vector.broadcast %171 : f32 to vector<2x8xf32>
    %173 = arith.mulf %172, %162 : vector<2x8xf32>
    %174 = arith.addf %140, %173 : vector<2x8xf32>
    %c37 = arith.constant 37 : index
    %175 = memref.load %arg2[%c37] : memref<96xf32, #tpu.memory_space<smem>>
    %176 = vector.broadcast %175 : f32 to vector<2x8xf32>
    %177 = arith.mulf %176, %162 : vector<2x8xf32>
    %178 = arith.addf %144, %177 : vector<2x8xf32>
    %c49 = arith.constant 49 : index
    %179 = memref.load %arg2[%c49] : memref<96xf32, #tpu.memory_space<smem>>
    %180 = vector.broadcast %179 : f32 to vector<2x8xf32>
    %181 = arith.mulf %180, %162 : vector<2x8xf32>
    %182 = arith.addf %148, %181 : vector<2x8xf32>
    %c61 = arith.constant 61 : index
    %183 = memref.load %arg2[%c61] : memref<96xf32, #tpu.memory_space<smem>>
    %184 = vector.broadcast %183 : f32 to vector<2x8xf32>
    %185 = arith.mulf %184, %162 : vector<2x8xf32>
    %186 = arith.addf %152, %185 : vector<2x8xf32>
    %c73 = arith.constant 73 : index
    %187 = memref.load %arg2[%c73] : memref<96xf32, #tpu.memory_space<smem>>
    %188 = vector.broadcast %187 : f32 to vector<2x8xf32>
    %189 = arith.mulf %188, %162 : vector<2x8xf32>
    %190 = arith.addf %156, %189 : vector<2x8xf32>
    %c85 = arith.constant 85 : index
    %191 = memref.load %arg2[%c85] : memref<96xf32, #tpu.memory_space<smem>>
    %192 = vector.broadcast %191 : f32 to vector<2x8xf32>
    %193 = arith.mulf %192, %162 : vector<2x8xf32>
    %194 = arith.addf %160, %193 : vector<2x8xf32>
    %195 = vector.extract_strided_slice %4 {offsets = [1, 0, 0], sizes = [1, 2, 8], strides = [1, 1, 1]} : vector<4x2x8xf32> to vector<1x2x8xf32>
    %196 = vector.shape_cast %195 : vector<1x2x8xf32> to vector<2x8xf32>
    %c4 = arith.constant 4 : index
    %197 = memref.load %arg2[%c4] : memref<96xf32, #tpu.memory_space<smem>>
    %198 = vector.broadcast %197 : f32 to vector<2x8xf32>
    %199 = arith.mulf %198, %196 : vector<2x8xf32>
    %200 = arith.addf %166, %199 : vector<2x8xf32>
    %c16 = arith.constant 16 : index
    %201 = memref.load %arg2[%c16] : memref<96xf32, #tpu.memory_space<smem>>
    %202 = vector.broadcast %201 : f32 to vector<2x8xf32>
    %203 = arith.mulf %202, %196 : vector<2x8xf32>
    %204 = arith.addf %170, %203 : vector<2x8xf32>
    %c28 = arith.constant 28 : index
    %205 = memref.load %arg2[%c28] : memref<96xf32, #tpu.memory_space<smem>>
    %206 = vector.broadcast %205 : f32 to vector<2x8xf32>
    %207 = arith.mulf %206, %196 : vector<2x8xf32>
    %208 = arith.addf %174, %207 : vector<2x8xf32>
    %c40 = arith.constant 40 : index
    %209 = memref.load %arg2[%c40] : memref<96xf32, #tpu.memory_space<smem>>
    %210 = vector.broadcast %209 : f32 to vector<2x8xf32>
    %211 = arith.mulf %210, %196 : vector<2x8xf32>
    %212 = arith.addf %178, %211 : vector<2x8xf32>
    %c52 = arith.constant 52 : index
    %213 = memref.load %arg2[%c52] : memref<96xf32, #tpu.memory_space<smem>>
    %214 = vector.broadcast %213 : f32 to vector<2x8xf32>
    %215 = arith.mulf %214, %196 : vector<2x8xf32>
    %216 = arith.addf %182, %215 : vector<2x8xf32>
    %c64 = arith.constant 64 : index
    %217 = memref.load %arg2[%c64] : memref<96xf32, #tpu.memory_space<smem>>
    %218 = vector.broadcast %217 : f32 to vector<2x8xf32>
    %219 = arith.mulf %218, %196 : vector<2x8xf32>
    %220 = arith.addf %186, %219 : vector<2x8xf32>
    %c76 = arith.constant 76 : index
    %221 = memref.load %arg2[%c76] : memref<96xf32, #tpu.memory_space<smem>>
    %222 = vector.broadcast %221 : f32 to vector<2x8xf32>
    %223 = arith.mulf %222, %196 : vector<2x8xf32>
    %224 = arith.addf %190, %223 : vector<2x8xf32>
    %c88 = arith.constant 88 : index
    %225 = memref.load %arg2[%c88] : memref<96xf32, #tpu.memory_space<smem>>
    %226 = vector.broadcast %225 : f32 to vector<2x8xf32>
    %227 = arith.mulf %226, %196 : vector<2x8xf32>
    %228 = arith.addf %194, %227 : vector<2x8xf32>
    %229 = vector.extract_strided_slice %4 {offsets = [2, 0, 0], sizes = [1, 2, 8], strides = [1, 1, 1]} : vector<4x2x8xf32> to vector<1x2x8xf32>
    %230 = vector.shape_cast %229 : vector<1x2x8xf32> to vector<2x8xf32>
    %c7 = arith.constant 7 : index
    %231 = memref.load %arg2[%c7] : memref<96xf32, #tpu.memory_space<smem>>
    %232 = vector.broadcast %231 : f32 to vector<2x8xf32>
    %233 = arith.mulf %232, %230 : vector<2x8xf32>
    %234 = arith.addf %200, %233 : vector<2x8xf32>
    %c19 = arith.constant 19 : index
    %235 = memref.load %arg2[%c19] : memref<96xf32, #tpu.memory_space<smem>>
    %236 = vector.broadcast %235 : f32 to vector<2x8xf32>
    %237 = arith.mulf %236, %230 : vector<2x8xf32>
    %238 = arith.addf %204, %237 : vector<2x8xf32>
    %c31 = arith.constant 31 : index
    %239 = memref.load %arg2[%c31] : memref<96xf32, #tpu.memory_space<smem>>
    %240 = vector.broadcast %239 : f32 to vector<2x8xf32>
    %241 = arith.mulf %240, %230 : vector<2x8xf32>
    %242 = arith.addf %208, %241 : vector<2x8xf32>
    %c43 = arith.constant 43 : index
    %243 = memref.load %arg2[%c43] : memref<96xf32, #tpu.memory_space<smem>>
    %244 = vector.broadcast %243 : f32 to vector<2x8xf32>
    %245 = arith.mulf %244, %230 : vector<2x8xf32>
    %246 = arith.addf %212, %245 : vector<2x8xf32>
    %c55 = arith.constant 55 : index
    %247 = memref.load %arg2[%c55] : memref<96xf32, #tpu.memory_space<smem>>
    %248 = vector.broadcast %247 : f32 to vector<2x8xf32>
    %249 = arith.mulf %248, %230 : vector<2x8xf32>
    %250 = arith.addf %216, %249 : vector<2x8xf32>
    %c67 = arith.constant 67 : index
    %251 = memref.load %arg2[%c67] : memref<96xf32, #tpu.memory_space<smem>>
    %252 = vector.broadcast %251 : f32 to vector<2x8xf32>
    %253 = arith.mulf %252, %230 : vector<2x8xf32>
    %254 = arith.addf %220, %253 : vector<2x8xf32>
    %c79 = arith.constant 79 : index
    %255 = memref.load %arg2[%c79] : memref<96xf32, #tpu.memory_space<smem>>
    %256 = vector.broadcast %255 : f32 to vector<2x8xf32>
    %257 = arith.mulf %256, %230 : vector<2x8xf32>
    %258 = arith.addf %224, %257 : vector<2x8xf32>
    %c91 = arith.constant 91 : index
    %259 = memref.load %arg2[%c91] : memref<96xf32, #tpu.memory_space<smem>>
    %260 = vector.broadcast %259 : f32 to vector<2x8xf32>
    %261 = arith.mulf %260, %230 : vector<2x8xf32>
    %262 = arith.addf %228, %261 : vector<2x8xf32>
    %263 = vector.extract_strided_slice %4 {offsets = [3, 0, 0], sizes = [1, 2, 8], strides = [1, 1, 1]} : vector<4x2x8xf32> to vector<1x2x8xf32>
    %264 = vector.shape_cast %263 : vector<1x2x8xf32> to vector<2x8xf32>
    %c10 = arith.constant 10 : index
    %265 = memref.load %arg2[%c10] : memref<96xf32, #tpu.memory_space<smem>>
    %266 = vector.broadcast %265 : f32 to vector<2x8xf32>
    %267 = arith.mulf %266, %264 : vector<2x8xf32>
    %268 = arith.addf %234, %267 : vector<2x8xf32>
    %c22 = arith.constant 22 : index
    %269 = memref.load %arg2[%c22] : memref<96xf32, #tpu.memory_space<smem>>
    %270 = vector.broadcast %269 : f32 to vector<2x8xf32>
    %271 = arith.mulf %270, %264 : vector<2x8xf32>
    %272 = arith.addf %238, %271 : vector<2x8xf32>
    %c34 = arith.constant 34 : index
    %273 = memref.load %arg2[%c34] : memref<96xf32, #tpu.memory_space<smem>>
    %274 = vector.broadcast %273 : f32 to vector<2x8xf32>
    %275 = arith.mulf %274, %264 : vector<2x8xf32>
    %276 = arith.addf %242, %275 : vector<2x8xf32>
    %c46 = arith.constant 46 : index
    %277 = memref.load %arg2[%c46] : memref<96xf32, #tpu.memory_space<smem>>
    %278 = vector.broadcast %277 : f32 to vector<2x8xf32>
    %279 = arith.mulf %278, %264 : vector<2x8xf32>
    %280 = arith.addf %246, %279 : vector<2x8xf32>
    %c58 = arith.constant 58 : index
    %281 = memref.load %arg2[%c58] : memref<96xf32, #tpu.memory_space<smem>>
    %282 = vector.broadcast %281 : f32 to vector<2x8xf32>
    %283 = arith.mulf %282, %264 : vector<2x8xf32>
    %284 = arith.addf %250, %283 : vector<2x8xf32>
    %c70 = arith.constant 70 : index
    %285 = memref.load %arg2[%c70] : memref<96xf32, #tpu.memory_space<smem>>
    %286 = vector.broadcast %285 : f32 to vector<2x8xf32>
    %287 = arith.mulf %286, %264 : vector<2x8xf32>
    %288 = arith.addf %254, %287 : vector<2x8xf32>
    %c82 = arith.constant 82 : index
    %289 = memref.load %arg2[%c82] : memref<96xf32, #tpu.memory_space<smem>>
    %290 = vector.broadcast %289 : f32 to vector<2x8xf32>
    %291 = arith.mulf %290, %264 : vector<2x8xf32>
    %292 = arith.addf %258, %291 : vector<2x8xf32>
    %c94 = arith.constant 94 : index
    %293 = memref.load %arg2[%c94] : memref<96xf32, #tpu.memory_space<smem>>
    %294 = vector.broadcast %293 : f32 to vector<2x8xf32>
    %295 = arith.mulf %294, %264 : vector<2x8xf32>
    %296 = arith.addf %262, %295 : vector<2x8xf32>
    %297 = vector.extract_strided_slice %6 {offsets = [0, 0, 0], sizes = [1, 2, 8], strides = [1, 1, 1]} : vector<4x2x8xf32> to vector<1x2x8xf32>
    %298 = vector.shape_cast %297 : vector<1x2x8xf32> to vector<2x8xf32>
    %c2 = arith.constant 2 : index
    %299 = memref.load %arg2[%c2] : memref<96xf32, #tpu.memory_space<smem>>
    %300 = vector.broadcast %299 : f32 to vector<2x8xf32>
    %301 = arith.mulf %300, %298 : vector<2x8xf32>
    %302 = arith.addf %268, %301 : vector<2x8xf32>
    %c14 = arith.constant 14 : index
    %303 = memref.load %arg2[%c14] : memref<96xf32, #tpu.memory_space<smem>>
    %304 = vector.broadcast %303 : f32 to vector<2x8xf32>
    %305 = arith.mulf %304, %298 : vector<2x8xf32>
    %306 = arith.addf %272, %305 : vector<2x8xf32>
    %c26 = arith.constant 26 : index
    %307 = memref.load %arg2[%c26] : memref<96xf32, #tpu.memory_space<smem>>
    %308 = vector.broadcast %307 : f32 to vector<2x8xf32>
    %309 = arith.mulf %308, %298 : vector<2x8xf32>
    %310 = arith.addf %276, %309 : vector<2x8xf32>
    %c38 = arith.constant 38 : index
    %311 = memref.load %arg2[%c38] : memref<96xf32, #tpu.memory_space<smem>>
    %312 = vector.broadcast %311 : f32 to vector<2x8xf32>
    %313 = arith.mulf %312, %298 : vector<2x8xf32>
    %314 = arith.addf %280, %313 : vector<2x8xf32>
    %c50 = arith.constant 50 : index
    %315 = memref.load %arg2[%c50] : memref<96xf32, #tpu.memory_space<smem>>
    %316 = vector.broadcast %315 : f32 to vector<2x8xf32>
    %317 = arith.mulf %316, %298 : vector<2x8xf32>
    %318 = arith.addf %284, %317 : vector<2x8xf32>
    %c62 = arith.constant 62 : index
    %319 = memref.load %arg2[%c62] : memref<96xf32, #tpu.memory_space<smem>>
    %320 = vector.broadcast %319 : f32 to vector<2x8xf32>
    %321 = arith.mulf %320, %298 : vector<2x8xf32>
    %322 = arith.addf %288, %321 : vector<2x8xf32>
    %c74 = arith.constant 74 : index
    %323 = memref.load %arg2[%c74] : memref<96xf32, #tpu.memory_space<smem>>
    %324 = vector.broadcast %323 : f32 to vector<2x8xf32>
    %325 = arith.mulf %324, %298 : vector<2x8xf32>
    %326 = arith.addf %292, %325 : vector<2x8xf32>
    %c86 = arith.constant 86 : index
    %327 = memref.load %arg2[%c86] : memref<96xf32, #tpu.memory_space<smem>>
    %328 = vector.broadcast %327 : f32 to vector<2x8xf32>
    %329 = arith.mulf %328, %298 : vector<2x8xf32>
    %330 = arith.addf %296, %329 : vector<2x8xf32>
    %331 = vector.extract_strided_slice %6 {offsets = [1, 0, 0], sizes = [1, 2, 8], strides = [1, 1, 1]} : vector<4x2x8xf32> to vector<1x2x8xf32>
    %332 = vector.shape_cast %331 : vector<1x2x8xf32> to vector<2x8xf32>
    %c5 = arith.constant 5 : index
    %333 = memref.load %arg2[%c5] : memref<96xf32, #tpu.memory_space<smem>>
    %334 = vector.broadcast %333 : f32 to vector<2x8xf32>
    %335 = arith.mulf %334, %332 : vector<2x8xf32>
    %336 = arith.addf %302, %335 : vector<2x8xf32>
    %c17 = arith.constant 17 : index
    %337 = memref.load %arg2[%c17] : memref<96xf32, #tpu.memory_space<smem>>
    %338 = vector.broadcast %337 : f32 to vector<2x8xf32>
    %339 = arith.mulf %338, %332 : vector<2x8xf32>
    %340 = arith.addf %306, %339 : vector<2x8xf32>
    %c29 = arith.constant 29 : index
    %341 = memref.load %arg2[%c29] : memref<96xf32, #tpu.memory_space<smem>>
    %342 = vector.broadcast %341 : f32 to vector<2x8xf32>
    %343 = arith.mulf %342, %332 : vector<2x8xf32>
    %344 = arith.addf %310, %343 : vector<2x8xf32>
    %c41 = arith.constant 41 : index
    %345 = memref.load %arg2[%c41] : memref<96xf32, #tpu.memory_space<smem>>
    %346 = vector.broadcast %345 : f32 to vector<2x8xf32>
    %347 = arith.mulf %346, %332 : vector<2x8xf32>
    %348 = arith.addf %314, %347 : vector<2x8xf32>
    %c53 = arith.constant 53 : index
    %349 = memref.load %arg2[%c53] : memref<96xf32, #tpu.memory_space<smem>>
    %350 = vector.broadcast %349 : f32 to vector<2x8xf32>
    %351 = arith.mulf %350, %332 : vector<2x8xf32>
    %352 = arith.addf %318, %351 : vector<2x8xf32>
    %c65 = arith.constant 65 : index
    %353 = memref.load %arg2[%c65] : memref<96xf32, #tpu.memory_space<smem>>
    %354 = vector.broadcast %353 : f32 to vector<2x8xf32>
    %355 = arith.mulf %354, %332 : vector<2x8xf32>
    %356 = arith.addf %322, %355 : vector<2x8xf32>
    %c77 = arith.constant 77 : index
    %357 = memref.load %arg2[%c77] : memref<96xf32, #tpu.memory_space<smem>>
    %358 = vector.broadcast %357 : f32 to vector<2x8xf32>
    %359 = arith.mulf %358, %332 : vector<2x8xf32>
    %360 = arith.addf %326, %359 : vector<2x8xf32>
    %c89 = arith.constant 89 : index
    %361 = memref.load %arg2[%c89] : memref<96xf32, #tpu.memory_space<smem>>
    %362 = vector.broadcast %361 : f32 to vector<2x8xf32>
    %363 = arith.mulf %362, %332 : vector<2x8xf32>
    %364 = arith.addf %330, %363 : vector<2x8xf32>
    %365 = vector.extract_strided_slice %6 {offsets = [2, 0, 0], sizes = [1, 2, 8], strides = [1, 1, 1]} : vector<4x2x8xf32> to vector<1x2x8xf32>
    %366 = vector.shape_cast %365 : vector<1x2x8xf32> to vector<2x8xf32>
    %c8 = arith.constant 8 : index
    %367 = memref.load %arg2[%c8] : memref<96xf32, #tpu.memory_space<smem>>
    %368 = vector.broadcast %367 : f32 to vector<2x8xf32>
    %369 = arith.mulf %368, %366 : vector<2x8xf32>
    %370 = arith.addf %336, %369 : vector<2x8xf32>
    %c20 = arith.constant 20 : index
    %371 = memref.load %arg2[%c20] : memref<96xf32, #tpu.memory_space<smem>>
    %372 = vector.broadcast %371 : f32 to vector<2x8xf32>
    %373 = arith.mulf %372, %366 : vector<2x8xf32>
    %374 = arith.addf %340, %373 : vector<2x8xf32>
    %c32 = arith.constant 32 : index
    %375 = memref.load %arg2[%c32] : memref<96xf32, #tpu.memory_space<smem>>
    %376 = vector.broadcast %375 : f32 to vector<2x8xf32>
    %377 = arith.mulf %376, %366 : vector<2x8xf32>
    %378 = arith.addf %344, %377 : vector<2x8xf32>
    %c44 = arith.constant 44 : index
    %379 = memref.load %arg2[%c44] : memref<96xf32, #tpu.memory_space<smem>>
    %380 = vector.broadcast %379 : f32 to vector<2x8xf32>
    %381 = arith.mulf %380, %366 : vector<2x8xf32>
    %382 = arith.addf %348, %381 : vector<2x8xf32>
    %c56 = arith.constant 56 : index
    %383 = memref.load %arg2[%c56] : memref<96xf32, #tpu.memory_space<smem>>
    %384 = vector.broadcast %383 : f32 to vector<2x8xf32>
    %385 = arith.mulf %384, %366 : vector<2x8xf32>
    %386 = arith.addf %352, %385 : vector<2x8xf32>
    %c68 = arith.constant 68 : index
    %387 = memref.load %arg2[%c68] : memref<96xf32, #tpu.memory_space<smem>>
    %388 = vector.broadcast %387 : f32 to vector<2x8xf32>
    %389 = arith.mulf %388, %366 : vector<2x8xf32>
    %390 = arith.addf %356, %389 : vector<2x8xf32>
    %c80 = arith.constant 80 : index
    %391 = memref.load %arg2[%c80] : memref<96xf32, #tpu.memory_space<smem>>
    %392 = vector.broadcast %391 : f32 to vector<2x8xf32>
    %393 = arith.mulf %392, %366 : vector<2x8xf32>
    %394 = arith.addf %360, %393 : vector<2x8xf32>
    %c92 = arith.constant 92 : index
    %395 = memref.load %arg2[%c92] : memref<96xf32, #tpu.memory_space<smem>>
    %396 = vector.broadcast %395 : f32 to vector<2x8xf32>
    %397 = arith.mulf %396, %366 : vector<2x8xf32>
    %398 = arith.addf %364, %397 : vector<2x8xf32>
    %399 = vector.extract_strided_slice %6 {offsets = [3, 0, 0], sizes = [1, 2, 8], strides = [1, 1, 1]} : vector<4x2x8xf32> to vector<1x2x8xf32>
    %400 = vector.shape_cast %399 : vector<1x2x8xf32> to vector<2x8xf32>
    %c11 = arith.constant 11 : index
    %401 = memref.load %arg2[%c11] : memref<96xf32, #tpu.memory_space<smem>>
    %402 = vector.broadcast %401 : f32 to vector<2x8xf32>
    %403 = arith.mulf %402, %400 : vector<2x8xf32>
    %404 = arith.addf %370, %403 : vector<2x8xf32>
    %c23 = arith.constant 23 : index
    %405 = memref.load %arg2[%c23] : memref<96xf32, #tpu.memory_space<smem>>
    %406 = vector.broadcast %405 : f32 to vector<2x8xf32>
    %407 = arith.mulf %406, %400 : vector<2x8xf32>
    %408 = arith.addf %374, %407 : vector<2x8xf32>
    %c35 = arith.constant 35 : index
    %409 = memref.load %arg2[%c35] : memref<96xf32, #tpu.memory_space<smem>>
    %410 = vector.broadcast %409 : f32 to vector<2x8xf32>
    %411 = arith.mulf %410, %400 : vector<2x8xf32>
    %412 = arith.addf %378, %411 : vector<2x8xf32>
    %c47 = arith.constant 47 : index
    %413 = memref.load %arg2[%c47] : memref<96xf32, #tpu.memory_space<smem>>
    %414 = vector.broadcast %413 : f32 to vector<2x8xf32>
    %415 = arith.mulf %414, %400 : vector<2x8xf32>
    %416 = arith.addf %382, %415 : vector<2x8xf32>
    %c59 = arith.constant 59 : index
    %417 = memref.load %arg2[%c59] : memref<96xf32, #tpu.memory_space<smem>>
    %418 = vector.broadcast %417 : f32 to vector<2x8xf32>
    %419 = arith.mulf %418, %400 : vector<2x8xf32>
    %420 = arith.addf %386, %419 : vector<2x8xf32>
    %c71 = arith.constant 71 : index
    %421 = memref.load %arg2[%c71] : memref<96xf32, #tpu.memory_space<smem>>
    %422 = vector.broadcast %421 : f32 to vector<2x8xf32>
    %423 = arith.mulf %422, %400 : vector<2x8xf32>
    %424 = arith.addf %390, %423 : vector<2x8xf32>
    %c83 = arith.constant 83 : index
    %425 = memref.load %arg2[%c83] : memref<96xf32, #tpu.memory_space<smem>>
    %426 = vector.broadcast %425 : f32 to vector<2x8xf32>
    %427 = arith.mulf %426, %400 : vector<2x8xf32>
    %428 = arith.addf %394, %427 : vector<2x8xf32>
    %c95 = arith.constant 95 : index
    %429 = memref.load %arg2[%c95] : memref<96xf32, #tpu.memory_space<smem>>
    %430 = vector.broadcast %429 : f32 to vector<2x8xf32>
    %431 = arith.mulf %430, %400 : vector<2x8xf32>
    %432 = arith.addf %398, %431 : vector<2x8xf32>
    %433 = vector.extract_strided_slice %4 {offsets = [0, 0, 0], sizes = [1, 2, 8], strides = [1, 1, 1]} : vector<4x2x8xf32> to vector<1x2x8xf32>
    %434 = vector.shape_cast %433 : vector<1x2x8xf32> to vector<2x8xf32>
    %c0_32 = arith.constant 0 : index
    %435 = memref.load %arg2[%c0_32] : memref<96xf32, #tpu.memory_space<smem>>
    %436 = vector.broadcast %435 : f32 to vector<2x8xf32>
    %437 = arith.mulf %436, %434 : vector<2x8xf32>
    %438 = arith.addf %17, %437 : vector<2x8xf32>
    %c12_33 = arith.constant 12 : index
    %439 = memref.load %arg2[%c12_33] : memref<96xf32, #tpu.memory_space<smem>>
    %440 = vector.broadcast %439 : f32 to vector<2x8xf32>
    %441 = arith.mulf %440, %434 : vector<2x8xf32>
    %442 = arith.addf %18, %441 : vector<2x8xf32>
    %c24_34 = arith.constant 24 : index
    %443 = memref.load %arg2[%c24_34] : memref<96xf32, #tpu.memory_space<smem>>
    %444 = vector.broadcast %443 : f32 to vector<2x8xf32>
    %445 = arith.mulf %444, %434 : vector<2x8xf32>
    %446 = arith.addf %19, %445 : vector<2x8xf32>
    %c36_35 = arith.constant 36 : index
    %447 = memref.load %arg2[%c36_35] : memref<96xf32, #tpu.memory_space<smem>>
    %448 = vector.broadcast %447 : f32 to vector<2x8xf32>
    %449 = arith.mulf %448, %434 : vector<2x8xf32>
    %450 = arith.addf %20, %449 : vector<2x8xf32>
    %c48_36 = arith.constant 48 : index
    %451 = memref.load %arg2[%c48_36] : memref<96xf32, #tpu.memory_space<smem>>
    %452 = vector.broadcast %451 : f32 to vector<2x8xf32>
    %453 = arith.mulf %452, %434 : vector<2x8xf32>
    %454 = arith.addf %21, %453 : vector<2x8xf32>
    %c60_37 = arith.constant 60 : index
    %455 = memref.load %arg2[%c60_37] : memref<96xf32, #tpu.memory_space<smem>>
    %456 = vector.broadcast %455 : f32 to vector<2x8xf32>
    %457 = arith.mulf %456, %434 : vector<2x8xf32>
    %458 = arith.addf %22, %457 : vector<2x8xf32>
    %c72_38 = arith.constant 72 : index
    %459 = memref.load %arg2[%c72_38] : memref<96xf32, #tpu.memory_space<smem>>
    %460 = vector.broadcast %459 : f32 to vector<2x8xf32>
    %461 = arith.mulf %460, %434 : vector<2x8xf32>
    %462 = arith.addf %23, %461 : vector<2x8xf32>
    %c84_39 = arith.constant 84 : index
    %463 = memref.load %arg2[%c84_39] : memref<96xf32, #tpu.memory_space<smem>>
    %464 = vector.broadcast %463 : f32 to vector<2x8xf32>
    %465 = arith.mulf %464, %434 : vector<2x8xf32>
    %466 = arith.addf %24, %465 : vector<2x8xf32>
    %467 = vector.extract_strided_slice %4 {offsets = [1, 0, 0], sizes = [1, 2, 8], strides = [1, 1, 1]} : vector<4x2x8xf32> to vector<1x2x8xf32>
    %468 = vector.shape_cast %467 : vector<1x2x8xf32> to vector<2x8xf32>
    %c3_40 = arith.constant 3 : index
    %469 = memref.load %arg2[%c3_40] : memref<96xf32, #tpu.memory_space<smem>>
    %470 = vector.broadcast %469 : f32 to vector<2x8xf32>
    %471 = arith.mulf %470, %468 : vector<2x8xf32>
    %472 = arith.addf %438, %471 : vector<2x8xf32>
    %c15_41 = arith.constant 15 : index
    %473 = memref.load %arg2[%c15_41] : memref<96xf32, #tpu.memory_space<smem>>
    %474 = vector.broadcast %473 : f32 to vector<2x8xf32>
    %475 = arith.mulf %474, %468 : vector<2x8xf32>
    %476 = arith.addf %442, %475 : vector<2x8xf32>
    %c27_42 = arith.constant 27 : index
    %477 = memref.load %arg2[%c27_42] : memref<96xf32, #tpu.memory_space<smem>>
    %478 = vector.broadcast %477 : f32 to vector<2x8xf32>
    %479 = arith.mulf %478, %468 : vector<2x8xf32>
    %480 = arith.addf %446, %479 : vector<2x8xf32>
    %c39_43 = arith.constant 39 : index
    %481 = memref.load %arg2[%c39_43] : memref<96xf32, #tpu.memory_space<smem>>
    %482 = vector.broadcast %481 : f32 to vector<2x8xf32>
    %483 = arith.mulf %482, %468 : vector<2x8xf32>
    %484 = arith.addf %450, %483 : vector<2x8xf32>
    %c51_44 = arith.constant 51 : index
    %485 = memref.load %arg2[%c51_44] : memref<96xf32, #tpu.memory_space<smem>>
    %486 = vector.broadcast %485 : f32 to vector<2x8xf32>
    %487 = arith.mulf %486, %468 : vector<2x8xf32>
    %488 = arith.addf %454, %487 : vector<2x8xf32>
    %c63_45 = arith.constant 63 : index
    %489 = memref.load %arg2[%c63_45] : memref<96xf32, #tpu.memory_space<smem>>
    %490 = vector.broadcast %489 : f32 to vector<2x8xf32>
    %491 = arith.mulf %490, %468 : vector<2x8xf32>
    %492 = arith.addf %458, %491 : vector<2x8xf32>
    %c75_46 = arith.constant 75 : index
    %493 = memref.load %arg2[%c75_46] : memref<96xf32, #tpu.memory_space<smem>>
    %494 = vector.broadcast %493 : f32 to vector<2x8xf32>
    %495 = arith.mulf %494, %468 : vector<2x8xf32>
    %496 = arith.addf %462, %495 : vector<2x8xf32>
    %c87_47 = arith.constant 87 : index
    %497 = memref.load %arg2[%c87_47] : memref<96xf32, #tpu.memory_space<smem>>
    %498 = vector.broadcast %497 : f32 to vector<2x8xf32>
    %499 = arith.mulf %498, %468 : vector<2x8xf32>
    %500 = arith.addf %466, %499 : vector<2x8xf32>
    %501 = vector.extract_strided_slice %4 {offsets = [2, 0, 0], sizes = [1, 2, 8], strides = [1, 1, 1]} : vector<4x2x8xf32> to vector<1x2x8xf32>
    %502 = vector.shape_cast %501 : vector<1x2x8xf32> to vector<2x8xf32>
    %c6_48 = arith.constant 6 : index
    %503 = memref.load %arg2[%c6_48] : memref<96xf32, #tpu.memory_space<smem>>
    %504 = vector.broadcast %503 : f32 to vector<2x8xf32>
    %505 = arith.mulf %504, %502 : vector<2x8xf32>
    %506 = arith.addf %472, %505 : vector<2x8xf32>
    %c18_49 = arith.constant 18 : index
    %507 = memref.load %arg2[%c18_49] : memref<96xf32, #tpu.memory_space<smem>>
    %508 = vector.broadcast %507 : f32 to vector<2x8xf32>
    %509 = arith.mulf %508, %502 : vector<2x8xf32>
    %510 = arith.addf %476, %509 : vector<2x8xf32>
    %c30_50 = arith.constant 30 : index
    %511 = memref.load %arg2[%c30_50] : memref<96xf32, #tpu.memory_space<smem>>
    %512 = vector.broadcast %511 : f32 to vector<2x8xf32>
    %513 = arith.mulf %512, %502 : vector<2x8xf32>
    %514 = arith.addf %480, %513 : vector<2x8xf32>
    %c42_51 = arith.constant 42 : index
    %515 = memref.load %arg2[%c42_51] : memref<96xf32, #tpu.memory_space<smem>>
    %516 = vector.broadcast %515 : f32 to vector<2x8xf32>
    %517 = arith.mulf %516, %502 : vector<2x8xf32>
    %518 = arith.addf %484, %517 : vector<2x8xf32>
    %c54_52 = arith.constant 54 : index
    %519 = memref.load %arg2[%c54_52] : memref<96xf32, #tpu.memory_space<smem>>
    %520 = vector.broadcast %519 : f32 to vector<2x8xf32>
    %521 = arith.mulf %520, %502 : vector<2x8xf32>
    %522 = arith.addf %488, %521 : vector<2x8xf32>
    %c66_53 = arith.constant 66 : index
    %523 = memref.load %arg2[%c66_53] : memref<96xf32, #tpu.memory_space<smem>>
    %524 = vector.broadcast %523 : f32 to vector<2x8xf32>
    %525 = arith.mulf %524, %502 : vector<2x8xf32>
    %526 = arith.addf %492, %525 : vector<2x8xf32>
    %c78_54 = arith.constant 78 : index
    %527 = memref.load %arg2[%c78_54] : memref<96xf32, #tpu.memory_space<smem>>
    %528 = vector.broadcast %527 : f32 to vector<2x8xf32>
    %529 = arith.mulf %528, %502 : vector<2x8xf32>
    %530 = arith.addf %496, %529 : vector<2x8xf32>
    %c90_55 = arith.constant 90 : index
    %531 = memref.load %arg2[%c90_55] : memref<96xf32, #tpu.memory_space<smem>>
    %532 = vector.broadcast %531 : f32 to vector<2x8xf32>
    %533 = arith.mulf %532, %502 : vector<2x8xf32>
    %534 = arith.addf %500, %533 : vector<2x8xf32>
    %535 = vector.extract_strided_slice %4 {offsets = [3, 0, 0], sizes = [1, 2, 8], strides = [1, 1, 1]} : vector<4x2x8xf32> to vector<1x2x8xf32>
    %536 = vector.shape_cast %535 : vector<1x2x8xf32> to vector<2x8xf32>
    %c9_56 = arith.constant 9 : index
    %537 = memref.load %arg2[%c9_56] : memref<96xf32, #tpu.memory_space<smem>>
    %538 = vector.broadcast %537 : f32 to vector<2x8xf32>
    %539 = arith.mulf %538, %536 : vector<2x8xf32>
    %540 = arith.addf %506, %539 : vector<2x8xf32>
    %c21_57 = arith.constant 21 : index
    %541 = memref.load %arg2[%c21_57] : memref<96xf32, #tpu.memory_space<smem>>
    %542 = vector.broadcast %541 : f32 to vector<2x8xf32>
    %543 = arith.mulf %542, %536 : vector<2x8xf32>
    %544 = arith.addf %510, %543 : vector<2x8xf32>
    %c33_58 = arith.constant 33 : index
    %545 = memref.load %arg2[%c33_58] : memref<96xf32, #tpu.memory_space<smem>>
    %546 = vector.broadcast %545 : f32 to vector<2x8xf32>
    %547 = arith.mulf %546, %536 : vector<2x8xf32>
    %548 = arith.addf %514, %547 : vector<2x8xf32>
    %c45_59 = arith.constant 45 : index
    %549 = memref.load %arg2[%c45_59] : memref<96xf32, #tpu.memory_space<smem>>
    %550 = vector.broadcast %549 : f32 to vector<2x8xf32>
    %551 = arith.mulf %550, %536 : vector<2x8xf32>
    %552 = arith.addf %518, %551 : vector<2x8xf32>
    %c57_60 = arith.constant 57 : index
    %553 = memref.load %arg2[%c57_60] : memref<96xf32, #tpu.memory_space<smem>>
    %554 = vector.broadcast %553 : f32 to vector<2x8xf32>
    %555 = arith.mulf %554, %536 : vector<2x8xf32>
    %556 = arith.addf %522, %555 : vector<2x8xf32>
    %c69_61 = arith.constant 69 : index
    %557 = memref.load %arg2[%c69_61] : memref<96xf32, #tpu.memory_space<smem>>
    %558 = vector.broadcast %557 : f32 to vector<2x8xf32>
    %559 = arith.mulf %558, %536 : vector<2x8xf32>
    %560 = arith.addf %526, %559 : vector<2x8xf32>
    %c81_62 = arith.constant 81 : index
    %561 = memref.load %arg2[%c81_62] : memref<96xf32, #tpu.memory_space<smem>>
    %562 = vector.broadcast %561 : f32 to vector<2x8xf32>
    %563 = arith.mulf %562, %536 : vector<2x8xf32>
    %564 = arith.addf %530, %563 : vector<2x8xf32>
    %c93_63 = arith.constant 93 : index
    %565 = memref.load %arg2[%c93_63] : memref<96xf32, #tpu.memory_space<smem>>
    %566 = vector.broadcast %565 : f32 to vector<2x8xf32>
    %567 = arith.mulf %566, %536 : vector<2x8xf32>
    %568 = arith.addf %534, %567 : vector<2x8xf32>
    %569 = vector.extract_strided_slice %6 {offsets = [0, 0, 0], sizes = [1, 2, 8], strides = [1, 1, 1]} : vector<4x2x8xf32> to vector<1x2x8xf32>
    %570 = vector.shape_cast %569 : vector<1x2x8xf32> to vector<2x8xf32>
    %c1_64 = arith.constant 1 : index
    %571 = memref.load %arg2[%c1_64] : memref<96xf32, #tpu.memory_space<smem>>
    %572 = vector.broadcast %571 : f32 to vector<2x8xf32>
    %573 = arith.mulf %572, %570 : vector<2x8xf32>
    %574 = arith.addf %540, %573 : vector<2x8xf32>
    %c13_65 = arith.constant 13 : index
    %575 = memref.load %arg2[%c13_65] : memref<96xf32, #tpu.memory_space<smem>>
    %576 = vector.broadcast %575 : f32 to vector<2x8xf32>
    %577 = arith.mulf %576, %570 : vector<2x8xf32>
    %578 = arith.addf %544, %577 : vector<2x8xf32>
    %c25_66 = arith.constant 25 : index
    %579 = memref.load %arg2[%c25_66] : memref<96xf32, #tpu.memory_space<smem>>
    %580 = vector.broadcast %579 : f32 to vector<2x8xf32>
    %581 = arith.mulf %580, %570 : vector<2x8xf32>
    %582 = arith.addf %548, %581 : vector<2x8xf32>
    %c37_67 = arith.constant 37 : index
    %583 = memref.load %arg2[%c37_67] : memref<96xf32, #tpu.memory_space<smem>>
    %584 = vector.broadcast %583 : f32 to vector<2x8xf32>
    %585 = arith.mulf %584, %570 : vector<2x8xf32>
    %586 = arith.addf %552, %585 : vector<2x8xf32>
    %c49_68 = arith.constant 49 : index
    %587 = memref.load %arg2[%c49_68] : memref<96xf32, #tpu.memory_space<smem>>
    %588 = vector.broadcast %587 : f32 to vector<2x8xf32>
    %589 = arith.mulf %588, %570 : vector<2x8xf32>
    %590 = arith.addf %556, %589 : vector<2x8xf32>
    %c61_69 = arith.constant 61 : index
    %591 = memref.load %arg2[%c61_69] : memref<96xf32, #tpu.memory_space<smem>>
    %592 = vector.broadcast %591 : f32 to vector<2x8xf32>
    %593 = arith.mulf %592, %570 : vector<2x8xf32>
    %594 = arith.addf %560, %593 : vector<2x8xf32>
    %c73_70 = arith.constant 73 : index
    %595 = memref.load %arg2[%c73_70] : memref<96xf32, #tpu.memory_space<smem>>
    %596 = vector.broadcast %595 : f32 to vector<2x8xf32>
    %597 = arith.mulf %596, %570 : vector<2x8xf32>
    %598 = arith.addf %564, %597 : vector<2x8xf32>
    %c85_71 = arith.constant 85 : index
    %599 = memref.load %arg2[%c85_71] : memref<96xf32, #tpu.memory_space<smem>>
    %600 = vector.broadcast %599 : f32 to vector<2x8xf32>
    %601 = arith.mulf %600, %570 : vector<2x8xf32>
    %602 = arith.addf %568, %601 : vector<2x8xf32>
    %603 = vector.extract_strided_slice %6 {offsets = [1, 0, 0], sizes = [1, 2, 8], strides = [1, 1, 1]} : vector<4x2x8xf32> to vector<1x2x8xf32>
    %604 = vector.shape_cast %603 : vector<1x2x8xf32> to vector<2x8xf32>
    %c4_72 = arith.constant 4 : index
    %605 = memref.load %arg2[%c4_72] : memref<96xf32, #tpu.memory_space<smem>>
    %606 = vector.broadcast %605 : f32 to vector<2x8xf32>
    %607 = arith.mulf %606, %604 : vector<2x8xf32>
    %608 = arith.addf %574, %607 : vector<2x8xf32>
    %c16_73 = arith.constant 16 : index
    %609 = memref.load %arg2[%c16_73] : memref<96xf32, #tpu.memory_space<smem>>
    %610 = vector.broadcast %609 : f32 to vector<2x8xf32>
    %611 = arith.mulf %610, %604 : vector<2x8xf32>
    %612 = arith.addf %578, %611 : vector<2x8xf32>
    %c28_74 = arith.constant 28 : index
    %613 = memref.load %arg2[%c28_74] : memref<96xf32, #tpu.memory_space<smem>>
    %614 = vector.broadcast %613 : f32 to vector<2x8xf32>
    %615 = arith.mulf %614, %604 : vector<2x8xf32>
    %616 = arith.addf %582, %615 : vector<2x8xf32>
    %c40_75 = arith.constant 40 : index
    %617 = memref.load %arg2[%c40_75] : memref<96xf32, #tpu.memory_space<smem>>
    %618 = vector.broadcast %617 : f32 to vector<2x8xf32>
    %619 = arith.mulf %618, %604 : vector<2x8xf32>
    %620 = arith.addf %586, %619 : vector<2x8xf32>
    %c52_76 = arith.constant 52 : index
    %621 = memref.load %arg2[%c52_76] : memref<96xf32, #tpu.memory_space<smem>>
    %622 = vector.broadcast %621 : f32 to vector<2x8xf32>
    %623 = arith.mulf %622, %604 : vector<2x8xf32>
    %624 = arith.addf %590, %623 : vector<2x8xf32>
    %c64_77 = arith.constant 64 : index
    %625 = memref.load %arg2[%c64_77] : memref<96xf32, #tpu.memory_space<smem>>
    %626 = vector.broadcast %625 : f32 to vector<2x8xf32>
    %627 = arith.mulf %626, %604 : vector<2x8xf32>
    %628 = arith.addf %594, %627 : vector<2x8xf32>
    %c76_78 = arith.constant 76 : index
    %629 = memref.load %arg2[%c76_78] : memref<96xf32, #tpu.memory_space<smem>>
    %630 = vector.broadcast %629 : f32 to vector<2x8xf32>
    %631 = arith.mulf %630, %604 : vector<2x8xf32>
    %632 = arith.addf %598, %631 : vector<2x8xf32>
    %c88_79 = arith.constant 88 : index
    %633 = memref.load %arg2[%c88_79] : memref<96xf32, #tpu.memory_space<smem>>
    %634 = vector.broadcast %633 : f32 to vector<2x8xf32>
    %635 = arith.mulf %634, %604 : vector<2x8xf32>
    %636 = arith.addf %602, %635 : vector<2x8xf32>
    %637 = vector.extract_strided_slice %6 {offsets = [2, 0, 0], sizes = [1, 2, 8], strides = [1, 1, 1]} : vector<4x2x8xf32> to vector<1x2x8xf32>
    %638 = vector.shape_cast %637 : vector<1x2x8xf32> to vector<2x8xf32>
    %c7_80 = arith.constant 7 : index
    %639 = memref.load %arg2[%c7_80] : memref<96xf32, #tpu.memory_space<smem>>
    %640 = vector.broadcast %639 : f32 to vector<2x8xf32>
    %641 = arith.mulf %640, %638 : vector<2x8xf32>
    %642 = arith.addf %608, %641 : vector<2x8xf32>
    %c19_81 = arith.constant 19 : index
    %643 = memref.load %arg2[%c19_81] : memref<96xf32, #tpu.memory_space<smem>>
    %644 = vector.broadcast %643 : f32 to vector<2x8xf32>
    %645 = arith.mulf %644, %638 : vector<2x8xf32>
    %646 = arith.addf %612, %645 : vector<2x8xf32>
    %c31_82 = arith.constant 31 : index
    %647 = memref.load %arg2[%c31_82] : memref<96xf32, #tpu.memory_space<smem>>
    %648 = vector.broadcast %647 : f32 to vector<2x8xf32>
    %649 = arith.mulf %648, %638 : vector<2x8xf32>
    %650 = arith.addf %616, %649 : vector<2x8xf32>
    %c43_83 = arith.constant 43 : index
    %651 = memref.load %arg2[%c43_83] : memref<96xf32, #tpu.memory_space<smem>>
    %652 = vector.broadcast %651 : f32 to vector<2x8xf32>
    %653 = arith.mulf %652, %638 : vector<2x8xf32>
    %654 = arith.addf %620, %653 : vector<2x8xf32>
    %c55_84 = arith.constant 55 : index
    %655 = memref.load %arg2[%c55_84] : memref<96xf32, #tpu.memory_space<smem>>
    %656 = vector.broadcast %655 : f32 to vector<2x8xf32>
    %657 = arith.mulf %656, %638 : vector<2x8xf32>
    %658 = arith.addf %624, %657 : vector<2x8xf32>
    %c67_85 = arith.constant 67 : index
    %659 = memref.load %arg2[%c67_85] : memref<96xf32, #tpu.memory_space<smem>>
    %660 = vector.broadcast %659 : f32 to vector<2x8xf32>
    %661 = arith.mulf %660, %638 : vector<2x8xf32>
    %662 = arith.addf %628, %661 : vector<2x8xf32>
    %c79_86 = arith.constant 79 : index
    %663 = memref.load %arg2[%c79_86] : memref<96xf32, #tpu.memory_space<smem>>
    %664 = vector.broadcast %663 : f32 to vector<2x8xf32>
    %665 = arith.mulf %664, %638 : vector<2x8xf32>
    %666 = arith.addf %632, %665 : vector<2x8xf32>
    %c91_87 = arith.constant 91 : index
    %667 = memref.load %arg2[%c91_87] : memref<96xf32, #tpu.memory_space<smem>>
    %668 = vector.broadcast %667 : f32 to vector<2x8xf32>
    %669 = arith.mulf %668, %638 : vector<2x8xf32>
    %670 = arith.addf %636, %669 : vector<2x8xf32>
    %671 = vector.extract_strided_slice %6 {offsets = [3, 0, 0], sizes = [1, 2, 8], strides = [1, 1, 1]} : vector<4x2x8xf32> to vector<1x2x8xf32>
    %672 = vector.shape_cast %671 : vector<1x2x8xf32> to vector<2x8xf32>
    %c10_88 = arith.constant 10 : index
    %673 = memref.load %arg2[%c10_88] : memref<96xf32, #tpu.memory_space<smem>>
    %674 = vector.broadcast %673 : f32 to vector<2x8xf32>
    %675 = arith.mulf %674, %672 : vector<2x8xf32>
    %676 = arith.addf %642, %675 : vector<2x8xf32>
    %c22_89 = arith.constant 22 : index
    %677 = memref.load %arg2[%c22_89] : memref<96xf32, #tpu.memory_space<smem>>
    %678 = vector.broadcast %677 : f32 to vector<2x8xf32>
    %679 = arith.mulf %678, %672 : vector<2x8xf32>
    %680 = arith.addf %646, %679 : vector<2x8xf32>
    %c34_90 = arith.constant 34 : index
    %681 = memref.load %arg2[%c34_90] : memref<96xf32, #tpu.memory_space<smem>>
    %682 = vector.broadcast %681 : f32 to vector<2x8xf32>
    %683 = arith.mulf %682, %672 : vector<2x8xf32>
    %684 = arith.addf %650, %683 : vector<2x8xf32>
    %c46_91 = arith.constant 46 : index
    %685 = memref.load %arg2[%c46_91] : memref<96xf32, #tpu.memory_space<smem>>
    %686 = vector.broadcast %685 : f32 to vector<2x8xf32>
    %687 = arith.mulf %686, %672 : vector<2x8xf32>
    %688 = arith.addf %654, %687 : vector<2x8xf32>
    %c58_92 = arith.constant 58 : index
    %689 = memref.load %arg2[%c58_92] : memref<96xf32, #tpu.memory_space<smem>>
    %690 = vector.broadcast %689 : f32 to vector<2x8xf32>
    %691 = arith.mulf %690, %672 : vector<2x8xf32>
    %692 = arith.addf %658, %691 : vector<2x8xf32>
    %c70_93 = arith.constant 70 : index
    %693 = memref.load %arg2[%c70_93] : memref<96xf32, #tpu.memory_space<smem>>
    %694 = vector.broadcast %693 : f32 to vector<2x8xf32>
    %695 = arith.mulf %694, %672 : vector<2x8xf32>
    %696 = arith.addf %662, %695 : vector<2x8xf32>
    %c82_94 = arith.constant 82 : index
    %697 = memref.load %arg2[%c82_94] : memref<96xf32, #tpu.memory_space<smem>>
    %698 = vector.broadcast %697 : f32 to vector<2x8xf32>
    %699 = arith.mulf %698, %672 : vector<2x8xf32>
    %700 = arith.addf %666, %699 : vector<2x8xf32>
    %c94_95 = arith.constant 94 : index
    %701 = memref.load %arg2[%c94_95] : memref<96xf32, #tpu.memory_space<smem>>
    %702 = vector.broadcast %701 : f32 to vector<2x8xf32>
    %703 = arith.mulf %702, %672 : vector<2x8xf32>
    %704 = arith.addf %670, %703 : vector<2x8xf32>
    %705 = vector.extract_strided_slice %8 {offsets = [0, 0, 0], sizes = [1, 2, 8], strides = [1, 1, 1]} : vector<4x2x8xf32> to vector<1x2x8xf32>
    %706 = vector.shape_cast %705 : vector<1x2x8xf32> to vector<2x8xf32>
    %c2_96 = arith.constant 2 : index
    %707 = memref.load %arg2[%c2_96] : memref<96xf32, #tpu.memory_space<smem>>
    %708 = vector.broadcast %707 : f32 to vector<2x8xf32>
    %709 = arith.mulf %708, %706 : vector<2x8xf32>
    %710 = arith.addf %676, %709 : vector<2x8xf32>
    %c14_97 = arith.constant 14 : index
    %711 = memref.load %arg2[%c14_97] : memref<96xf32, #tpu.memory_space<smem>>
    %712 = vector.broadcast %711 : f32 to vector<2x8xf32>
    %713 = arith.mulf %712, %706 : vector<2x8xf32>
    %714 = arith.addf %680, %713 : vector<2x8xf32>
    %c26_98 = arith.constant 26 : index
    %715 = memref.load %arg2[%c26_98] : memref<96xf32, #tpu.memory_space<smem>>
    %716 = vector.broadcast %715 : f32 to vector<2x8xf32>
    %717 = arith.mulf %716, %706 : vector<2x8xf32>
    %718 = arith.addf %684, %717 : vector<2x8xf32>
    %c38_99 = arith.constant 38 : index
    %719 = memref.load %arg2[%c38_99] : memref<96xf32, #tpu.memory_space<smem>>
    %720 = vector.broadcast %719 : f32 to vector<2x8xf32>
    %721 = arith.mulf %720, %706 : vector<2x8xf32>
    %722 = arith.addf %688, %721 : vector<2x8xf32>
    %c50_100 = arith.constant 50 : index
    %723 = memref.load %arg2[%c50_100] : memref<96xf32, #tpu.memory_space<smem>>
    %724 = vector.broadcast %723 : f32 to vector<2x8xf32>
    %725 = arith.mulf %724, %706 : vector<2x8xf32>
    %726 = arith.addf %692, %725 : vector<2x8xf32>
    %c62_101 = arith.constant 62 : index
    %727 = memref.load %arg2[%c62_101] : memref<96xf32, #tpu.memory_space<smem>>
    %728 = vector.broadcast %727 : f32 to vector<2x8xf32>
    %729 = arith.mulf %728, %706 : vector<2x8xf32>
    %730 = arith.addf %696, %729 : vector<2x8xf32>
    %c74_102 = arith.constant 74 : index
    %731 = memref.load %arg2[%c74_102] : memref<96xf32, #tpu.memory_space<smem>>
    %732 = vector.broadcast %731 : f32 to vector<2x8xf32>
    %733 = arith.mulf %732, %706 : vector<2x8xf32>
    %734 = arith.addf %700, %733 : vector<2x8xf32>
    %c86_103 = arith.constant 86 : index
    %735 = memref.load %arg2[%c86_103] : memref<96xf32, #tpu.memory_space<smem>>
    %736 = vector.broadcast %735 : f32 to vector<2x8xf32>
    %737 = arith.mulf %736, %706 : vector<2x8xf32>
    %738 = arith.addf %704, %737 : vector<2x8xf32>
    %739 = vector.extract_strided_slice %8 {offsets = [1, 0, 0], sizes = [1, 2, 8], strides = [1, 1, 1]} : vector<4x2x8xf32> to vector<1x2x8xf32>
    %740 = vector.shape_cast %739 : vector<1x2x8xf32> to vector<2x8xf32>
    %c5_104 = arith.constant 5 : index
    %741 = memref.load %arg2[%c5_104] : memref<96xf32, #tpu.memory_space<smem>>
    %742 = vector.broadcast %741 : f32 to vector<2x8xf32>
    %743 = arith.mulf %742, %740 : vector<2x8xf32>
    %744 = arith.addf %710, %743 : vector<2x8xf32>
    %c17_105 = arith.constant 17 : index
    %745 = memref.load %arg2[%c17_105] : memref<96xf32, #tpu.memory_space<smem>>
    %746 = vector.broadcast %745 : f32 to vector<2x8xf32>
    %747 = arith.mulf %746, %740 : vector<2x8xf32>
    %748 = arith.addf %714, %747 : vector<2x8xf32>
    %c29_106 = arith.constant 29 : index
    %749 = memref.load %arg2[%c29_106] : memref<96xf32, #tpu.memory_space<smem>>
    %750 = vector.broadcast %749 : f32 to vector<2x8xf32>
    %751 = arith.mulf %750, %740 : vector<2x8xf32>
    %752 = arith.addf %718, %751 : vector<2x8xf32>
    %c41_107 = arith.constant 41 : index
    %753 = memref.load %arg2[%c41_107] : memref<96xf32, #tpu.memory_space<smem>>
    %754 = vector.broadcast %753 : f32 to vector<2x8xf32>
    %755 = arith.mulf %754, %740 : vector<2x8xf32>
    %756 = arith.addf %722, %755 : vector<2x8xf32>
    %c53_108 = arith.constant 53 : index
    %757 = memref.load %arg2[%c53_108] : memref<96xf32, #tpu.memory_space<smem>>
    %758 = vector.broadcast %757 : f32 to vector<2x8xf32>
    %759 = arith.mulf %758, %740 : vector<2x8xf32>
    %760 = arith.addf %726, %759 : vector<2x8xf32>
    %c65_109 = arith.constant 65 : index
    %761 = memref.load %arg2[%c65_109] : memref<96xf32, #tpu.memory_space<smem>>
    %762 = vector.broadcast %761 : f32 to vector<2x8xf32>
    %763 = arith.mulf %762, %740 : vector<2x8xf32>
    %764 = arith.addf %730, %763 : vector<2x8xf32>
    %c77_110 = arith.constant 77 : index
    %765 = memref.load %arg2[%c77_110] : memref<96xf32, #tpu.memory_space<smem>>
    %766 = vector.broadcast %765 : f32 to vector<2x8xf32>
    %767 = arith.mulf %766, %740 : vector<2x8xf32>
    %768 = arith.addf %734, %767 : vector<2x8xf32>
    %c89_111 = arith.constant 89 : index
    %769 = memref.load %arg2[%c89_111] : memref<96xf32, #tpu.memory_space<smem>>
    %770 = vector.broadcast %769 : f32 to vector<2x8xf32>
    %771 = arith.mulf %770, %740 : vector<2x8xf32>
    %772 = arith.addf %738, %771 : vector<2x8xf32>
    %773 = vector.extract_strided_slice %8 {offsets = [2, 0, 0], sizes = [1, 2, 8], strides = [1, 1, 1]} : vector<4x2x8xf32> to vector<1x2x8xf32>
    %774 = vector.shape_cast %773 : vector<1x2x8xf32> to vector<2x8xf32>
    %c8_112 = arith.constant 8 : index
    %775 = memref.load %arg2[%c8_112] : memref<96xf32, #tpu.memory_space<smem>>
    %776 = vector.broadcast %775 : f32 to vector<2x8xf32>
    %777 = arith.mulf %776, %774 : vector<2x8xf32>
    %778 = arith.addf %744, %777 : vector<2x8xf32>
    %c20_113 = arith.constant 20 : index
    %779 = memref.load %arg2[%c20_113] : memref<96xf32, #tpu.memory_space<smem>>
    %780 = vector.broadcast %779 : f32 to vector<2x8xf32>
    %781 = arith.mulf %780, %774 : vector<2x8xf32>
    %782 = arith.addf %748, %781 : vector<2x8xf32>
    %c32_114 = arith.constant 32 : index
    %783 = memref.load %arg2[%c32_114] : memref<96xf32, #tpu.memory_space<smem>>
    %784 = vector.broadcast %783 : f32 to vector<2x8xf32>
    %785 = arith.mulf %784, %774 : vector<2x8xf32>
    %786 = arith.addf %752, %785 : vector<2x8xf32>
    %c44_115 = arith.constant 44 : index
    %787 = memref.load %arg2[%c44_115] : memref<96xf32, #tpu.memory_space<smem>>
    %788 = vector.broadcast %787 : f32 to vector<2x8xf32>
    %789 = arith.mulf %788, %774 : vector<2x8xf32>
    %790 = arith.addf %756, %789 : vector<2x8xf32>
    %c56_116 = arith.constant 56 : index
    %791 = memref.load %arg2[%c56_116] : memref<96xf32, #tpu.memory_space<smem>>
    %792 = vector.broadcast %791 : f32 to vector<2x8xf32>
    %793 = arith.mulf %792, %774 : vector<2x8xf32>
    %794 = arith.addf %760, %793 : vector<2x8xf32>
    %c68_117 = arith.constant 68 : index
    %795 = memref.load %arg2[%c68_117] : memref<96xf32, #tpu.memory_space<smem>>
    %796 = vector.broadcast %795 : f32 to vector<2x8xf32>
    %797 = arith.mulf %796, %774 : vector<2x8xf32>
    %798 = arith.addf %764, %797 : vector<2x8xf32>
    %c80_118 = arith.constant 80 : index
    %799 = memref.load %arg2[%c80_118] : memref<96xf32, #tpu.memory_space<smem>>
    %800 = vector.broadcast %799 : f32 to vector<2x8xf32>
    %801 = arith.mulf %800, %774 : vector<2x8xf32>
    %802 = arith.addf %768, %801 : vector<2x8xf32>
    %c92_119 = arith.constant 92 : index
    %803 = memref.load %arg2[%c92_119] : memref<96xf32, #tpu.memory_space<smem>>
    %804 = vector.broadcast %803 : f32 to vector<2x8xf32>
    %805 = arith.mulf %804, %774 : vector<2x8xf32>
    %806 = arith.addf %772, %805 : vector<2x8xf32>
    %807 = vector.extract_strided_slice %8 {offsets = [3, 0, 0], sizes = [1, 2, 8], strides = [1, 1, 1]} : vector<4x2x8xf32> to vector<1x2x8xf32>
    %808 = vector.shape_cast %807 : vector<1x2x8xf32> to vector<2x8xf32>
    %c11_120 = arith.constant 11 : index
    %809 = memref.load %arg2[%c11_120] : memref<96xf32, #tpu.memory_space<smem>>
    %810 = vector.broadcast %809 : f32 to vector<2x8xf32>
    %811 = arith.mulf %810, %808 : vector<2x8xf32>
    %812 = arith.addf %778, %811 : vector<2x8xf32>
    %c23_121 = arith.constant 23 : index
    %813 = memref.load %arg2[%c23_121] : memref<96xf32, #tpu.memory_space<smem>>
    %814 = vector.broadcast %813 : f32 to vector<2x8xf32>
    %815 = arith.mulf %814, %808 : vector<2x8xf32>
    %816 = arith.addf %782, %815 : vector<2x8xf32>
    %c35_122 = arith.constant 35 : index
    %817 = memref.load %arg2[%c35_122] : memref<96xf32, #tpu.memory_space<smem>>
    %818 = vector.broadcast %817 : f32 to vector<2x8xf32>
    %819 = arith.mulf %818, %808 : vector<2x8xf32>
    %820 = arith.addf %786, %819 : vector<2x8xf32>
    %c47_123 = arith.constant 47 : index
    %821 = memref.load %arg2[%c47_123] : memref<96xf32, #tpu.memory_space<smem>>
    %822 = vector.broadcast %821 : f32 to vector<2x8xf32>
    %823 = arith.mulf %822, %808 : vector<2x8xf32>
    %824 = arith.addf %790, %823 : vector<2x8xf32>
    %c59_124 = arith.constant 59 : index
    %825 = memref.load %arg2[%c59_124] : memref<96xf32, #tpu.memory_space<smem>>
    %826 = vector.broadcast %825 : f32 to vector<2x8xf32>
    %827 = arith.mulf %826, %808 : vector<2x8xf32>
    %828 = arith.addf %794, %827 : vector<2x8xf32>
    %c71_125 = arith.constant 71 : index
    %829 = memref.load %arg2[%c71_125] : memref<96xf32, #tpu.memory_space<smem>>
    %830 = vector.broadcast %829 : f32 to vector<2x8xf32>
    %831 = arith.mulf %830, %808 : vector<2x8xf32>
    %832 = arith.addf %798, %831 : vector<2x8xf32>
    %c83_126 = arith.constant 83 : index
    %833 = memref.load %arg2[%c83_126] : memref<96xf32, #tpu.memory_space<smem>>
    %834 = vector.broadcast %833 : f32 to vector<2x8xf32>
    %835 = arith.mulf %834, %808 : vector<2x8xf32>
    %836 = arith.addf %802, %835 : vector<2x8xf32>
    %c95_127 = arith.constant 95 : index
    %837 = memref.load %arg2[%c95_127] : memref<96xf32, #tpu.memory_space<smem>>
    %838 = vector.broadcast %837 : f32 to vector<2x8xf32>
    %839 = arith.mulf %838, %808 : vector<2x8xf32>
    %840 = arith.addf %806, %839 : vector<2x8xf32>
    %c0_128 = arith.constant 0 : index
    %841 = memref.load %arg3[%c0_128] : memref<8xf32, #tpu.memory_space<smem>>
    %842 = vector.broadcast %841 : f32 to vector<2x8xf32>
    %843 = arith.addf %404, %842 : vector<2x8xf32>
    %c0_129 = arith.constant 0 : index
    %844 = memref.load %arg3[%c0_129] : memref<8xf32, #tpu.memory_space<smem>>
    %845 = vector.broadcast %844 : f32 to vector<2x8xf32>
    %846 = arith.addf %812, %845 : vector<2x8xf32>
    %cst_130 = arith.constant dense<0.000000e+00> : vector<2xf32>
    %847 = vector.multi_reduction <add>, %843, %cst_130 [1] : vector<2x8xf32> to vector<2xf32>
    %848 = vector.shape_cast %847 : vector<2xf32> to vector<2x1xf32>
    %cst_131 = arith.constant dense<0.000000e+00> : vector<2xf32>
    %849 = vector.multi_reduction <add>, %846, %cst_131 [1] : vector<2x8xf32> to vector<2xf32>
    %850 = vector.shape_cast %849 : vector<2xf32> to vector<2x1xf32>
    %851 = arith.mulf %843, %843 : vector<2x8xf32>
    %cst_132 = arith.constant dense<0.000000e+00> : vector<2xf32>
    %852 = vector.multi_reduction <add>, %851, %cst_132 [1] : vector<2x8xf32> to vector<2xf32>
    %853 = vector.shape_cast %852 : vector<2xf32> to vector<2x1xf32>
    %854 = arith.mulf %846, %846 : vector<2x8xf32>
    %cst_133 = arith.constant dense<0.000000e+00> : vector<2xf32>
    %855 = vector.multi_reduction <add>, %854, %cst_133 [1] : vector<2x8xf32> to vector<2xf32>
    %856 = vector.shape_cast %855 : vector<2xf32> to vector<2x1xf32>
    %857 = arith.addf %848, %850 : vector<2x1xf32>
    %cst_134 = arith.constant dense<0.000000e+00> : vector<1xf32>
    %858 = vector.multi_reduction <add>, %857, %cst_134 [0] : vector<2x1xf32> to vector<1xf32>
    %859 = vector.shape_cast %858 : vector<1xf32> to vector<1x1xf32>
    %860 = arith.addf %853, %856 : vector<2x1xf32>
    %cst_135 = arith.constant dense<0.000000e+00> : vector<1xf32>
    %861 = vector.multi_reduction <add>, %860, %cst_135 [0] : vector<2x1xf32> to vector<1xf32>
    %862 = vector.shape_cast %861 : vector<1xf32> to vector<1x1xf32>
    %cst_136 = arith.constant 3.200000e+01 : f32
    %863 = vector.broadcast %cst_136 : f32 to vector<1x1xf32>
    %864 = arith.divf %859, %863 : vector<1x1xf32>
    %cst_137 = arith.constant 3.200000e+01 : f32
    %865 = vector.broadcast %cst_137 : f32 to vector<1x1xf32>
    %866 = arith.divf %862, %865 : vector<1x1xf32>
    %867 = arith.mulf %864, %864 : vector<1x1xf32>
    %868 = arith.subf %866, %867 : vector<1x1xf32>
    %cst_138 = arith.constant 0.000000e+00 : f32
    %869 = vector.broadcast %cst_138 : f32 to vector<1x1xf32>
    %870 = arith.maximumf %868, %869 : vector<1x1xf32>
    %c0_139 = arith.constant 0 : index
    %871 = memref.load %arg4[%c0_139] : memref<8xf32, #tpu.memory_space<smem>>
    %cst_140 = arith.constant 9.99999974E-6 : f32
    %872 = vector.broadcast %cst_140 : f32 to vector<1x1xf32>
    %873 = arith.addf %870, %872 : vector<1x1xf32>
    %874 = math.rsqrt %873 : vector<1x1xf32>
    %875 = vector.broadcast %871 : f32 to vector<1x1xf32>
    %876 = arith.mulf %875, %874 : vector<1x1xf32>
    %c0_141 = arith.constant 0 : index
    %877 = memref.load %arg5[%c0_141] : memref<8xf32, #tpu.memory_space<smem>>
    %878 = arith.mulf %864, %876 : vector<1x1xf32>
    %879 = vector.broadcast %877 : f32 to vector<1x1xf32>
    %880 = arith.subf %879, %878 : vector<1x1xf32>
    %881 = vector.broadcast %876 : vector<1x1xf32> to vector<2x8xf32>
    %882 = arith.mulf %843, %881 : vector<2x8xf32>
    %883 = vector.broadcast %880 : vector<1x1xf32> to vector<2x8xf32>
    %884 = arith.addf %882, %883 : vector<2x8xf32>
    %885 = vector.broadcast %876 : vector<1x1xf32> to vector<2x8xf32>
    %886 = arith.mulf %846, %885 : vector<2x8xf32>
    %887 = vector.broadcast %880 : vector<1x1xf32> to vector<2x8xf32>
    %888 = arith.addf %886, %887 : vector<2x8xf32>
    %cst_142 = arith.constant 0.000000e+00 : f32
    %889 = vector.broadcast %cst_142 : f32 to vector<2x8xf32>
    %890 = arith.cmpf oge, %884, %889 : vector<2x8xf32>
    %891 = vector.broadcast %0 : f32 to vector<2x8xf32>
    %892 = arith.mulf %891, %884 : vector<2x8xf32>
    %893 = arith.select %890, %884, %892 : vector<2x8xi1>, vector<2x8xf32>
    %cst_143 = arith.constant 0.000000e+00 : f32
    %894 = vector.broadcast %cst_143 : f32 to vector<2x8xf32>
    %895 = arith.cmpf oge, %888, %894 : vector<2x8xf32>
    %896 = vector.broadcast %0 : f32 to vector<2x8xf32>
    %897 = arith.mulf %896, %888 : vector<2x8xf32>
    %898 = arith.select %895, %888, %897 : vector<2x8xi1>, vector<2x8xf32>
    %899 = arith.maximumf %893, %898 : vector<2x8xf32>
    %c0_144 = arith.constant 0 : index
    %c0_145 = arith.constant 0 : index
    %c0_146 = arith.constant 0 : index
    %900 = vector.load %arg7[%c0_144, %c0_145, %c0_146] : memref<8x2x8xf32, #tpu.memory_space<vmem>>, vector<1x2x8xf32>
    %901 = vector.shape_cast %900 : vector<1x2x8xf32> to vector<2x8xf32>
    %902 = vector.shape_cast %899 : vector<2x8xf32> to vector<1x2x8xf32>
    tpu.vector_store %arg7[%c0_144, %c0_145, %c0_146], %902 {strides = array<i32>} : memref<8x2x8xf32, #tpu.memory_space<vmem>>, vector<1x2x8xf32>,
    %c1_147 = arith.constant 1 : index
    %903 = memref.load %arg3[%c1_147] : memref<8xf32, #tpu.memory_space<smem>>
    %904 = vector.broadcast %903 : f32 to vector<2x8xf32>
    %905 = arith.addf %408, %904 : vector<2x8xf32>
    %c1_148 = arith.constant 1 : index
    %906 = memref.load %arg3[%c1_148] : memref<8xf32, #tpu.memory_space<smem>>
    %907 = vector.broadcast %906 : f32 to vector<2x8xf32>
    %908 = arith.addf %816, %907 : vector<2x8xf32>
    %cst_149 = arith.constant dense<0.000000e+00> : vector<2xf32>
    %909 = vector.multi_reduction <add>, %905, %cst_149 [1] : vector<2x8xf32> to vector<2xf32>
    %910 = vector.shape_cast %909 : vector<2xf32> to vector<2x1xf32>
    %cst_150 = arith.constant dense<0.000000e+00> : vector<2xf32>
    %911 = vector.multi_reduction <add>, %908, %cst_150 [1] : vector<2x8xf32> to vector<2xf32>
    %912 = vector.shape_cast %911 : vector<2xf32> to vector<2x1xf32>
    %913 = arith.mulf %905, %905 : vector<2x8xf32>
    %cst_151 = arith.constant dense<0.000000e+00> : vector<2xf32>
    %914 = vector.multi_reduction <add>, %913, %cst_151 [1] : vector<2x8xf32> to vector<2xf32>
    %915 = vector.shape_cast %914 : vector<2xf32> to vector<2x1xf32>
    %916 = arith.mulf %908, %908 : vector<2x8xf32>
    %cst_152 = arith.constant dense<0.000000e+00> : vector<2xf32>
    %917 = vector.multi_reduction <add>, %916, %cst_152 [1] : vector<2x8xf32> to vector<2xf32>
    %918 = vector.shape_cast %917 : vector<2xf32> to vector<2x1xf32>
    %919 = arith.addf %910, %912 : vector<2x1xf32>
    %cst_153 = arith.constant dense<0.000000e+00> : vector<1xf32>
    %920 = vector.multi_reduction <add>, %919, %cst_153 [0] : vector<2x1xf32> to vector<1xf32>
    %921 = vector.shape_cast %920 : vector<1xf32> to vector<1x1xf32>
    %922 = arith.addf %915, %918 : vector<2x1xf32>
    %cst_154 = arith.constant dense<0.000000e+00> : vector<1xf32>
    %923 = vector.multi_reduction <add>, %922, %cst_154 [0] : vector<2x1xf32> to vector<1xf32>
    %924 = vector.shape_cast %923 : vector<1xf32> to vector<1x1xf32>
    %cst_155 = arith.constant 3.200000e+01 : f32
    %925 = vector.broadcast %cst_155 : f32 to vector<1x1xf32>
    %926 = arith.divf %921, %925 : vector<1x1xf32>
    %cst_156 = arith.constant 3.200000e+01 : f32
    %927 = vector.broadcast %cst_156 : f32 to vector<1x1xf32>
    %928 = arith.divf %924, %927 : vector<1x1xf32>
    %929 = arith.mulf %926, %926 : vector<1x1xf32>
    %930 = arith.subf %928, %929 : vector<1x1xf32>
    %cst_157 = arith.constant 0.000000e+00 : f32
    %931 = vector.broadcast %cst_157 : f32 to vector<1x1xf32>
    %932 = arith.maximumf %930, %931 : vector<1x1xf32>
    %c1_158 = arith.constant 1 : index
    %933 = memref.load %arg4[%c1_158] : memref<8xf32, #tpu.memory_space<smem>>
    %cst_159 = arith.constant 9.99999974E-6 : f32
    %934 = vector.broadcast %cst_159 : f32 to vector<1x1xf32>
    %935 = arith.addf %932, %934 : vector<1x1xf32>
    %936 = math.rsqrt %935 : vector<1x1xf32>
    %937 = vector.broadcast %933 : f32 to vector<1x1xf32>
    %938 = arith.mulf %937, %936 : vector<1x1xf32>
    %c1_160 = arith.constant 1 : index
    %939 = memref.load %arg5[%c1_160] : memref<8xf32, #tpu.memory_space<smem>>
    %940 = arith.mulf %926, %938 : vector<1x1xf32>
    %941 = vector.broadcast %939 : f32 to vector<1x1xf32>
    %942 = arith.subf %941, %940 : vector<1x1xf32>
    %943 = vector.broadcast %938 : vector<1x1xf32> to vector<2x8xf32>
    %944 = arith.mulf %905, %943 : vector<2x8xf32>
    %945 = vector.broadcast %942 : vector<1x1xf32> to vector<2x8xf32>
    %946 = arith.addf %944, %945 : vector<2x8xf32>
    %947 = vector.broadcast %938 : vector<1x1xf32> to vector<2x8xf32>
    %948 = arith.mulf %908, %947 : vector<2x8xf32>
    %949 = vector.broadcast %942 : vector<1x1xf32> to vector<2x8xf32>
    %950 = arith.addf %948, %949 : vector<2x8xf32>
    %cst_161 = arith.constant 0.000000e+00 : f32
    %951 = vector.broadcast %cst_161 : f32 to vector<2x8xf32>
    %952 = arith.cmpf oge, %946, %951 : vector<2x8xf32>
    %953 = vector.broadcast %0 : f32 to vector<2x8xf32>
    %954 = arith.mulf %953, %946 : vector<2x8xf32>
    %955 = arith.select %952, %946, %954 : vector<2x8xi1>, vector<2x8xf32>
    %cst_162 = arith.constant 0.000000e+00 : f32
    %956 = vector.broadcast %cst_162 : f32 to vector<2x8xf32>
    %957 = arith.cmpf oge, %950, %956 : vector<2x8xf32>
    %958 = vector.broadcast %0 : f32 to vector<2x8xf32>
    %959 = arith.mulf %958, %950 : vector<2x8xf32>
    %960 = arith.select %957, %950, %959 : vector<2x8xi1>, vector<2x8xf32>
    %961 = arith.maximumf %955, %960 : vector<2x8xf32>
    %c1_163 = arith.constant 1 : index
    %c0_164 = arith.constant 0 : index
    %c0_165 = arith.constant 0 : index
    %962 = vector.load %arg7[%c1_163, %c0_164, %c0_165] : memref<8x2x8xf32, #tpu.memory_space<vmem>>, vector<1x2x8xf32>
    %963 = vector.shape_cast %962 : vector<1x2x8xf32> to vector<2x8xf32>
    %964 = vector.shape_cast %961 : vector<2x8xf32> to vector<1x2x8xf32>
    tpu.vector_store %arg7[%c1_163, %c0_164, %c0_165], %964 {strides = array<i32>} : memref<8x2x8xf32, #tpu.memory_space<vmem>>, vector<1x2x8xf32>,
    %c2_166 = arith.constant 2 : index
    %965 = memref.load %arg3[%c2_166] : memref<8xf32, #tpu.memory_space<smem>>
    %966 = vector.broadcast %965 : f32 to vector<2x8xf32>
    %967 = arith.addf %412, %966 : vector<2x8xf32>
    %c2_167 = arith.constant 2 : index
    %968 = memref.load %arg3[%c2_167] : memref<8xf32, #tpu.memory_space<smem>>
    %969 = vector.broadcast %968 : f32 to vector<2x8xf32>
    %970 = arith.addf %820, %969 : vector<2x8xf32>
    %cst_168 = arith.constant dense<0.000000e+00> : vector<2xf32>
    %971 = vector.multi_reduction <add>, %967, %cst_168 [1] : vector<2x8xf32> to vector<2xf32>
    %972 = vector.shape_cast %971 : vector<2xf32> to vector<2x1xf32>
    %cst_169 = arith.constant dense<0.000000e+00> : vector<2xf32>
    %973 = vector.multi_reduction <add>, %970, %cst_169 [1] : vector<2x8xf32> to vector<2xf32>
    %974 = vector.shape_cast %973 : vector<2xf32> to vector<2x1xf32>
    %975 = arith.mulf %967, %967 : vector<2x8xf32>
    %cst_170 = arith.constant dense<0.000000e+00> : vector<2xf32>
    %976 = vector.multi_reduction <add>, %975, %cst_170 [1] : vector<2x8xf32> to vector<2xf32>
    %977 = vector.shape_cast %976 : vector<2xf32> to vector<2x1xf32>
    %978 = arith.mulf %970, %970 : vector<2x8xf32>
    %cst_171 = arith.constant dense<0.000000e+00> : vector<2xf32>
    %979 = vector.multi_reduction <add>, %978, %cst_171 [1] : vector<2x8xf32> to vector<2xf32>
    %980 = vector.shape_cast %979 : vector<2xf32> to vector<2x1xf32>
    %981 = arith.addf %972, %974 : vector<2x1xf32>
    %cst_172 = arith.constant dense<0.000000e+00> : vector<1xf32>
    %982 = vector.multi_reduction <add>, %981, %cst_172 [0] : vector<2x1xf32> to vector<1xf32>
    %983 = vector.shape_cast %982 : vector<1xf32> to vector<1x1xf32>
    %984 = arith.addf %977, %980 : vector<2x1xf32>
    %cst_173 = arith.constant dense<0.000000e+00> : vector<1xf32>
    %985 = vector.multi_reduction <add>, %984, %cst_173 [0] : vector<2x1xf32> to vector<1xf32>
    %986 = vector.shape_cast %985 : vector<1xf32> to vector<1x1xf32>
    %cst_174 = arith.constant 3.200000e+01 : f32
    %987 = vector.broadcast %cst_174 : f32 to vector<1x1xf32>
    %988 = arith.divf %983, %987 : vector<1x1xf32>
    %cst_175 = arith.constant 3.200000e+01 : f32
    %989 = vector.broadcast %cst_175 : f32 to vector<1x1xf32>
    %990 = arith.divf %986, %989 : vector<1x1xf32>
    %991 = arith.mulf %988, %988 : vector<1x1xf32>
    %992 = arith.subf %990, %991 : vector<1x1xf32>
    %cst_176 = arith.constant 0.000000e+00 : f32
    %993 = vector.broadcast %cst_176 : f32 to vector<1x1xf32>
    %994 = arith.maximumf %992, %993 : vector<1x1xf32>
    %c2_177 = arith.constant 2 : index
    %995 = memref.load %arg4[%c2_177] : memref<8xf32, #tpu.memory_space<smem>>
    %cst_178 = arith.constant 9.99999974E-6 : f32
    %996 = vector.broadcast %cst_178 : f32 to vector<1x1xf32>
    %997 = arith.addf %994, %996 : vector<1x1xf32>
    %998 = math.rsqrt %997 : vector<1x1xf32>
    %999 = vector.broadcast %995 : f32 to vector<1x1xf32>
    %1000 = arith.mulf %999, %998 : vector<1x1xf32>
    %c2_179 = arith.constant 2 : index
    %1001 = memref.load %arg5[%c2_179] : memref<8xf32, #tpu.memory_space<smem>>
    %1002 = arith.mulf %988, %1000 : vector<1x1xf32>
    %1003 = vector.broadcast %1001 : f32 to vector<1x1xf32>
    %1004 = arith.subf %1003, %1002 : vector<1x1xf32>
    %1005 = vector.broadcast %1000 : vector<1x1xf32> to vector<2x8xf32>
    %1006 = arith.mulf %967, %1005 : vector<2x8xf32>
    %1007 = vector.broadcast %1004 : vector<1x1xf32> to vector<2x8xf32>
    %1008 = arith.addf %1006, %1007 : vector<2x8xf32>
    %1009 = vector.broadcast %1000 : vector<1x1xf32> to vector<2x8xf32>
    %1010 = arith.mulf %970, %1009 : vector<2x8xf32>
    %1011 = vector.broadcast %1004 : vector<1x1xf32> to vector<2x8xf32>
    %1012 = arith.addf %1010, %1011 : vector<2x8xf32>
    %cst_180 = arith.constant 0.000000e+00 : f32
    %1013 = vector.broadcast %cst_180 : f32 to vector<2x8xf32>
    %1014 = arith.cmpf oge, %1008, %1013 : vector<2x8xf32>
    %1015 = vector.broadcast %0 : f32 to vector<2x8xf32>
    %1016 = arith.mulf %1015, %1008 : vector<2x8xf32>
    %1017 = arith.select %1014, %1008, %1016 : vector<2x8xi1>, vector<2x8xf32>
    %cst_181 = arith.constant 0.000000e+00 : f32
    %1018 = vector.broadcast %cst_181 : f32 to vector<2x8xf32>
    %1019 = arith.cmpf oge, %1012, %1018 : vector<2x8xf32>
    %1020 = vector.broadcast %0 : f32 to vector<2x8xf32>
    %1021 = arith.mulf %1020, %1012 : vector<2x8xf32>
    %1022 = arith.select %1019, %1012, %1021 : vector<2x8xi1>, vector<2x8xf32>
    %1023 = arith.maximumf %1017, %1022 : vector<2x8xf32>
    %c2_182 = arith.constant 2 : index
    %c0_183 = arith.constant 0 : index
    %c0_184 = arith.constant 0 : index
    %1024 = vector.load %arg7[%c2_182, %c0_183, %c0_184] : memref<8x2x8xf32, #tpu.memory_space<vmem>>, vector<1x2x8xf32>
    %1025 = vector.shape_cast %1024 : vector<1x2x8xf32> to vector<2x8xf32>
    %1026 = vector.shape_cast %1023 : vector<2x8xf32> to vector<1x2x8xf32>
    tpu.vector_store %arg7[%c2_182, %c0_183, %c0_184], %1026 {strides = array<i32>} : memref<8x2x8xf32, #tpu.memory_space<vmem>>, vector<1x2x8xf32>,
    %c3_185 = arith.constant 3 : index
    %1027 = memref.load %arg3[%c3_185] : memref<8xf32, #tpu.memory_space<smem>>
    %1028 = vector.broadcast %1027 : f32 to vector<2x8xf32>
    %1029 = arith.addf %416, %1028 : vector<2x8xf32>
    %c3_186 = arith.constant 3 : index
    %1030 = memref.load %arg3[%c3_186] : memref<8xf32, #tpu.memory_space<smem>>
    %1031 = vector.broadcast %1030 : f32 to vector<2x8xf32>
    %1032 = arith.addf %824, %1031 : vector<2x8xf32>
    %cst_187 = arith.constant dense<0.000000e+00> : vector<2xf32>
    %1033 = vector.multi_reduction <add>, %1029, %cst_187 [1] : vector<2x8xf32> to vector<2xf32>
    %1034 = vector.shape_cast %1033 : vector<2xf32> to vector<2x1xf32>
    %cst_188 = arith.constant dense<0.000000e+00> : vector<2xf32>
    %1035 = vector.multi_reduction <add>, %1032, %cst_188 [1] : vector<2x8xf32> to vector<2xf32>
    %1036 = vector.shape_cast %1035 : vector<2xf32> to vector<2x1xf32>
    %1037 = arith.mulf %1029, %1029 : vector<2x8xf32>
    %cst_189 = arith.constant dense<0.000000e+00> : vector<2xf32>
    %1038 = vector.multi_reduction <add>, %1037, %cst_189 [1] : vector<2x8xf32> to vector<2xf32>
    %1039 = vector.shape_cast %1038 : vector<2xf32> to vector<2x1xf32>
    %1040 = arith.mulf %1032, %1032 : vector<2x8xf32>
    %cst_190 = arith.constant dense<0.000000e+00> : vector<2xf32>
    %1041 = vector.multi_reduction <add>, %1040, %cst_190 [1] : vector<2x8xf32> to vector<2xf32>
    %1042 = vector.shape_cast %1041 : vector<2xf32> to vector<2x1xf32>
    %1043 = arith.addf %1034, %1036 : vector<2x1xf32>
    %cst_191 = arith.constant dense<0.000000e+00> : vector<1xf32>
    %1044 = vector.multi_reduction <add>, %1043, %cst_191 [0] : vector<2x1xf32> to vector<1xf32>
    %1045 = vector.shape_cast %1044 : vector<1xf32> to vector<1x1xf32>
    %1046 = arith.addf %1039, %1042 : vector<2x1xf32>
    %cst_192 = arith.constant dense<0.000000e+00> : vector<1xf32>
    %1047 = vector.multi_reduction <add>, %1046, %cst_192 [0] : vector<2x1xf32> to vector<1xf32>
    %1048 = vector.shape_cast %1047 : vector<1xf32> to vector<1x1xf32>
    %cst_193 = arith.constant 3.200000e+01 : f32
    %1049 = vector.broadcast %cst_193 : f32 to vector<1x1xf32>
    %1050 = arith.divf %1045, %1049 : vector<1x1xf32>
    %cst_194 = arith.constant 3.200000e+01 : f32
    %1051 = vector.broadcast %cst_194 : f32 to vector<1x1xf32>
    %1052 = arith.divf %1048, %1051 : vector<1x1xf32>
    %1053 = arith.mulf %1050, %1050 : vector<1x1xf32>
    %1054 = arith.subf %1052, %1053 : vector<1x1xf32>
    %cst_195 = arith.constant 0.000000e+00 : f32
    %1055 = vector.broadcast %cst_195 : f32 to vector<1x1xf32>
    %1056 = arith.maximumf %1054, %1055 : vector<1x1xf32>
    %c3_196 = arith.constant 3 : index
    %1057 = memref.load %arg4[%c3_196] : memref<8xf32, #tpu.memory_space<smem>>
    %cst_197 = arith.constant 9.99999974E-6 : f32
    %1058 = vector.broadcast %cst_197 : f32 to vector<1x1xf32>
    %1059 = arith.addf %1056, %1058 : vector<1x1xf32>
    %1060 = math.rsqrt %1059 : vector<1x1xf32>
    %1061 = vector.broadcast %1057 : f32 to vector<1x1xf32>
    %1062 = arith.mulf %1061, %1060 : vector<1x1xf32>
    %c3_198 = arith.constant 3 : index
    %1063 = memref.load %arg5[%c3_198] : memref<8xf32, #tpu.memory_space<smem>>
    %1064 = arith.mulf %1050, %1062 : vector<1x1xf32>
    %1065 = vector.broadcast %1063 : f32 to vector<1x1xf32>
    %1066 = arith.subf %1065, %1064 : vector<1x1xf32>
    %1067 = vector.broadcast %1062 : vector<1x1xf32> to vector<2x8xf32>
    %1068 = arith.mulf %1029, %1067 : vector<2x8xf32>
    %1069 = vector.broadcast %1066 : vector<1x1xf32> to vector<2x8xf32>
    %1070 = arith.addf %1068, %1069 : vector<2x8xf32>
    %1071 = vector.broadcast %1062 : vector<1x1xf32> to vector<2x8xf32>
    %1072 = arith.mulf %1032, %1071 : vector<2x8xf32>
    %1073 = vector.broadcast %1066 : vector<1x1xf32> to vector<2x8xf32>
    %1074 = arith.addf %1072, %1073 : vector<2x8xf32>
    %cst_199 = arith.constant 0.000000e+00 : f32
    %1075 = vector.broadcast %cst_199 : f32 to vector<2x8xf32>
    %1076 = arith.cmpf oge, %1070, %1075 : vector<2x8xf32>
    %1077 = vector.broadcast %0 : f32 to vector<2x8xf32>
    %1078 = arith.mulf %1077, %1070 : vector<2x8xf32>
    %1079 = arith.select %1076, %1070, %1078 : vector<2x8xi1>, vector<2x8xf32>
    %cst_200 = arith.constant 0.000000e+00 : f32
    %1080 = vector.broadcast %cst_200 : f32 to vector<2x8xf32>
    %1081 = arith.cmpf oge, %1074, %1080 : vector<2x8xf32>
    %1082 = vector.broadcast %0 : f32 to vector<2x8xf32>
    %1083 = arith.mulf %1082, %1074 : vector<2x8xf32>
    %1084 = arith.select %1081, %1074, %1083 : vector<2x8xi1>, vector<2x8xf32>
    %1085 = arith.maximumf %1079, %1084 : vector<2x8xf32>
    %c3_201 = arith.constant 3 : index
    %c0_202 = arith.constant 0 : index
    %c0_203 = arith.constant 0 : index
    %1086 = vector.load %arg7[%c3_201, %c0_202, %c0_203] : memref<8x2x8xf32, #tpu.memory_space<vmem>>, vector<1x2x8xf32>
    %1087 = vector.shape_cast %1086 : vector<1x2x8xf32> to vector<2x8xf32>
    %1088 = vector.shape_cast %1085 : vector<2x8xf32> to vector<1x2x8xf32>
    tpu.vector_store %arg7[%c3_201, %c0_202, %c0_203], %1088 {strides = array<i32>} : memref<8x2x8xf32, #tpu.memory_space<vmem>>, vector<1x2x8xf32>,
    %c4_204 = arith.constant 4 : index
    %1089 = memref.load %arg3[%c4_204] : memref<8xf32, #tpu.memory_space<smem>>
    %1090 = vector.broadcast %1089 : f32 to vector<2x8xf32>
    %1091 = arith.addf %420, %1090 : vector<2x8xf32>
    %c4_205 = arith.constant 4 : index
    %1092 = memref.load %arg3[%c4_205] : memref<8xf32, #tpu.memory_space<smem>>
    %1093 = vector.broadcast %1092 : f32 to vector<2x8xf32>
    %1094 = arith.addf %828, %1093 : vector<2x8xf32>
    %cst_206 = arith.constant dense<0.000000e+00> : vector<2xf32>
    %1095 = vector.multi_reduction <add>, %1091, %cst_206 [1] : vector<2x8xf32> to vector<2xf32>
    %1096 = vector.shape_cast %1095 : vector<2xf32> to vector<2x1xf32>
    %cst_207 = arith.constant dense<0.000000e+00> : vector<2xf32>
    %1097 = vector.multi_reduction <add>, %1094, %cst_207 [1] : vector<2x8xf32> to vector<2xf32>
    %1098 = vector.shape_cast %1097 : vector<2xf32> to vector<2x1xf32>
    %1099 = arith.mulf %1091, %1091 : vector<2x8xf32>
    %cst_208 = arith.constant dense<0.000000e+00> : vector<2xf32>
    %1100 = vector.multi_reduction <add>, %1099, %cst_208 [1] : vector<2x8xf32> to vector<2xf32>
    %1101 = vector.shape_cast %1100 : vector<2xf32> to vector<2x1xf32>
    %1102 = arith.mulf %1094, %1094 : vector<2x8xf32>
    %cst_209 = arith.constant dense<0.000000e+00> : vector<2xf32>
    %1103 = vector.multi_reduction <add>, %1102, %cst_209 [1] : vector<2x8xf32> to vector<2xf32>
    %1104 = vector.shape_cast %1103 : vector<2xf32> to vector<2x1xf32>
    %1105 = arith.addf %1096, %1098 : vector<2x1xf32>
    %cst_210 = arith.constant dense<0.000000e+00> : vector<1xf32>
    %1106 = vector.multi_reduction <add>, %1105, %cst_210 [0] : vector<2x1xf32> to vector<1xf32>
    %1107 = vector.shape_cast %1106 : vector<1xf32> to vector<1x1xf32>
    %1108 = arith.addf %1101, %1104 : vector<2x1xf32>
    %cst_211 = arith.constant dense<0.000000e+00> : vector<1xf32>
    %1109 = vector.multi_reduction <add>, %1108, %cst_211 [0] : vector<2x1xf32> to vector<1xf32>
    %1110 = vector.shape_cast %1109 : vector<1xf32> to vector<1x1xf32>
    %cst_212 = arith.constant 3.200000e+01 : f32
    %1111 = vector.broadcast %cst_212 : f32 to vector<1x1xf32>
    %1112 = arith.divf %1107, %1111 : vector<1x1xf32>
    %cst_213 = arith.constant 3.200000e+01 : f32
    %1113 = vector.broadcast %cst_213 : f32 to vector<1x1xf32>
    %1114 = arith.divf %1110, %1113 : vector<1x1xf32>
    %1115 = arith.mulf %1112, %1112 : vector<1x1xf32>
    %1116 = arith.subf %1114, %1115 : vector<1x1xf32>
    %cst_214 = arith.constant 0.000000e+00 : f32
    %1117 = vector.broadcast %cst_214 : f32 to vector<1x1xf32>
    %1118 = arith.maximumf %1116, %1117 : vector<1x1xf32>
    %c4_215 = arith.constant 4 : index
    %1119 = memref.load %arg4[%c4_215] : memref<8xf32, #tpu.memory_space<smem>>
    %cst_216 = arith.constant 9.99999974E-6 : f32
    %1120 = vector.broadcast %cst_216 : f32 to vector<1x1xf32>
    %1121 = arith.addf %1118, %1120 : vector<1x1xf32>
    %1122 = math.rsqrt %1121 : vector<1x1xf32>
    %1123 = vector.broadcast %1119 : f32 to vector<1x1xf32>
    %1124 = arith.mulf %1123, %1122 : vector<1x1xf32>
    %c4_217 = arith.constant 4 : index
    %1125 = memref.load %arg5[%c4_217] : memref<8xf32, #tpu.memory_space<smem>>
    %1126 = arith.mulf %1112, %1124 : vector<1x1xf32>
    %1127 = vector.broadcast %1125 : f32 to vector<1x1xf32>
    %1128 = arith.subf %1127, %1126 : vector<1x1xf32>
    %1129 = vector.broadcast %1124 : vector<1x1xf32> to vector<2x8xf32>
    %1130 = arith.mulf %1091, %1129 : vector<2x8xf32>
    %1131 = vector.broadcast %1128 : vector<1x1xf32> to vector<2x8xf32>
    %1132 = arith.addf %1130, %1131 : vector<2x8xf32>
    %1133 = vector.broadcast %1124 : vector<1x1xf32> to vector<2x8xf32>
    %1134 = arith.mulf %1094, %1133 : vector<2x8xf32>
    %1135 = vector.broadcast %1128 : vector<1x1xf32> to vector<2x8xf32>
    %1136 = arith.addf %1134, %1135 : vector<2x8xf32>
    %cst_218 = arith.constant 0.000000e+00 : f32
    %1137 = vector.broadcast %cst_218 : f32 to vector<2x8xf32>
    %1138 = arith.cmpf oge, %1132, %1137 : vector<2x8xf32>
    %1139 = vector.broadcast %0 : f32 to vector<2x8xf32>
    %1140 = arith.mulf %1139, %1132 : vector<2x8xf32>
    %1141 = arith.select %1138, %1132, %1140 : vector<2x8xi1>, vector<2x8xf32>
    %cst_219 = arith.constant 0.000000e+00 : f32
    %1142 = vector.broadcast %cst_219 : f32 to vector<2x8xf32>
    %1143 = arith.cmpf oge, %1136, %1142 : vector<2x8xf32>
    %1144 = vector.broadcast %0 : f32 to vector<2x8xf32>
    %1145 = arith.mulf %1144, %1136 : vector<2x8xf32>
    %1146 = arith.select %1143, %1136, %1145 : vector<2x8xi1>, vector<2x8xf32>
    %1147 = arith.maximumf %1141, %1146 : vector<2x8xf32>
    %c4_220 = arith.constant 4 : index
    %c0_221 = arith.constant 0 : index
    %c0_222 = arith.constant 0 : index
    %1148 = vector.load %arg7[%c4_220, %c0_221, %c0_222] : memref<8x2x8xf32, #tpu.memory_space<vmem>>, vector<1x2x8xf32>
    %1149 = vector.shape_cast %1148 : vector<1x2x8xf32> to vector<2x8xf32>
    %1150 = vector.shape_cast %1147 : vector<2x8xf32> to vector<1x2x8xf32>
    tpu.vector_store %arg7[%c4_220, %c0_221, %c0_222], %1150 {strides = array<i32>} : memref<8x2x8xf32, #tpu.memory_space<vmem>>, vector<1x2x8xf32>,
    %c5_223 = arith.constant 5 : index
    %1151 = memref.load %arg3[%c5_223] : memref<8xf32, #tpu.memory_space<smem>>
    %1152 = vector.broadcast %1151 : f32 to vector<2x8xf32>
    %1153 = arith.addf %424, %1152 : vector<2x8xf32>
    %c5_224 = arith.constant 5 : index
    %1154 = memref.load %arg3[%c5_224] : memref<8xf32, #tpu.memory_space<smem>>
    %1155 = vector.broadcast %1154 : f32 to vector<2x8xf32>
    %1156 = arith.addf %832, %1155 : vector<2x8xf32>
    %cst_225 = arith.constant dense<0.000000e+00> : vector<2xf32>
    %1157 = vector.multi_reduction <add>, %1153, %cst_225 [1] : vector<2x8xf32> to vector<2xf32>
    %1158 = vector.shape_cast %1157 : vector<2xf32> to vector<2x1xf32>
    %cst_226 = arith.constant dense<0.000000e+00> : vector<2xf32>
    %1159 = vector.multi_reduction <add>, %1156, %cst_226 [1] : vector<2x8xf32> to vector<2xf32>
    %1160 = vector.shape_cast %1159 : vector<2xf32> to vector<2x1xf32>
    %1161 = arith.mulf %1153, %1153 : vector<2x8xf32>
    %cst_227 = arith.constant dense<0.000000e+00> : vector<2xf32>
    %1162 = vector.multi_reduction <add>, %1161, %cst_227 [1] : vector<2x8xf32> to vector<2xf32>
    %1163 = vector.shape_cast %1162 : vector<2xf32> to vector<2x1xf32>
    %1164 = arith.mulf %1156, %1156 : vector<2x8xf32>
    %cst_228 = arith.constant dense<0.000000e+00> : vector<2xf32>
    %1165 = vector.multi_reduction <add>, %1164, %cst_228 [1] : vector<2x8xf32> to vector<2xf32>
    %1166 = vector.shape_cast %1165 : vector<2xf32> to vector<2x1xf32>
    %1167 = arith.addf %1158, %1160 : vector<2x1xf32>
    %cst_229 = arith.constant dense<0.000000e+00> : vector<1xf32>
    %1168 = vector.multi_reduction <add>, %1167, %cst_229 [0] : vector<2x1xf32> to vector<1xf32>
    %1169 = vector.shape_cast %1168 : vector<1xf32> to vector<1x1xf32>
    %1170 = arith.addf %1163, %1166 : vector<2x1xf32>
    %cst_230 = arith.constant dense<0.000000e+00> : vector<1xf32>
    %1171 = vector.multi_reduction <add>, %1170, %cst_230 [0] : vector<2x1xf32> to vector<1xf32>
    %1172 = vector.shape_cast %1171 : vector<1xf32> to vector<1x1xf32>
    %cst_231 = arith.constant 3.200000e+01 : f32
    %1173 = vector.broadcast %cst_231 : f32 to vector<1x1xf32>
    %1174 = arith.divf %1169, %1173 : vector<1x1xf32>
    %cst_232 = arith.constant 3.200000e+01 : f32
    %1175 = vector.broadcast %cst_232 : f32 to vector<1x1xf32>
    %1176 = arith.divf %1172, %1175 : vector<1x1xf32>
    %1177 = arith.mulf %1174, %1174 : vector<1x1xf32>
    %1178 = arith.subf %1176, %1177 : vector<1x1xf32>
    %cst_233 = arith.constant 0.000000e+00 : f32
    %1179 = vector.broadcast %cst_233 : f32 to vector<1x1xf32>
    %1180 = arith.maximumf %1178, %1179 : vector<1x1xf32>
    %c5_234 = arith.constant 5 : index
    %1181 = memref.load %arg4[%c5_234] : memref<8xf32, #tpu.memory_space<smem>>
    %cst_235 = arith.constant 9.99999974E-6 : f32
    %1182 = vector.broadcast %cst_235 : f32 to vector<1x1xf32>
    %1183 = arith.addf %1180, %1182 : vector<1x1xf32>
    %1184 = math.rsqrt %1183 : vector<1x1xf32>
    %1185 = vector.broadcast %1181 : f32 to vector<1x1xf32>
    %1186 = arith.mulf %1185, %1184 : vector<1x1xf32>
    %c5_236 = arith.constant 5 : index
    %1187 = memref.load %arg5[%c5_236] : memref<8xf32, #tpu.memory_space<smem>>
    %1188 = arith.mulf %1174, %1186 : vector<1x1xf32>
    %1189 = vector.broadcast %1187 : f32 to vector<1x1xf32>
    %1190 = arith.subf %1189, %1188 : vector<1x1xf32>
    %1191 = vector.broadcast %1186 : vector<1x1xf32> to vector<2x8xf32>
    %1192 = arith.mulf %1153, %1191 : vector<2x8xf32>
    %1193 = vector.broadcast %1190 : vector<1x1xf32> to vector<2x8xf32>
    %1194 = arith.addf %1192, %1193 : vector<2x8xf32>
    %1195 = vector.broadcast %1186 : vector<1x1xf32> to vector<2x8xf32>
    %1196 = arith.mulf %1156, %1195 : vector<2x8xf32>
    %1197 = vector.broadcast %1190 : vector<1x1xf32> to vector<2x8xf32>
    %1198 = arith.addf %1196, %1197 : vector<2x8xf32>
    %cst_237 = arith.constant 0.000000e+00 : f32
    %1199 = vector.broadcast %cst_237 : f32 to vector<2x8xf32>
    %1200 = arith.cmpf oge, %1194, %1199 : vector<2x8xf32>
    %1201 = vector.broadcast %0 : f32 to vector<2x8xf32>
    %1202 = arith.mulf %1201, %1194 : vector<2x8xf32>
    %1203 = arith.select %1200, %1194, %1202 : vector<2x8xi1>, vector<2x8xf32>
    %cst_238 = arith.constant 0.000000e+00 : f32
    %1204 = vector.broadcast %cst_238 : f32 to vector<2x8xf32>
    %1205 = arith.cmpf oge, %1198, %1204 : vector<2x8xf32>
    %1206 = vector.broadcast %0 : f32 to vector<2x8xf32>
    %1207 = arith.mulf %1206, %1198 : vector<2x8xf32>
    %1208 = arith.select %1205, %1198, %1207 : vector<2x8xi1>, vector<2x8xf32>
    %1209 = arith.maximumf %1203, %1208 : vector<2x8xf32>
    %c5_239 = arith.constant 5 : index
    %c0_240 = arith.constant 0 : index
    %c0_241 = arith.constant 0 : index
    %1210 = vector.load %arg7[%c5_239, %c0_240, %c0_241] : memref<8x2x8xf32, #tpu.memory_space<vmem>>, vector<1x2x8xf32>
    %1211 = vector.shape_cast %1210 : vector<1x2x8xf32> to vector<2x8xf32>
    %1212 = vector.shape_cast %1209 : vector<2x8xf32> to vector<1x2x8xf32>
    tpu.vector_store %arg7[%c5_239, %c0_240, %c0_241], %1212 {strides = array<i32>} : memref<8x2x8xf32, #tpu.memory_space<vmem>>, vector<1x2x8xf32>,
    %c6_242 = arith.constant 6 : index
    %1213 = memref.load %arg3[%c6_242] : memref<8xf32, #tpu.memory_space<smem>>
    %1214 = vector.broadcast %1213 : f32 to vector<2x8xf32>
    %1215 = arith.addf %428, %1214 : vector<2x8xf32>
    %c6_243 = arith.constant 6 : index
    %1216 = memref.load %arg3[%c6_243] : memref<8xf32, #tpu.memory_space<smem>>
    %1217 = vector.broadcast %1216 : f32 to vector<2x8xf32>
    %1218 = arith.addf %836, %1217 : vector<2x8xf32>
    %cst_244 = arith.constant dense<0.000000e+00> : vector<2xf32>
    %1219 = vector.multi_reduction <add>, %1215, %cst_244 [1] : vector<2x8xf32> to vector<2xf32>
    %1220 = vector.shape_cast %1219 : vector<2xf32> to vector<2x1xf32>
    %cst_245 = arith.constant dense<0.000000e+00> : vector<2xf32>
    %1221 = vector.multi_reduction <add>, %1218, %cst_245 [1] : vector<2x8xf32> to vector<2xf32>
    %1222 = vector.shape_cast %1221 : vector<2xf32> to vector<2x1xf32>
    %1223 = arith.mulf %1215, %1215 : vector<2x8xf32>
    %cst_246 = arith.constant dense<0.000000e+00> : vector<2xf32>
    %1224 = vector.multi_reduction <add>, %1223, %cst_246 [1] : vector<2x8xf32> to vector<2xf32>
    %1225 = vector.shape_cast %1224 : vector<2xf32> to vector<2x1xf32>
    %1226 = arith.mulf %1218, %1218 : vector<2x8xf32>
    %cst_247 = arith.constant dense<0.000000e+00> : vector<2xf32>
    %1227 = vector.multi_reduction <add>, %1226, %cst_247 [1] : vector<2x8xf32> to vector<2xf32>
    %1228 = vector.shape_cast %1227 : vector<2xf32> to vector<2x1xf32>
    %1229 = arith.addf %1220, %1222 : vector<2x1xf32>
    %cst_248 = arith.constant dense<0.000000e+00> : vector<1xf32>
    %1230 = vector.multi_reduction <add>, %1229, %cst_248 [0] : vector<2x1xf32> to vector<1xf32>
    %1231 = vector.shape_cast %1230 : vector<1xf32> to vector<1x1xf32>
    %1232 = arith.addf %1225, %1228 : vector<2x1xf32>
    %cst_249 = arith.constant dense<0.000000e+00> : vector<1xf32>
    %1233 = vector.multi_reduction <add>, %1232, %cst_249 [0] : vector<2x1xf32> to vector<1xf32>
    %1234 = vector.shape_cast %1233 : vector<1xf32> to vector<1x1xf32>
    %cst_250 = arith.constant 3.200000e+01 : f32
    %1235 = vector.broadcast %cst_250 : f32 to vector<1x1xf32>
    %1236 = arith.divf %1231, %1235 : vector<1x1xf32>
    %cst_251 = arith.constant 3.200000e+01 : f32
    %1237 = vector.broadcast %cst_251 : f32 to vector<1x1xf32>
    %1238 = arith.divf %1234, %1237 : vector<1x1xf32>
    %1239 = arith.mulf %1236, %1236 : vector<1x1xf32>
    %1240 = arith.subf %1238, %1239 : vector<1x1xf32>
    %cst_252 = arith.constant 0.000000e+00 : f32
    %1241 = vector.broadcast %cst_252 : f32 to vector<1x1xf32>
    %1242 = arith.maximumf %1240, %1241 : vector<1x1xf32>
    %c6_253 = arith.constant 6 : index
    %1243 = memref.load %arg4[%c6_253] : memref<8xf32, #tpu.memory_space<smem>>
    %cst_254 = arith.constant 9.99999974E-6 : f32
    %1244 = vector.broadcast %cst_254 : f32 to vector<1x1xf32>
    %1245 = arith.addf %1242, %1244 : vector<1x1xf32>
    %1246 = math.rsqrt %1245 : vector<1x1xf32>
    %1247 = vector.broadcast %1243 : f32 to vector<1x1xf32>
    %1248 = arith.mulf %1247, %1246 : vector<1x1xf32>
    %c6_255 = arith.constant 6 : index
    %1249 = memref.load %arg5[%c6_255] : memref<8xf32, #tpu.memory_space<smem>>
    %1250 = arith.mulf %1236, %1248 : vector<1x1xf32>
    %1251 = vector.broadcast %1249 : f32 to vector<1x1xf32>
    %1252 = arith.subf %1251, %1250 : vector<1x1xf32>
    %1253 = vector.broadcast %1248 : vector<1x1xf32> to vector<2x8xf32>
    %1254 = arith.mulf %1215, %1253 : vector<2x8xf32>
    %1255 = vector.broadcast %1252 : vector<1x1xf32> to vector<2x8xf32>
    %1256 = arith.addf %1254, %1255 : vector<2x8xf32>
    %1257 = vector.broadcast %1248 : vector<1x1xf32> to vector<2x8xf32>
    %1258 = arith.mulf %1218, %1257 : vector<2x8xf32>
    %1259 = vector.broadcast %1252 : vector<1x1xf32> to vector<2x8xf32>
    %1260 = arith.addf %1258, %1259 : vector<2x8xf32>
    %cst_256 = arith.constant 0.000000e+00 : f32
    %1261 = vector.broadcast %cst_256 : f32 to vector<2x8xf32>
    %1262 = arith.cmpf oge, %1256, %1261 : vector<2x8xf32>
    %1263 = vector.broadcast %0 : f32 to vector<2x8xf32>
    %1264 = arith.mulf %1263, %1256 : vector<2x8xf32>
    %1265 = arith.select %1262, %1256, %1264 : vector<2x8xi1>, vector<2x8xf32>
    %cst_257 = arith.constant 0.000000e+00 : f32
    %1266 = vector.broadcast %cst_257 : f32 to vector<2x8xf32>
    %1267 = arith.cmpf oge, %1260, %1266 : vector<2x8xf32>
    %1268 = vector.broadcast %0 : f32 to vector<2x8xf32>
    %1269 = arith.mulf %1268, %1260 : vector<2x8xf32>
    %1270 = arith.select %1267, %1260, %1269 : vector<2x8xi1>, vector<2x8xf32>
    %1271 = arith.maximumf %1265, %1270 : vector<2x8xf32>
    %c6_258 = arith.constant 6 : index
    %c0_259 = arith.constant 0 : index
    %c0_260 = arith.constant 0 : index
    %1272 = vector.load %arg7[%c6_258, %c0_259, %c0_260] : memref<8x2x8xf32, #tpu.memory_space<vmem>>, vector<1x2x8xf32>
    %1273 = vector.shape_cast %1272 : vector<1x2x8xf32> to vector<2x8xf32>
    %1274 = vector.shape_cast %1271 : vector<2x8xf32> to vector<1x2x8xf32>
    tpu.vector_store %arg7[%c6_258, %c0_259, %c0_260], %1274 {strides = array<i32>} : memref<8x2x8xf32, #tpu.memory_space<vmem>>, vector<1x2x8xf32>,
    %c7_261 = arith.constant 7 : index
    %1275 = memref.load %arg3[%c7_261] : memref<8xf32, #tpu.memory_space<smem>>
    %1276 = vector.broadcast %1275 : f32 to vector<2x8xf32>
    %1277 = arith.addf %432, %1276 : vector<2x8xf32>
    %c7_262 = arith.constant 7 : index
    %1278 = memref.load %arg3[%c7_262] : memref<8xf32, #tpu.memory_space<smem>>
    %1279 = vector.broadcast %1278 : f32 to vector<2x8xf32>
    %1280 = arith.addf %840, %1279 : vector<2x8xf32>
    %cst_263 = arith.constant dense<0.000000e+00> : vector<2xf32>
    %1281 = vector.multi_reduction <add>, %1277, %cst_263 [1] : vector<2x8xf32> to vector<2xf32>
    %1282 = vector.shape_cast %1281 : vector<2xf32> to vector<2x1xf32>
    %cst_264 = arith.constant dense<0.000000e+00> : vector<2xf32>
    %1283 = vector.multi_reduction <add>, %1280, %cst_264 [1] : vector<2x8xf32> to vector<2xf32>
    %1284 = vector.shape_cast %1283 : vector<2xf32> to vector<2x1xf32>
    %1285 = arith.mulf %1277, %1277 : vector<2x8xf32>
    %cst_265 = arith.constant dense<0.000000e+00> : vector<2xf32>
    %1286 = vector.multi_reduction <add>, %1285, %cst_265 [1] : vector<2x8xf32> to vector<2xf32>
    %1287 = vector.shape_cast %1286 : vector<2xf32> to vector<2x1xf32>
    %1288 = arith.mulf %1280, %1280 : vector<2x8xf32>
    %cst_266 = arith.constant dense<0.000000e+00> : vector<2xf32>
    %1289 = vector.multi_reduction <add>, %1288, %cst_266 [1] : vector<2x8xf32> to vector<2xf32>
    %1290 = vector.shape_cast %1289 : vector<2xf32> to vector<2x1xf32>
    %1291 = arith.addf %1282, %1284 : vector<2x1xf32>
    %cst_267 = arith.constant dense<0.000000e+00> : vector<1xf32>
    %1292 = vector.multi_reduction <add>, %1291, %cst_267 [0] : vector<2x1xf32> to vector<1xf32>
    %1293 = vector.shape_cast %1292 : vector<1xf32> to vector<1x1xf32>
    %1294 = arith.addf %1287, %1290 : vector<2x1xf32>
    %cst_268 = arith.constant dense<0.000000e+00> : vector<1xf32>
    %1295 = vector.multi_reduction <add>, %1294, %cst_268 [0] : vector<2x1xf32> to vector<1xf32>
    %1296 = vector.shape_cast %1295 : vector<1xf32> to vector<1x1xf32>
    %cst_269 = arith.constant 3.200000e+01 : f32
    %1297 = vector.broadcast %cst_269 : f32 to vector<1x1xf32>
    %1298 = arith.divf %1293, %1297 : vector<1x1xf32>
    %cst_270 = arith.constant 3.200000e+01 : f32
    %1299 = vector.broadcast %cst_270 : f32 to vector<1x1xf32>
    %1300 = arith.divf %1296, %1299 : vector<1x1xf32>
    %1301 = arith.mulf %1298, %1298 : vector<1x1xf32>
    %1302 = arith.subf %1300, %1301 : vector<1x1xf32>
    %cst_271 = arith.constant 0.000000e+00 : f32
    %1303 = vector.broadcast %cst_271 : f32 to vector<1x1xf32>
    %1304 = arith.maximumf %1302, %1303 : vector<1x1xf32>
    %c7_272 = arith.constant 7 : index
    %1305 = memref.load %arg4[%c7_272] : memref<8xf32, #tpu.memory_space<smem>>
    %cst_273 = arith.constant 9.99999974E-6 : f32
    %1306 = vector.broadcast %cst_273 : f32 to vector<1x1xf32>
    %1307 = arith.addf %1304, %1306 : vector<1x1xf32>
    %1308 = math.rsqrt %1307 : vector<1x1xf32>
    %1309 = vector.broadcast %1305 : f32 to vector<1x1xf32>
    %1310 = arith.mulf %1309, %1308 : vector<1x1xf32>
    %c7_274 = arith.constant 7 : index
    %1311 = memref.load %arg5[%c7_274] : memref<8xf32, #tpu.memory_space<smem>>
    %1312 = arith.mulf %1298, %1310 : vector<1x1xf32>
    %1313 = vector.broadcast %1311 : f32 to vector<1x1xf32>
    %1314 = arith.subf %1313, %1312 : vector<1x1xf32>
    %1315 = vector.broadcast %1310 : vector<1x1xf32> to vector<2x8xf32>
    %1316 = arith.mulf %1277, %1315 : vector<2x8xf32>
    %1317 = vector.broadcast %1314 : vector<1x1xf32> to vector<2x8xf32>
    %1318 = arith.addf %1316, %1317 : vector<2x8xf32>
    %1319 = vector.broadcast %1310 : vector<1x1xf32> to vector<2x8xf32>
    %1320 = arith.mulf %1280, %1319 : vector<2x8xf32>
    %1321 = vector.broadcast %1314 : vector<1x1xf32> to vector<2x8xf32>
    %1322 = arith.addf %1320, %1321 : vector<2x8xf32>
    %cst_275 = arith.constant 0.000000e+00 : f32
    %1323 = vector.broadcast %cst_275 : f32 to vector<2x8xf32>
    %1324 = arith.cmpf oge, %1318, %1323 : vector<2x8xf32>
    %1325 = vector.broadcast %0 : f32 to vector<2x8xf32>
    %1326 = arith.mulf %1325, %1318 : vector<2x8xf32>
    %1327 = arith.select %1324, %1318, %1326 : vector<2x8xi1>, vector<2x8xf32>
    %cst_276 = arith.constant 0.000000e+00 : f32
    %1328 = vector.broadcast %cst_276 : f32 to vector<2x8xf32>
    %1329 = arith.cmpf oge, %1322, %1328 : vector<2x8xf32>
    %1330 = vector.broadcast %0 : f32 to vector<2x8xf32>
    %1331 = arith.mulf %1330, %1322 : vector<2x8xf32>
    %1332 = arith.select %1329, %1322, %1331 : vector<2x8xi1>, vector<2x8xf32>
    %1333 = arith.maximumf %1327, %1332 : vector<2x8xf32>
    %c7_277 = arith.constant 7 : index
    %c0_278 = arith.constant 0 : index
    %c0_279 = arith.constant 0 : index
    %1334 = vector.load %arg7[%c7_277, %c0_278, %c0_279] : memref<8x2x8xf32, #tpu.memory_space<vmem>>, vector<1x2x8xf32>
    %1335 = vector.shape_cast %1334 : vector<1x2x8xf32> to vector<2x8xf32>
    %1336 = vector.shape_cast %1333 : vector<2x8xf32> to vector<1x2x8xf32>
    tpu.vector_store %arg7[%c7_277, %c0_278, %c0_279], %1336 {strides = array<i32>} : memref<8x2x8xf32, #tpu.memory_space<vmem>>, vector<1x2x8xf32>,
    return
  }
  func.func @transform_0(%arg0: i32) -> (i32, i32, i32, i32) {
    %c0_i32 = arith.constant 0 : i32
    %c0_i32_0 = arith.constant 0 : i32
    %c0_i32_1 = arith.constant 0 : i32
    %c0_i32_2 = arith.constant 0 : i32
    %c0_i32_3 = arith.constant 0 : i32
    return %c0_i32, %c0_i32_0, %c0_i32_1, %c0_i32_2 : i32, i32, i32, i32
  }
  func.func @transform_1(%arg0: i32) -> i32 {
    %c0_i32 = arith.constant 0 : i32
    %c0_i32_0 = arith.constant 0 : i32
    return %c0_i32 : i32
  }
  func.func @transform_2(%arg0: i32) -> i32 {
    %c0_i32 = arith.constant 0 : i32
    %c0_i32_0 = arith.constant 0 : i32
    return %c0_i32 : i32
  }
  func.func @transform_3(%arg0: i32) -> i32 {
    %c0_i32 = arith.constant 0 : i32
    %c0_i32_0 = arith.constant 0 : i32
    return %c0_i32 : i32
  }
  func.func @transform_4(%arg0: i32) -> i32 {
    %c0_i32 = arith.constant 0 : i32
    %c0_i32_0 = arith.constant 0 : i32
    return %c0_i32 : i32
  }
  func.func @transform_5(%arg0: i32) -> i32 {
    %c0_i32 = arith.constant 0 : i32
    %c0_i32_0 = arith.constant 0 : i32
    return %c0_i32 : i32
  }
  func.func @transform_6(%arg0: i32) -> (i32, i32, i32) {
    %c0_i32 = arith.constant 0 : i32
    %c0_i32_0 = arith.constant 0 : i32
    %c0_i32_1 = arith.constant 0 : i32
    %c0_i32_2 = arith.constant 0 : i32
    return %c0_i32, %c0_i32_0, %c0_i32_1 : i32, i32, i32
  }
}

</mosaic_0001>

<llo_original>
// kernel: cnn_forward.1
$region0: #{cnn_forward.1}
  #allocation0 [shape = 'u32[]', space=smem, size = 0x4, offset = 0x4, fixed_abs, tag = 'smem constant byte address 0x4 - core index']
  #allocation1 [shape = 'u32[72,128]{1,0:T(1,128)}', space=vmem, size = 0x9000, scoped, tag = 'internal scratch']
  #allocation2 [shape = 'f32[1]{0:T(128)S(6)}', space=smem, size = 0x200, scoped, tag = 'scoped memory for cnn_forward.1']
  %s0 = inlined_call_operand.vmem [shape: f32[2,4,2,9], index: 0, kind: input, shape index: {}]
  %s1 = inlined_call_operand.vmem [shape: f32[96], index: 1, kind: input, shape index: {}]
  %s2 = inlined_call_operand.vmem [shape: f32[8], index: 2, kind: input, shape index: {}]
  %s3 = inlined_call_operand.vmem [shape: f32[8], index: 3, kind: input, shape index: {}]
  %s4 = inlined_call_operand.vmem [shape: f32[8], index: 4, kind: input, shape index: {}]
  %s5 = inlined_call_operand.<no memory space> [shape: f32[1], index: 5, kind: input, shape index: {}]
  %s6 = inlined_call_operand.vmem [shape: f32[8,2,8], index: 6, kind: output, shape index: {}]
  %s7 = sld [smem:[#allocation0]]
  $region50: #{cnn_forward.1} parent=0
    _
  %s9 = ssub.s32 1, %s7
  %s10 = scalar_select 0, %s9, %s7
  %11 = sst [smem:[#allocation2]] %s5
  $region1: #{cnn_forward.1} parent=0
    #allocation3 [shape = 'u8[512]{0}', space=smem, size = 0x200, scoped, tag = 'input window, operand 1, single buffered']
    #allocation4 [shape = 's32[1]{0}', space=sflag, size = 0x4, scoped, tag = 'scoped memory for cnn_forward.1']
    #allocation5 [shape = 'u8[512]{0}', space=smem, size = 0x200, scoped, tag = 'input window, operand 2, single buffered']
    #allocation6 [shape = 's32[1]{0}', space=sflag, size = 0x4, scoped, tag = 'scoped memory for cnn_forward.1']
    #allocation7 [shape = 'u8[512]{0}', space=smem, size = 0x200, scoped, tag = 'input window, operand 3, single buffered']
    #allocation8 [shape = 'u8[512]{0}', space=smem, size = 0x200, scoped, tag = 'input window, operand 4, single buffered']
    #allocation9 [shape = 's32[1]{0}', space=sflag, size = 0x4, scoped, tag = 'scoped memory for cnn_forward.1']
    %12 = vsyncpa [#allocation4], 0
    %13 = vsyncpa [#allocation6], 0
    %14 = vsyncpa [#allocation9], 0
    // Predicated region
    $region2: #{cnn_forward.1} parent=1 // pred_check
      _
    $region3: #{cnn_forward.1} parent=1 // pred_check_branch
      %16 = sbr.rel (0) target = $region5
    $region4: #{cnn_forward.1} parent=1 // pred_region
      _
    $region5: #{cnn_forward.1} parent=1 // pred_fallthru
      _
    // Predicated region
    $region6: #{cnn_forward.1} parent=1 // pred_check
      _
    $region7: #{cnn_forward.1} parent=1 // pred_check_branch
      %18 = sbr.rel (0) target = $region9
    $region8: #{cnn_forward.1} parent=1 // pred_region
      %20 = vsyncadd [#allocation4], 0
      %s22 = sshll.u32 %s1, 4
      %s23 = int_to_ptr.vmem [resolvable:$true] %s22
      %25 = dma.vmem_to_smem %s23, 16, [#allocation3], [#allocation4]
    $region9: #{cnn_forward.1} parent=1 // pred_fallthru
      _
    // Predicated region
    $region10: #{cnn_forward.1} parent=1 // pred_check
      _
    $region11: #{cnn_forward.1} parent=1 // pred_check_branch
      %27 = sbr.rel (0) target = $region13
    $region12: #{cnn_forward.1} parent=1 // pred_region
      %29 = vsyncadd [#allocation6], 0
      %s31 = sshll.u32 %s2, 4
      %s32 = int_to_ptr.vmem [resolvable:$true] %s31
      %34 = dma.vmem_to_smem %s32, 16, [#allocation5], [#allocation6]
    $region13: #{cnn_forward.1} parent=1 // pred_fallthru
      _
    // Predicated region
    $region14: #{cnn_forward.1} parent=1 // pred_check
      _
    $region15: #{cnn_forward.1} parent=1 // pred_check_branch
      %36 = sbr.rel (0) target = $region17
    $region16: #{cnn_forward.1} parent=1 // pred_region
      %38 = vsyncadd [#allocation6], 0
      %s40 = sshll.u32 %s3, 4
      %s41 = int_to_ptr.vmem [resolvable:$true] %s40
      %43 = dma.vmem_to_smem %s41, 16, [#allocation7], [#allocation6]
    $region17: #{cnn_forward.1} parent=1 // pred_fallthru
      _
    // Predicated region
    $region18: #{cnn_forward.1} parent=1 // pred_check
      _
    $region19: #{cnn_forward.1} parent=1 // pred_check_branch
      %45 = sbr.rel (0) target = $region21
    $region20: #{cnn_forward.1} parent=1 // pred_region
      %47 = vsyncadd [#allocation9], 0
      %s49 = sshll.u32 %s4, 4
      %s50 = int_to_ptr.vmem [resolvable:$true] %s49
      %52 = dma.vmem_to_smem %s50, 16, [#allocation8], [#allocation9]
    $region21: #{cnn_forward.1} parent=1 // pred_fallthru
      _
    // Predicated region
    $region22: #{cnn_forward.1} parent=1 // pred_check
      _
    $region23: #{cnn_forward.1} parent=1 // pred_check_branch
      %54 = sbr.rel (0) target = $region25
    $region24: #{cnn_forward.1} parent=1 // pred_region
      _
    $region25: #{cnn_forward.1} parent=1 // pred_fallthru
      _
    // Predicated region
    $region26: #{cnn_forward.1} parent=1 // pred_check
      _
    $region27: #{cnn_forward.1} parent=1 // pred_check_branch
      %56 = sbr.rel (0) target = $region29
    $region28: #{cnn_forward.1} parent=1 // pred_region
      %58 = dma.done [#allocation4], 16
    $region29: #{cnn_forward.1} parent=1 // pred_fallthru
      _
    // Predicated region
    $region30: #{cnn_forward.1} parent=1 // pred_check
      _
    $region31: #{cnn_forward.1} parent=1 // pred_check_branch
      %60 = sbr.rel (0) target = $region33
    $region32: #{cnn_forward.1} parent=1 // pred_region
      %62 = dma.done [#allocation6], 16
    $region33: #{cnn_forward.1} parent=1 // pred_fallthru
      _
    // Predicated region
    $region34: #{cnn_forward.1} parent=1 // pred_check
      _
    $region35: #{cnn_forward.1} parent=1 // pred_check_branch
      %64 = sbr.rel (0) target = $region37
    $region36: #{cnn_forward.1} parent=1 // pred_region
      %66 = dma.done [#allocation6], 16
    $region37: #{cnn_forward.1} parent=1 // pred_fallthru
      _
    // Predicated region
    $region38: #{cnn_forward.1} parent=1 // pred_check
      _
    $region39: #{cnn_forward.1} parent=1 // pred_check_branch
      %68 = sbr.rel (0) target = $region41
    $region40: #{cnn_forward.1} parent=1 // pred_region
      %70 = dma.done [#allocation9], 16
    $region41: #{cnn_forward.1} parent=1 // pred_fallthru
      _
    %71 = sfence
    %s72 = sld [smem:[#allocation2]]
    %v73 = vld [vmem:[%s0] sm:$0x3]
    %v74 = vld [vmem:[%s0 + $0x2] sm:$0x3]
    %v75 = vld [vmem:[%s0 + $0x4] sm:$0x3]
    %v76 = vld [vmem:[%s0 + $0x6] sm:$0x3]
    %s77 = scalar_lea.vmem %s0, 8
    %v78 = vld [vmem:[%s77] sm:$0x3]
    %v79 = vld [vmem:[%s77 + $0x2] sm:$0x3]
    %v80 = vld [vmem:[%s77 + $0x4] sm:$0x3]
    %v81 = vld [vmem:[%s77 + $0x6] sm:$0x3]
    %s82 = sld [smem:[#allocation3]]
    %v83 = vstv %s82
    %v84 = vmul.f32 %v83, %v73
    %v85 = vadd.f32 %v84, 0.0
    %s86 = sld [smem:[#allocation3 + $0xc]]
    %v87 = vstv %s86
    %v88 = vmul.f32 %v87, %v73
    %v89 = vadd.f32 %v88, 0.0
    %s90 = sld [smem:[#allocation3 + $0x18]]
    %v91 = vstv %s90
    %v92 = vmul.f32 %v91, %v73
    %v93 = vadd.f32 %v92, 0.0
    %s94 = sld [smem:[#allocation3 + $0x24]]
    %v95 = vstv %s94
    %v96 = vmul.f32 %v95, %v73
    %v97 = vadd.f32 %v96, 0.0
    %s98 = sld [smem:[#allocation3 + $0x30]]
    %v99 = vstv %s98
    %v100 = vmul.f32 %v99, %v73
    %v101 = vadd.f32 %v100, 0.0
    %s102 = sld [smem:[#allocation3 + $0x3c]]
    %v103 = vstv %s102
    %v104 = vmul.f32 %v103, %v73
    %v105 = vadd.f32 %v104, 0.0
    %s106 = sld [smem:[#allocation3 + $0x48]]
    %v107 = vstv %s106
    %v108 = vmul.f32 %v107, %v73
    %v109 = vadd.f32 %v108, 0.0
    %s110 = sld [smem:[#allocation3 + $0x54]]
    %v111 = vstv %s110
    %v112 = vmul.f32 %v111, %v73
    %v113 = vadd.f32 %v112, 0.0
    %s114 = sld [smem:[#allocation3 + $0x3]]
    %v115 = vstv %s114
    %v116 = vmul.f32 %v115, %v74
    %v117 = vadd.f32 %v85, %v116
    %s118 = sld [smem:[#allocation3 + $0xf]]
    %v119 = vstv %s118
    %v120 = vmul.f32 %v119, %v74
    %v121 = vadd.f32 %v89, %v120
    %s122 = sld [smem:[#allocation3 + $0x1b]]
    %v123 = vstv %s122
    %v124 = vmul.f32 %v123, %v74
    %v125 = vadd.f32 %v93, %v124
    %s126 = sld [smem:[#allocation3 + $0x27]]
    %v127 = vstv %s126
    %v128 = vmul.f32 %v127, %v74
    %v129 = vadd.f32 %v97, %v128
    %s130 = sld [smem:[#allocation3 + $0x33]]
    %v131 = vstv %s130
    %v132 = vmul.f32 %v131, %v74
    %v133 = vadd.f32 %v101, %v132
    %s134 = sld [smem:[#allocation3 + $0x3f]]
    %v135 = vstv %s134
    %v136 = vmul.f32 %v135, %v74
    %v137 = vadd.f32 %v105, %v136
    %s138 = sld [smem:[#allocation3 + $0x4b]]
    %v139 = vstv %s138
    %v140 = vmul.f32 %v139, %v74
    %v141 = vadd.f32 %v109, %v140
    %s142 = sld [smem:[#allocation3 + $0x57]]
    %v143 = vstv %s142
    %v144 = vmul.f32 %v143, %v74
    %v145 = vadd.f32 %v113, %v144
    %s146 = sld [smem:[#allocation3 + $0x6]]
    %v147 = vstv %s146
    %v148 = vmul.f32 %v147, %v75
    %v149 = vadd.f32 %v117, %v148
    %s150 = sld [smem:[#allocation3 + $0x12]]
    %v151 = vstv %s150
    %v152 = vmul.f32 %v151, %v75
    %v153 = vadd.f32 %v121, %v152
    %s154 = sld [smem:[#allocation3 + $0x1e]]
    %v155 = vstv %s154
    %v156 = vmul.f32 %v155, %v75
    %v157 = vadd.f32 %v125, %v156
    %s158 = sld [smem:[#allocation3 + $0x2a]]
    %v159 = vstv %s158
    %v160 = vmul.f32 %v159, %v75
    %v161 = vadd.f32 %v129, %v160
    %s162 = sld [smem:[#allocation3 + $0x36]]
    %v163 = vstv %s162
    %v164 = vmul.f32 %v163, %v75
    %v165 = vadd.f32 %v133, %v164
    %s166 = sld [smem:[#allocation3 + $0x42]]
    %v167 = vstv %s166
    %v168 = vmul.f32 %v167, %v75
    %v169 = vadd.f32 %v137, %v168
    %s170 = sld [smem:[#allocation3 + $0x4e]]
    %v171 = vstv %s170
    %v172 = vmul.f32 %v171, %v75
    %v173 = vadd.f32 %v141, %v172
    %s174 = sld [smem:[#allocation3 + $0x5a]]
    %v175 = vstv %s174
    %v176 = vmul.f32 %v175, %v75
    %v177 = vadd.f32 %v145, %v176
    %s178 = sld [smem:[#allocation3 + $0x9]]
    %v179 = vstv %s178
    %v180 = vmul.f32 %v179, %v76
    %v181 = vadd.f32 %v149, %v180
    %s182 = sld [smem:[#allocation3 + $0x15]]
    %v183 = vstv %s182
    %v184 = vmul.f32 %v183, %v76
    %v185 = vadd.f32 %v153, %v184
    %s186 = sld [smem:[#allocation3 + $0x21]]
    %v187 = vstv %s186
    %v188 = vmul.f32 %v187, %v76
    %v189 = vadd.f32 %v157, %v188
    %s190 = sld [smem:[#allocation3 + $0x2d]]
    %v191 = vstv %s190
    %v192 = vmul.f32 %v191, %v76
    %v193 = vadd.f32 %v161, %v192
    %s194 = sld [smem:[#allocation3 + $0x39]]
    %v195 = vstv %s194
    %v196 = vmul.f32 %v195, %v76
    %v197 = vadd.f32 %v165, %v196
    %s198 = sld [smem:[#allocation3 + $0x45]]
    %v199 = vstv %s198
    %v200 = vmul.f32 %v199, %v76
    %v201 = vadd.f32 %v169, %v200
    %s202 = sld [smem:[#allocation3 + $0x51]]
    %v203 = vstv %s202
    %v204 = vmul.f32 %v203, %v76
    %v205 = vadd.f32 %v173, %v204
    %s206 = sld [smem:[#allocation3 + $0x5d]]
    %v207 = vstv %s206
    %v208 = vmul.f32 %v207, %v76
    %v209 = vadd.f32 %v177, %v208
    %s210 = sld [smem:[#allocation3 + $0x1]]
    %v211 = vstv %s210
    %v212 = vmul.f32 %v211, %v78
    %v213 = vadd.f32 %v181, %v212
    %s214 = sld [smem:[#allocation3 + $0xd]]
    %v215 = vstv %s214
    %v216 = vmul.f32 %v215, %v78
    %v217 = vadd.f32 %v185, %v216
    %s218 = sld [smem:[#allocation3 + $0x19]]
    %v219 = vstv %s218
    %v220 = vmul.f32 %v219, %v78
    %v221 = vadd.f32 %v189, %v220
    %s222 = sld [smem:[#allocation3 + $0x25]]
    %v223 = vstv %s222
    %v224 = vmul.f32 %v223, %v78
    %v225 = vadd.f32 %v193, %v224
    %s226 = sld [smem:[#allocation3 + $0x31]]
    %v227 = vstv %s226
    %v228 = vmul.f32 %v227, %v78
    %v229 = vadd.f32 %v197, %v228
    %s230 = sld [smem:[#allocation3 + $0x3d]]
    %v231 = vstv %s230
    %v232 = vmul.f32 %v231, %v78
    %v233 = vadd.f32 %v201, %v232
    %s234 = sld [smem:[#allocation3 + $0x49]]
    %v235 = vstv %s234
    %v236 = vmul.f32 %v235, %v78
    %v237 = vadd.f32 %v205, %v236
    %s238 = sld [smem:[#allocation3 + $0x55]]
    %v239 = vstv %s238
    %v240 = vmul.f32 %v239, %v78
    %v241 = vadd.f32 %v209, %v240
    %s242 = sld [smem:[#allocation3 + $0x4]]
    %v243 = vstv %s242
    %v244 = vmul.f32 %v243, %v79
    %v245 = vadd.f32 %v213, %v244
    %s246 = sld [smem:[#allocation3 + $0x10]]
    %v247 = vstv %s246
    %v248 = vmul.f32 %v247, %v79
    %v249 = vadd.f32 %v217, %v248
    %s250 = sld [smem:[#allocation3 + $0x1c]]
    %v251 = vstv %s250
    %v252 = vmul.f32 %v251, %v79
    %v253 = vadd.f32 %v221, %v252
    %s254 = sld [smem:[#allocation3 + $0x28]]
    %v255 = vstv %s254
    %v256 = vmul.f32 %v255, %v79
    %v257 = vadd.f32 %v225, %v256
    %s258 = sld [smem:[#allocation3 + $0x34]]
    %v259 = vstv %s258
    %v260 = vmul.f32 %v259, %v79
    %v261 = vadd.f32 %v229, %v260
    %s262 = sld [smem:[#allocation3 + $0x40]]
    %v263 = vstv %s262
    %v264 = vmul.f32 %v263, %v79
    %v265 = vadd.f32 %v233, %v264
    %s266 = sld [smem:[#allocation3 + $0x4c]]
    %v267 = vstv %s266
    %v268 = vmul.f32 %v267, %v79
    %v269 = vadd.f32 %v237, %v268
    %s270 = sld [smem:[#allocation3 + $0x58]]
    %v271 = vstv %s270
    %v272 = vmul.f32 %v271, %v79
    %v273 = vadd.f32 %v241, %v272
    %s274 = sld [smem:[#allocation3 + $0x7]]
    %v275 = vstv %s274
    %v276 = vmul.f32 %v275, %v80
    %v277 = vadd.f32 %v245, %v276
    %s278 = sld [smem:[#allocation3 + $0x13]]
    %v279 = vstv %s278
    %v280 = vmul.f32 %v279, %v80
    %v281 = vadd.f32 %v249, %v280
    %s282 = sld [smem:[#allocation3 + $0x1f]]
    %v283 = vstv %s282
    %v284 = vmul.f32 %v283, %v80
    %v285 = vadd.f32 %v253, %v284
    %s286 = sld [smem:[#allocation3 + $0x2b]]
    %v287 = vstv %s286
    %v288 = vmul.f32 %v287, %v80
    %v289 = vadd.f32 %v257, %v288
    %s290 = sld [smem:[#allocation3 + $0x37]]
    %v291 = vstv %s290
    %v292 = vmul.f32 %v291, %v80
    %v293 = vadd.f32 %v261, %v292
    %s294 = sld [smem:[#allocation3 + $0x43]]
    %v295 = vstv %s294
    %v296 = vmul.f32 %v295, %v80
    %v297 = vadd.f32 %v265, %v296
    %s298 = sld [smem:[#allocation3 + $0x4f]]
    %v299 = vstv %s298
    %v300 = vmul.f32 %v299, %v80
    %v301 = vadd.f32 %v269, %v300
    %s302 = sld [smem:[#allocation3 + $0x5b]]
    %v303 = vstv %s302
    %v304 = vmul.f32 %v303, %v80
    %v305 = vadd.f32 %v273, %v304
    %s306 = sld [smem:[#allocation3 + $0xa]]
    %v307 = vstv %s306
    %v308 = vmul.f32 %v307, %v81
    %v309 = vadd.f32 %v277, %v308
    %s310 = sld [smem:[#allocation3 + $0x16]]
    %v311 = vstv %s310
    %v312 = vmul.f32 %v311, %v81
    %v313 = vadd.f32 %v281, %v312
    %s314 = sld [smem:[#allocation3 + $0x22]]
    %v315 = vstv %s314
    %v316 = vmul.f32 %v315, %v81
    %v317 = vadd.f32 %v285, %v316
    %s318 = sld [smem:[#allocation3 + $0x2e]]
    %v319 = vstv %s318
    %v320 = vmul.f32 %v319, %v81
    %v321 = vadd.f32 %v289, %v320
    %s322 = sld [smem:[#allocation3 + $0x3a]]
    %v323 = vstv %s322
    %v324 = vmul.f32 %v323, %v81
    %v325 = vadd.f32 %v293, %v324
    %s326 = sld [smem:[#allocation3 + $0x46]]
    %v327 = vstv %s326
    %v328 = vmul.f32 %v327, %v81
    %v329 = vadd.f32 %v297, %v328
    %s330 = sld [smem:[#allocation3 + $0x52]]
    %v331 = vstv %s330
    %v332 = vmul.f32 %v331, %v81
    %v333 = vadd.f32 %v301, %v332
    %s334 = sld [smem:[#allocation3 + $0x5e]]
    %v335 = vstv %s334
    %v336 = vmul.f32 %v335, %v81
    %v337 = vadd.f32 %v305, %v336
    %s338 = sld [smem:[#allocation3 + $0x2]]
    %v339 = vstv %s338
    %v340 = vmul.f32 %v339, %v73
    %342 = vrot.lane.b32.xlu0 %v340, 127
    %v343 = vpop.permute.xlu0 %342
    %v345 = vadd.f32 %v309, %v343
    %s346 = sld [smem:[#allocation3 + $0xe]]
    %v347 = vstv %s346
    %v348 = vmul.f32 %v347, %v73
    %350 = vrot.lane.b32.xlu0 %v348, 127
    %v351 = vpop.permute.xlu0 %350
    %v353 = vadd.f32 %v313, %v351
    %s354 = sld [smem:[#allocation3 + $0x1a]]
    %v355 = vstv %s354
    %v356 = vmul.f32 %v355, %v73
    %358 = vrot.lane.b32.xlu0 %v356, 127
    %v359 = vpop.permute.xlu0 %358
    %v361 = vadd.f32 %v317, %v359
    %s362 = sld [smem:[#allocation3 + $0x26]]
    %v363 = vstv %s362
    %v364 = vmul.f32 %v363, %v73
    %366 = vrot.lane.b32.xlu0 %v364, 127
    %v367 = vpop.permute.xlu0 %366
    %v369 = vadd.f32 %v321, %v367
    %s370 = sld [smem:[#allocation3 + $0x32]]
    %v371 = vstv %s370
    %v372 = vmul.f32 %v371, %v73
    %374 = vrot.lane.b32.xlu0 %v372, 127
    %v375 = vpop.permute.xlu0 %374
    %v377 = vadd.f32 %v325, %v375
    %s378 = sld [smem:[#allocation3 + $0x3e]]
    %v379 = vstv %s378
    %v380 = vmul.f32 %v379, %v73
    %382 = vrot.lane.b32.xlu0 %v380, 127
    %v383 = vpop.permute.xlu0 %382
    %v385 = vadd.f32 %v329, %v383
    %s386 = sld [smem:[#allocation3 + $0x4a]]
    %v387 = vstv %s386
    %v388 = vmul.f32 %v387, %v73
    %390 = vrot.lane.b32.xlu0 %v388, 127
    %v391 = vpop.permute.xlu0 %390
    %v393 = vadd.f32 %v333, %v391
    %s394 = sld [smem:[#allocation3 + $0x56]]
    %v395 = vstv %s394
    %v396 = vmul.f32 %v395, %v73
    %398 = vrot.lane.b32.xlu0 %v396, 127
    %v399 = vpop.permute.xlu0 %398
    %v401 = vadd.f32 %v337, %v399
    %s402 = sld [smem:[#allocation3 + $0x5]]
    %v403 = vstv %s402
    %v404 = vmul.f32 %v403, %v74
    %406 = vrot.lane.b32.xlu0 %v404, 127
    %v407 = vpop.permute.xlu0 %406
    %v409 = vadd.f32 %v345, %v407
    %s410 = sld [smem:[#allocation3 + $0x11]]
    %v411 = vstv %s410
    %v412 = vmul.f32 %v411, %v74
    %414 = vrot.lane.b32.xlu0 %v412, 127
    %v415 = vpop.permute.xlu0 %414
    %v417 = vadd.f32 %v353, %v415
    %s418 = sld [smem:[#allocation3 + $0x1d]]
    %v419 = vstv %s418
    %v420 = vmul.f32 %v419, %v74
    %422 = vrot.lane.b32.xlu0 %v420, 127
    %v423 = vpop.permute.xlu0 %422
    %v425 = vadd.f32 %v361, %v423
    %s426 = sld [smem:[#allocation3 + $0x29]]
    %v427 = vstv %s426
    %v428 = vmul.f32 %v427, %v74
    %430 = vrot.lane.b32.xlu0 %v428, 127
    %v431 = vpop.permute.xlu0 %430
    %v433 = vadd.f32 %v369, %v431
    %s434 = sld [smem:[#allocation3 + $0x35]]
    %v435 = vstv %s434
    %v436 = vmul.f32 %v435, %v74
    %438 = vrot.lane.b32.xlu0 %v436, 127
    %v439 = vpop.permute.xlu0 %438
    %v441 = vadd.f32 %v377, %v439
    %s442 = sld [smem:[#allocation3 + $0x41]]
    %v443 = vstv %s442
    %v444 = vmul.f32 %v443, %v74
    %446 = vrot.lane.b32.xlu0 %v444, 127
    %v447 = vpop.permute.xlu0 %446
    %v449 = vadd.f32 %v385, %v447
    %s450 = sld [smem:[#allocation3 + $0x4d]]
    %v451 = vstv %s450
    %v452 = vmul.f32 %v451, %v74
    %454 = vrot.lane.b32.xlu0 %v452, 127
    %v455 = vpop.permute.xlu0 %454
    %v457 = vadd.f32 %v393, %v455
    %s458 = sld [smem:[#allocation3 + $0x59]]
    %v459 = vstv %s458
    %v460 = vmul.f32 %v459, %v74
    %462 = vrot.lane.b32.xlu0 %v460, 127
    %v463 = vpop.permute.xlu0 %462
    %v465 = vadd.f32 %v401, %v463
    %s466 = sld [smem:[#allocation3 + $0x8]]
    %v467 = vstv %s466
    %v468 = vmul.f32 %v467, %v75
    %470 = vrot.lane.b32.xlu0 %v468, 127
    %v471 = vpop.permute.xlu0 %470
    %v473 = vadd.f32 %v409, %v471
    %s474 = sld [smem:[#allocation3 + $0x14]]
    %v475 = vstv %s474
    %v476 = vmul.f32 %v475, %v75
    %478 = vrot.lane.b32.xlu0 %v476, 127
    %v479 = vpop.permute.xlu0 %478
    %v481 = vadd.f32 %v417, %v479
    %s482 = sld [smem:[#allocation3 + $0x20]]
    %v483 = vstv %s482
    %v484 = vmul.f32 %v483, %v75
    %486 = vrot.lane.b32.xlu0 %v484, 127
    %v487 = vpop.permute.xlu0 %486
    %v489 = vadd.f32 %v425, %v487
    %s490 = sld [smem:[#allocation3 + $0x2c]]
    %v491 = vstv %s490
    %v492 = vmul.f32 %v491, %v75
    %494 = vrot.lane.b32.xlu0 %v492, 127
    %v495 = vpop.permute.xlu0 %494
    %v497 = vadd.f32 %v433, %v495
    %s498 = sld [smem:[#allocation3 + $0x38]]
    %v499 = vstv %s498
    %v500 = vmul.f32 %v499, %v75
    %502 = vrot.lane.b32.xlu0 %v500, 127
    %v503 = vpop.permute.xlu0 %502
    %v505 = vadd.f32 %v441, %v503
    %s506 = sld [smem:[#allocation3 + $0x44]]
    %v507 = vstv %s506
    %v508 = vmul.f32 %v507, %v75
    %510 = vrot.lane.b32.xlu0 %v508, 127
    %v511 = vpop.permute.xlu0 %510
    %v513 = vadd.f32 %v449, %v511
    %s514 = sld [smem:[#allocation3 + $0x50]]
    %v515 = vstv %s514
    %v516 = vmul.f32 %v515, %v75
    %518 = vrot.lane.b32.xlu0 %v516, 127
    %v519 = vpop.permute.xlu0 %518
    %v521 = vadd.f32 %v457, %v519
    %s522 = sld [smem:[#allocation3 + $0x5c]]
    %v523 = vstv %s522
    %v524 = vmul.f32 %v523, %v75
    %526 = vrot.lane.b32.xlu0 %v524, 127
    %v527 = vpop.permute.xlu0 %526
    %v529 = vadd.f32 %v465, %v527
    %s530 = sld [smem:[#allocation3 + $0xb]]
    %v531 = vstv %s530
    %v532 = vmul.f32 %v531, %v76
    %534 = vrot.lane.b32.xlu0 %v532, 127
    %v535 = vpop.permute.xlu0 %534
    %v537 = vadd.f32 %v473, %v535
    %s538 = sld [smem:[#allocation3 + $0x17]]
    %v539 = vstv %s538
    %v540 = vmul.f32 %v539, %v76
    %542 = vrot.lane.b32.xlu0 %v540, 127
    %v543 = vpop.permute.xlu0 %542
    %v545 = vadd.f32 %v481, %v543
    %s546 = sld [smem:[#allocation3 + $0x23]]
    %v547 = vstv %s546
    %v548 = vmul.f32 %v547, %v76
    %550 = vrot.lane.b32.xlu0 %v548, 127
    %v551 = vpop.permute.xlu0 %550
    %v553 = vadd.f32 %v489, %v551
    %s554 = sld [smem:[#allocation3 + $0x2f]]
    %v555 = vstv %s554
    %v556 = vmul.f32 %v555, %v76
    %558 = vrot.lane.b32.xlu0 %v556, 127
    %v559 = vpop.permute.xlu0 %558
    %v561 = vadd.f32 %v497, %v559
    %s562 = sld [smem:[#allocation3 + $0x3b]]
    %v563 = vstv %s562
    %v564 = vmul.f32 %v563, %v76
    %566 = vrot.lane.b32.xlu0 %v564, 127
    %v567 = vpop.permute.xlu0 %566
    %v569 = vadd.f32 %v505, %v567
    %s570 = sld [smem:[#allocation3 + $0x47]]
    %v571 = vstv %s570
    %v572 = vmul.f32 %v571, %v76
    %574 = vrot.lane.b32.xlu0 %v572, 127
    %v575 = vpop.permute.xlu0 %574
    %v577 = vadd.f32 %v513, %v575
    %s578 = sld [smem:[#allocation3 + $0x53]]
    %v579 = vstv %s578
    %v580 = vmul.f32 %v579, %v76
    %582 = vrot.lane.b32.xlu0 %v580, 127
    %v583 = vpop.permute.xlu0 %582
    %v585 = vadd.f32 %v521, %v583
    %s586 = sld [smem:[#allocation3 + $0x5f]]
    %v587 = vstv %s586
    %v588 = vmul.f32 %v587, %v76
    %590 = vrot.lane.b32.xlu0 %v588, 127
    %v591 = vpop.permute.xlu0 %590
    %v593 = vadd.f32 %v529, %v591
    %v594 = vmul.f32 %v83, %v78
    %v595 = vadd.f32 %v594, 0.0
    %v596 = vmul.f32 %v87, %v78
    %v597 = vadd.f32 %v596, 0.0
    %v598 = vmul.f32 %v91, %v78
    %v599 = vadd.f32 %v598, 0.0
    %v600 = vmul.f32 %v95, %v78
    %v601 = vadd.f32 %v600, 0.0
    %v602 = vmul.f32 %v99, %v78
    %v603 = vadd.f32 %v602, 0.0
    %v604 = vmul.f32 %v103, %v78
    %v605 = vadd.f32 %v604, 0.0
    %v606 = vmul.f32 %v107, %v78
    %v607 = vadd.f32 %v606, 0.0
    %v608 = vmul.f32 %v111, %v78
    %v609 = vadd.f32 %v608, 0.0
    %v610 = vmul.f32 %v115, %v79
    %v611 = vadd.f32 %v595, %v610
    %v612 = vmul.f32 %v119, %v79
    %v613 = vadd.f32 %v597, %v612
    %v614 = vmul.f32 %v123, %v79
    %v615 = vadd.f32 %v599, %v614
    %v616 = vmul.f32 %v127, %v79
    %v617 = vadd.f32 %v601, %v616
    %v618 = vmul.f32 %v131, %v79
    %v619 = vadd.f32 %v603, %v618
    %v620 = vmul.f32 %v135, %v79
    %v621 = vadd.f32 %v605, %v620
    %v622 = vmul.f32 %v139, %v79
    %v623 = vadd.f32 %v607, %v622
    %v624 = vmul.f32 %v143, %v79
    %v625 = vadd.f32 %v609, %v624
    %v626 = vmul.f32 %v147, %v80
    %v627 = vadd.f32 %v611, %v626
    %v628 = vmul.f32 %v151, %v80
    %v629 = vadd.f32 %v613, %v628
    %v630 = vmul.f32 %v155, %v80
    %v631 = vadd.f32 %v615, %v630
    %v632 = vmul.f32 %v159, %v80
    %v633 = vadd.f32 %v617, %v632
    %v634 = vmul.f32 %v163, %v80
    %v635 = vadd.f32 %v619, %v634
    %v636 = vmul.f32 %v167, %v80
    %v637 = vadd.f32 %v621, %v636
    %v638 = vmul.f32 %v171, %v80
    %v639 = vadd.f32 %v623, %v638
    %v640 = vmul.f32 %v175, %v80
    %v641 = vadd.f32 %v625, %v640
    %v642 = vmul.f32 %v179, %v81
    %v643 = vadd.f32 %v627, %v642
    %v644 = vmul.f32 %v183, %v81
    %v645 = vadd.f32 %v629, %v644
    %v646 = vmul.f32 %v187, %v81
    %v647 = vadd.f32 %v631, %v646
    %v648 = vmul.f32 %v191, %v81
    %v649 = vadd.f32 %v633, %v648
    %v650 = vmul.f32 %v195, %v81
    %v651 = vadd.f32 %v635, %v650
    %v652 = vmul.f32 %v199, %v81
    %v653 = vadd.f32 %v637, %v652
    %v654 = vmul.f32 %v203, %v81
    %v655 = vadd.f32 %v639, %v654
    %v656 = vmul.f32 %v207, %v81
    %v657 = vadd.f32 %v641, %v656
    %v658 = vmul.f32 %v211, %v73
    %660 = vrot.lane.b32.xlu0 %v658, 127
    %v661 = vpop.permute.xlu0 %660
    %v663 = vadd.f32 %v643, %v661
    %v664 = vmul.f32 %v215, %v73
    %666 = vrot.lane.b32.xlu0 %v664, 127
    %v667 = vpop.permute.xlu0 %666
    %v669 = vadd.f32 %v645, %v667
    %v670 = vmul.f32 %v219, %v73
    %672 = vrot.lane.b32.xlu0 %v670, 127
    %v673 = vpop.permute.xlu0 %672
    %v675 = vadd.f32 %v647, %v673
    %v676 = vmul.f32 %v223, %v73
    %678 = vrot.lane.b32.xlu0 %v676, 127
    %v679 = vpop.permute.xlu0 %678
    %v681 = vadd.f32 %v649, %v679
    %v682 = vmul.f32 %v227, %v73
    %684 = vrot.lane.b32.xlu0 %v682, 127
    %v685 = vpop.permute.xlu0 %684
    %v687 = vadd.f32 %v651, %v685
    %v688 = vmul.f32 %v231, %v73
    %690 = vrot.lane.b32.xlu0 %v688, 127
    %v691 = vpop.permute.xlu0 %690
    %v693 = vadd.f32 %v653, %v691
    %v694 = vmul.f32 %v235, %v73
    %696 = vrot.lane.b32.xlu0 %v694, 127
    %v697 = vpop.permute.xlu0 %696
    %v699 = vadd.f32 %v655, %v697
    %v700 = vmul.f32 %v239, %v73
    %702 = vrot.lane.b32.xlu0 %v700, 127
    %v703 = vpop.permute.xlu0 %702
    %v705 = vadd.f32 %v657, %v703
    %v706 = vmul.f32 %v243, %v74
    %708 = vrot.lane.b32.xlu0 %v706, 127
    %v709 = vpop.permute.xlu0 %708
    %v711 = vadd.f32 %v663, %v709
    %v712 = vmul.f32 %v247, %v74
    %714 = vrot.lane.b32.xlu0 %v712, 127
    %v715 = vpop.permute.xlu0 %714
    %v717 = vadd.f32 %v669, %v715
    %v718 = vmul.f32 %v251, %v74
    %720 = vrot.lane.b32.xlu0 %v718, 127
    %v721 = vpop.permute.xlu0 %720
    %v723 = vadd.f32 %v675, %v721
    %v724 = vmul.f32 %v255, %v74
    %726 = vrot.lane.b32.xlu0 %v724, 127
    %v727 = vpop.permute.xlu0 %726
    %v729 = vadd.f32 %v681, %v727
    %v730 = vmul.f32 %v259, %v74
    %732 = vrot.lane.b32.xlu0 %v730, 127
    %v733 = vpop.permute.xlu0 %732
    %v735 = vadd.f32 %v687, %v733
    %v736 = vmul.f32 %v263, %v74
    %738 = vrot.lane.b32.xlu0 %v736, 127
    %v739 = vpop.permute.xlu0 %738
    %v741 = vadd.f32 %v693, %v739
    %v742 = vmul.f32 %v267, %v74
    %744 = vrot.lane.b32.xlu0 %v742, 127
    %v745 = vpop.permute.xlu0 %744
    %v747 = vadd.f32 %v699, %v745
    %v748 = vmul.f32 %v271, %v74
    %750 = vrot.lane.b32.xlu0 %v748, 127
    %v751 = vpop.permute.xlu0 %750
    %v753 = vadd.f32 %v705, %v751
    %v754 = vmul.f32 %v275, %v75
    %756 = vrot.lane.b32.xlu0 %v754, 127
    %v757 = vpop.permute.xlu0 %756
    %v759 = vadd.f32 %v711, %v757
    %v760 = vmul.f32 %v279, %v75
    %762 = vrot.lane.b32.xlu0 %v760, 127
    %v763 = vpop.permute.xlu0 %762
    %v765 = vadd.f32 %v717, %v763
    %v766 = vmul.f32 %v283, %v75
    %768 = vrot.lane.b32.xlu0 %v766, 127
    %v769 = vpop.permute.xlu0 %768
    %v771 = vadd.f32 %v723, %v769
    %v772 = vmul.f32 %v287, %v75
    %774 = vrot.lane.b32.xlu0 %v772, 127
    %v775 = vpop.permute.xlu0 %774
    %v777 = vadd.f32 %v729, %v775
    %v778 = vmul.f32 %v291, %v75
    %780 = vrot.lane.b32.xlu0 %v778, 127
    %v781 = vpop.permute.xlu0 %780
    %v783 = vadd.f32 %v735, %v781
    %v784 = vmul.f32 %v295, %v75
    %786 = vrot.lane.b32.xlu0 %v784, 127
    %v787 = vpop.permute.xlu0 %786
    %v789 = vadd.f32 %v741, %v787
    %v790 = vmul.f32 %v299, %v75
    %792 = vrot.lane.b32.xlu0 %v790, 127
    %v793 = vpop.permute.xlu0 %792
    %v795 = vadd.f32 %v747, %v793
    %v796 = vmul.f32 %v303, %v75
    %798 = vrot.lane.b32.xlu0 %v796, 127
    %v799 = vpop.permute.xlu0 %798
    %v801 = vadd.f32 %v753, %v799
    %v802 = vmul.f32 %v307, %v76
    %804 = vrot.lane.b32.xlu0 %v802, 127
    %v805 = vpop.permute.xlu0 %804
    %v807 = vadd.f32 %v759, %v805
    %v808 = vmul.f32 %v311, %v76
    %810 = vrot.lane.b32.xlu0 %v808, 127
    %v811 = vpop.permute.xlu0 %810
    %v813 = vadd.f32 %v765, %v811
    %v814 = vmul.f32 %v315, %v76
    %816 = vrot.lane.b32.xlu0 %v814, 127
    %v817 = vpop.permute.xlu0 %816
    %v819 = vadd.f32 %v771, %v817
    %v820 = vmul.f32 %v319, %v76
    %822 = vrot.lane.b32.xlu0 %v820, 127
    %v823 = vpop.permute.xlu0 %822
    %v825 = vadd.f32 %v777, %v823
    %v826 = vmul.f32 %v323, %v76
    %828 = vrot.lane.b32.xlu0 %v826, 127
    %v829 = vpop.permute.xlu0 %828
    %v831 = vadd.f32 %v783, %v829
    %v832 = vmul.f32 %v327, %v76
    %834 = vrot.lane.b32.xlu0 %v832, 127
    %v835 = vpop.permute.xlu0 %834
    %v837 = vadd.f32 %v789, %v835
    %v838 = vmul.f32 %v331, %v76
    %840 = vrot.lane.b32.xlu0 %v838, 127
    %v841 = vpop.permute.xlu0 %840
    %v843 = vadd.f32 %v795, %v841
    %v844 = vmul.f32 %v335, %v76
    %846 = vrot.lane.b32.xlu0 %v844, 127
    %v847 = vpop.permute.xlu0 %846
    %v849 = vadd.f32 %v801, %v847
    %v850 = vmul.f32 %v339, %v78
    %852 = vrot.lane.b32.xlu0 %v850, 127
    %v853 = vpop.permute.xlu0 %852
    %v855 = vadd.f32 %v807, %v853
    %v856 = vmul.f32 %v347, %v78
    %858 = vrot.lane.b32.xlu0 %v856, 127
    %v859 = vpop.permute.xlu0 %858
    %v861 = vadd.f32 %v813, %v859
    %v862 = vmul.f32 %v355, %v78
    %864 = vrot.lane.b32.xlu0 %v862, 127
    %v865 = vpop.permute.xlu0 %864
    %v867 = vadd.f32 %v819, %v865
    %v868 = vmul.f32 %v363, %v78
    %870 = vrot.lane.b32.xlu0 %v868, 127
    %v871 = vpop.permute.xlu0 %870
    %v873 = vadd.f32 %v825, %v871
    %v874 = vmul.f32 %v371, %v78
    %876 = vrot.lane.b32.xlu0 %v874, 127
    %v877 = vpop.permute.xlu0 %876
    %v879 = vadd.f32 %v831, %v877
    %v880 = vmul.f32 %v379, %v78
    %882 = vrot.lane.b32.xlu0 %v880, 127
    %v883 = vpop.permute.xlu0 %882
    %v885 = vadd.f32 %v837, %v883
    %v886 = vmul.f32 %v387, %v78
    %888 = vrot.lane.b32.xlu0 %v886, 127
    %v889 = vpop.permute.xlu0 %888
    %v891 = vadd.f32 %v843, %v889
    %v892 = vmul.f32 %v395, %v78
    %894 = vrot.lane.b32.xlu0 %v892, 127
    %v895 = vpop.permute.xlu0 %894
    %v897 = vadd.f32 %v849, %v895
    %v898 = vmul.f32 %v403, %v79
    %900 = vrot.lane.b32.xlu0 %v898, 127
    %v901 = vpop.permute.xlu0 %900
    %v903 = vadd.f32 %v855, %v901
    %v904 = vmul.f32 %v411, %v79
    %906 = vrot.lane.b32.xlu0 %v904, 127
    %v907 = vpop.permute.xlu0 %906
    %v909 = vadd.f32 %v861, %v907
    %v910 = vmul.f32 %v419, %v79
    %912 = vrot.lane.b32.xlu0 %v910, 127
    %v913 = vpop.permute.xlu0 %912
    %v915 = vadd.f32 %v867, %v913
    %v916 = vmul.f32 %v427, %v79
    %918 = vrot.lane.b32.xlu0 %v916, 127
    %v919 = vpop.permute.xlu0 %918
    %v921 = vadd.f32 %v873, %v919
    %v922 = vmul.f32 %v435, %v79
    %924 = vrot.lane.b32.xlu0 %v922, 127
    %v925 = vpop.permute.xlu0 %924
    %v927 = vadd.f32 %v879, %v925
    %v928 = vmul.f32 %v443, %v79
    %930 = vrot.lane.b32.xlu0 %v928, 127
    %v931 = vpop.permute.xlu0 %930
    %v933 = vadd.f32 %v885, %v931
    %v934 = vmul.f32 %v451, %v79
    %936 = vrot.lane.b32.xlu0 %v934, 127
    %v937 = vpop.permute.xlu0 %936
    %v939 = vadd.f32 %v891, %v937
    %v940 = vmul.f32 %v459, %v79
    %942 = vrot.lane.b32.xlu0 %v940, 127
    %v943 = vpop.permute.xlu0 %942
    %v945 = vadd.f32 %v897, %v943
    %v946 = vmul.f32 %v467, %v80
    %948 = vrot.lane.b32.xlu0 %v946, 127
    %v949 = vpop.permute.xlu0 %948
    %v951 = vadd.f32 %v903, %v949
    %v952 = vmul.f32 %v475, %v80
    %954 = vrot.lane.b32.xlu0 %v952, 127
    %v955 = vpop.permute.xlu0 %954
    %v957 = vadd.f32 %v909, %v955
    %v958 = vmul.f32 %v483, %v80
    %960 = vrot.lane.b32.xlu0 %v958, 127
    %v961 = vpop.permute.xlu0 %960
    %v963 = vadd.f32 %v915, %v961
    %v964 = vmul.f32 %v491, %v80
    %966 = vrot.lane.b32.xlu0 %v964, 127
    %v967 = vpop.permute.xlu0 %966
    %v969 = vadd.f32 %v921, %v967
    %v970 = vmul.f32 %v499, %v80
    %972 = vrot.lane.b32.xlu0 %v970, 127
    %v973 = vpop.permute.xlu0 %972
    %v975 = vadd.f32 %v927, %v973
    %v976 = vmul.f32 %v507, %v80
    %978 = vrot.lane.b32.xlu0 %v976, 127
    %v979 = vpop.permute.xlu0 %978
    %v981 = vadd.f32 %v933, %v979
    %v982 = vmul.f32 %v515, %v80
    %984 = vrot.lane.b32.xlu0 %v982, 127
    %v985 = vpop.permute.xlu0 %984
    %v987 = vadd.f32 %v939, %v985
    %v988 = vmul.f32 %v523, %v80
    %990 = vrot.lane.b32.xlu0 %v988, 127
    %v991 = vpop.permute.xlu0 %990
    %v993 = vadd.f32 %v945, %v991
    %v994 = vmul.f32 %v531, %v81
    %996 = vrot.lane.b32.xlu0 %v994, 127
    %v997 = vpop.permute.xlu0 %996
    %v999 = vadd.f32 %v951, %v997
    %v1000 = vmul.f32 %v539, %v81
    %1002 = vrot.lane.b32.xlu0 %v1000, 127
    %v1003 = vpop.permute.xlu0 %1002
    %v1005 = vadd.f32 %v957, %v1003
    %v1006 = vmul.f32 %v547, %v81
    %1008 = vrot.lane.b32.xlu0 %v1006, 127
    %v1009 = vpop.permute.xlu0 %1008
    %v1011 = vadd.f32 %v963, %v1009
    %v1012 = vmul.f32 %v555, %v81
    %1014 = vrot.lane.b32.xlu0 %v1012, 127
    %v1015 = vpop.permute.xlu0 %1014
    %v1017 = vadd.f32 %v969, %v1015
    %v1018 = vmul.f32 %v563, %v81
    %1020 = vrot.lane.b32.xlu0 %v1018, 127
    %v1021 = vpop.permute.xlu0 %1020
    %v1023 = vadd.f32 %v975, %v1021
    %v1024 = vmul.f32 %v571, %v81
    %1026 = vrot.lane.b32.xlu0 %v1024, 127
    %v1027 = vpop.permute.xlu0 %1026
    %v1029 = vadd.f32 %v981, %v1027
    %v1030 = vmul.f32 %v579, %v81
    %1032 = vrot.lane.b32.xlu0 %v1030, 127
    %v1033 = vpop.permute.xlu0 %1032
    %v1035 = vadd.f32 %v987, %v1033
    %v1036 = vmul.f32 %v587, %v81
    %1038 = vrot.lane.b32.xlu0 %v1036, 127
    %v1039 = vpop.permute.xlu0 %1038
    %v1041 = vadd.f32 %v993, %v1039
    %s1042 = sld [smem:[#allocation5]]
    %v1043 = vstv %s1042
    %v1044 = vadd.f32 %v537, %v1043
    %v1045 = vadd.f32 %v999, %v1043
    %vm1046 = vcmask 58368
    %v1047 = vsel %vm1046, %v1044, 0.0
    %1048 = vadd.xlane.f32.xlu0 %v1047
    %v1049 = vpop.xlane.xlu0 %1048
    %v1050 = vsel %vm1046, %v1045, 0.0
    %1051 = vadd.xlane.f32.xlu0 %v1050
    %v1052 = vpop.xlane.xlu0 %1051
    %v1053 = vmul.f32 %v1044, %v1044
    %v1054 = vsel %vm1046, %v1053, 0.0
    %1055 = vadd.xlane.f32.xlu0 %v1054
    %v1056 = vpop.xlane.xlu0 %1055
    %v1057 = vmul.f32 %v1045, %v1045
    %v1058 = vsel %vm1046, %v1057, 0.0
    %1059 = vadd.xlane.f32.xlu0 %v1058
    %v1060 = vpop.xlane.xlu0 %1059
    %v1061 = vadd.f32 %v1049, %v1052
    %vm1062 = vcmask 1041408
    %v1063 = vsel %vm1062, %v1061, 0.0
    %v1064 = vrot.slane %v1063, 4
    %v1065 = vadd.f32 %v1063, %v1064
    %v1066 = vrot.slane %v1065, 2
    %v1067 = vadd.f32 %v1065, %v1066
    %v1068 = vrot.slane %v1067, 1
    %v1069 = vadd.f32 %v1067, %v1068
    %v1070 = vadd.f32 %v1056, %v1060
    %v1071 = vsel %vm1062, %v1070, 0.0
    %v1072 = vrot.slane %v1071, 4
    %v1073 = vadd.f32 %v1071, %v1072
    %v1074 = vrot.slane %v1073, 2
    %v1075 = vadd.f32 %v1073, %v1074
    %v1076 = vrot.slane %v1075, 1
    %v1077 = vadd.f32 %v1075, %v1076
    %v1078 = vrcp.pop 32.0
    %v1079 = vmul.f32 32.0, %v1078
    %v1080 = vsub.f32 1.0, %v1079
    %v1081 = vmul.f32 %v1078, %v1080
    %v1082 = vadd.f32 %v1078, %v1081
    %vm1083 = vweird.f32 %v1078
    %v1084 = vsel %vm1083, %v1078, %v1082
    %v1085 = vmul.f32 %v1069, %v1084
    %v1086 = vmul.f32 %v1077, %v1084
    %v1087 = vmul.f32 %v1085, %v1085
    %v1088 = vsub.f32 %v1086, %v1087
    %v1089 = vmax.f32 %v1088, 0.0
    %s1090 = sld [smem:[#allocation7]]
    %v1091 = vadd.f32 %v1089, 1e-05
    %v1092 = vrsqrt.pop %v1091
    %v1093 = vmul.f32 %v1092, %v1091
    %v1094 = vmul.f32 %v1093, %v1092
    %v1095 = vmul.f32 0.5, %v1094
    %v1096 = vsub.f32 1.5, %v1095
    %v1097 = vmul.f32 %v1092, %v1096
    %vm1098 = vweird.f32 %v1091
    %vm1099 = vweird.f32 %v1092
    %vm1100 = vmor %vm1098, %vm1099
    %v1101 = vsel %vm1100, %v1092, %v1097
    %v1102 = vstv %s1090
    %v1103 = vmul.f32 %v1102, %v1101
    %s1104 = sld [smem:[#allocation8]]
    %v1105 = vmul.f32 %v1085, %v1103
    %v1106 = vstv %s1104
    %v1107 = vsub.f32 %v1106, %v1105
    %v1108 = vmul.f32 %v1044, %v1103
    %v1109 = vadd.f32 %v1108, %v1107
    %v1110 = vmul.f32 %v1045, %v1103
    %v1111 = vadd.f32 %v1110, %v1107
    %vm1112 = vcmp.ge.f32.partialorder %v1109, 0.0
    %v1113 = vstv %s72
    %v1114 = vmul.f32 %v1113, %v1109
    %v1115 = vsel %vm1112, %v1109, %v1114
    %vm1116 = vcmp.ge.f32.partialorder %v1111, 0.0
    %v1117 = vmul.f32 %v1113, %v1111
    %v1118 = vsel %vm1116, %v1111, %v1117
    %v1119 = vmax.f32 %v1115, %v1118
    %1120 = vst.msk [vmem:[%s6] sm:$0x3] %vm1046, %v1119
    %s1121 = sld [smem:[#allocation5 + $0x1]]
    %v1122 = vstv %s1121
    %v1123 = vadd.f32 %v545, %v1122
    %v1124 = vadd.f32 %v1005, %v1122
    %v1125 = vsel %vm1046, %v1123, 0.0
    %1126 = vadd.xlane.f32.xlu0 %v1125
    %v1127 = vpop.xlane.xlu0 %1126
    %v1128 = vsel %vm1046, %v1124, 0.0
    %1129 = vadd.xlane.f32.xlu0 %v1128
    %v1130 = vpop.xlane.xlu0 %1129
    %v1131 = vmul.f32 %v1123, %v1123
    %v1132 = vsel %vm1046, %v1131, 0.0
    %1133 = vadd.xlane.f32.xlu0 %v1132
    %v1134 = vpop.xlane.xlu0 %1133
    %v1135 = vmul.f32 %v1124, %v1124
    %v1136 = vsel %vm1046, %v1135, 0.0
    %1137 = vadd.xlane.f32.xlu0 %v1136
    %v1138 = vpop.xlane.xlu0 %1137
    %v1139 = vadd.f32 %v1127, %v1130
    %v1140 = vsel %vm1062, %v1139, 0.0
    %v1141 = vrot.slane %v1140, 4
    %v1142 = vadd.f32 %v1140, %v1141
    %v1143 = vrot.slane %v1142, 2
    %v1144 = vadd.f32 %v1142, %v1143
    %v1145 = vrot.slane %v1144, 1
    %v1146 = vadd.f32 %v1144, %v1145
    %v1147 = vadd.f32 %v1134, %v1138
    %v1148 = vsel %vm1062, %v1147, 0.0
    %v1149 = vrot.slane %v1148, 4
    %v1150 = vadd.f32 %v1148, %v1149
    %v1151 = vrot.slane %v1150, 2
    %v1152 = vadd.f32 %v1150, %v1151
    %v1153 = vrot.slane %v1152, 1
    %v1154 = vadd.f32 %v1152, %v1153
    %v1155 = vmul.f32 %v1146, %v1084
    %v1156 = vmul.f32 %v1154, %v1084
    %v1157 = vmul.f32 %v1155, %v1155
    %v1158 = vsub.f32 %v1156, %v1157
    %v1159 = vmax.f32 %v1158, 0.0
    %s1160 = sld [smem:[#allocation7 + $0x1]]
    %v1161 = vadd.f32 %v1159, 1e-05
    %v1162 = vrsqrt.pop %v1161
    %v1163 = vmul.f32 %v1162, %v1161
    %v1164 = vmul.f32 %v1163, %v1162
    %v1165 = vmul.f32 0.5, %v1164
    %v1166 = vsub.f32 1.5, %v1165
    %v1167 = vmul.f32 %v1162, %v1166
    %vm1168 = vweird.f32 %v1161
    %vm1169 = vweird.f32 %v1162
    %vm1170 = vmor %vm1168, %vm1169
    %v1171 = vsel %vm1170, %v1162, %v1167
    %v1172 = vstv %s1160
    %v1173 = vmul.f32 %v1172, %v1171
    %s1174 = sld [smem:[#allocation8 + $0x1]]
    %v1175 = vmul.f32 %v1155, %v1173
    %v1176 = vstv %s1174
    %v1177 = vsub.f32 %v1176, %v1175
    %v1178 = vmul.f32 %v1123, %v1173
    %v1179 = vadd.f32 %v1178, %v1177
    %v1180 = vmul.f32 %v1124, %v1173
    %v1181 = vadd.f32 %v1180, %v1177
    %vm1182 = vcmp.ge.f32.partialorder %v1179, 0.0
    %v1183 = vmul.f32 %v1113, %v1179
    %v1184 = vsel %vm1182, %v1179, %v1183
    %vm1185 = vcmp.ge.f32.partialorder %v1181, 0.0
    %v1186 = vmul.f32 %v1113, %v1181
    %v1187 = vsel %vm1185, %v1181, %v1186
    %v1188 = vmax.f32 %v1184, %v1187
    %s1189 = scalar_lea.vmem %s6, 2
    %1190 = vst.msk [vmem:[%s1189] sm:$0x3] %vm1046, %v1188
    %s1191 = sld [smem:[#allocation5 + $0x2]]
    %v1192 = vstv %s1191
    %v1193 = vadd.f32 %v553, %v1192
    %v1194 = vadd.f32 %v1011, %v1192
    %v1195 = vsel %vm1046, %v1193, 0.0
    %1196 = vadd.xlane.f32.xlu0 %v1195
    %v1197 = vpop.xlane.xlu0 %1196
    %v1198 = vsel %vm1046, %v1194, 0.0
    %1199 = vadd.xlane.f32.xlu0 %v1198
    %v1200 = vpop.xlane.xlu0 %1199
    %v1201 = vmul.f32 %v1193, %v1193
    %v1202 = vsel %vm1046, %v1201, 0.0
    %1203 = vadd.xlane.f32.xlu0 %v1202
    %v1204 = vpop.xlane.xlu0 %1203
    %v1205 = vmul.f32 %v1194, %v1194
    %v1206 = vsel %vm1046, %v1205, 0.0
    %1207 = vadd.xlane.f32.xlu0 %v1206
    %v1208 = vpop.xlane.xlu0 %1207
    %v1209 = vadd.f32 %v1197, %v1200
    %v1210 = vsel %vm1062, %v1209, 0.0
    %v1211 = vrot.slane %v1210, 4
    %v1212 = vadd.f32 %v1210, %v1211
    %v1213 = vrot.slane %v1212, 2
    %v1214 = vadd.f32 %v1212, %v1213
    %v1215 = vrot.slane %v1214, 1
    %v1216 = vadd.f32 %v1214, %v1215
    %v1217 = vadd.f32 %v1204, %v1208
    %v1218 = vsel %vm1062, %v1217, 0.0
    %v1219 = vrot.slane %v1218, 4
    %v1220 = vadd.f32 %v1218, %v1219
    %v1221 = vrot.slane %v1220, 2
    %v1222 = vadd.f32 %v1220, %v1221
    %v1223 = vrot.slane %v1222, 1
    %v1224 = vadd.f32 %v1222, %v1223
    %v1225 = vmul.f32 %v1216, %v1084
    %v1226 = vmul.f32 %v1224, %v1084
    %v1227 = vmul.f32 %v1225, %v1225
    %v1228 = vsub.f32 %v1226, %v1227
    %v1229 = vmax.f32 %v1228, 0.0
    %s1230 = sld [smem:[#allocation7 + $0x2]]
    %v1231 = vadd.f32 %v1229, 1e-05
    %v1232 = vrsqrt.pop %v1231
    %v1233 = vmul.f32 %v1232, %v1231
    %v1234 = vmul.f32 %v1233, %v1232
    %v1235 = vmul.f32 0.5, %v1234
    %v1236 = vsub.f32 1.5, %v1235
    %v1237 = vmul.f32 %v1232, %v1236
    %vm1238 = vweird.f32 %v1231
    %vm1239 = vweird.f32 %v1232
    %vm1240 = vmor %vm1238, %vm1239
    %v1241 = vsel %vm1240, %v1232, %v1237
    %v1242 = vstv %s1230
    %v1243 = vmul.f32 %v1242, %v1241
    %s1244 = sld [smem:[#allocation8 + $0x2]]
    %v1245 = vmul.f32 %v1225, %v1243
    %v1246 = vstv %s1244
    %v1247 = vsub.f32 %v1246, %v1245
    %v1248 = vmul.f32 %v1193, %v1243
    %v1249 = vadd.f32 %v1248, %v1247
    %v1250 = vmul.f32 %v1194, %v1243
    %v1251 = vadd.f32 %v1250, %v1247
    %vm1252 = vcmp.ge.f32.partialorder %v1249, 0.0
    %v1253 = vmul.f32 %v1113, %v1249
    %v1254 = vsel %vm1252, %v1249, %v1253
    %vm1255 = vcmp.ge.f32.partialorder %v1251, 0.0
    %v1256 = vmul.f32 %v1113, %v1251
    %v1257 = vsel %vm1255, %v1251, %v1256
    %v1258 = vmax.f32 %v1254, %v1257
    %s1259 = scalar_lea.vmem %s6, 4
    %1260 = vst.msk [vmem:[%s1259] sm:$0x3] %vm1046, %v1258
    %s1261 = sld [smem:[#allocation5 + $0x3]]
    %v1262 = vstv %s1261
    %v1263 = vadd.f32 %v561, %v1262
    %v1264 = vadd.f32 %v1017, %v1262
    %v1265 = vsel %vm1046, %v1263, 0.0
    %1266 = vadd.xlane.f32.xlu0 %v1265
    %v1267 = vpop.xlane.xlu0 %1266
    %v1268 = vsel %vm1046, %v1264, 0.0
    %1269 = vadd.xlane.f32.xlu0 %v1268
    %v1270 = vpop.xlane.xlu0 %1269
    %v1271 = vmul.f32 %v1263, %v1263
    %v1272 = vsel %vm1046, %v1271, 0.0
    %1273 = vadd.xlane.f32.xlu0 %v1272
    %v1274 = vpop.xlane.xlu0 %1273
    %v1275 = vmul.f32 %v1264, %v1264
    %v1276 = vsel %vm1046, %v1275, 0.0
    %1277 = vadd.xlane.f32.xlu0 %v1276
    %v1278 = vpop.xlane.xlu0 %1277
    %v1279 = vadd.f32 %v1267, %v1270
    %v1280 = vsel %vm1062, %v1279, 0.0
    %v1281 = vrot.slane %v1280, 4
    %v1282 = vadd.f32 %v1280, %v1281
    %v1283 = vrot.slane %v1282, 2
    %v1284 = vadd.f32 %v1282, %v1283
    %v1285 = vrot.slane %v1284, 1
    %v1286 = vadd.f32 %v1284, %v1285
    %v1287 = vadd.f32 %v1274, %v1278
    %v1288 = vsel %vm1062, %v1287, 0.0
    %v1289 = vrot.slane %v1288, 4
    %v1290 = vadd.f32 %v1288, %v1289
    %v1291 = vrot.slane %v1290, 2
    %v1292 = vadd.f32 %v1290, %v1291
    %v1293 = vrot.slane %v1292, 1
    %v1294 = vadd.f32 %v1292, %v1293
    %v1295 = vmul.f32 %v1286, %v1084
    %v1296 = vmul.f32 %v1294, %v1084
    %v1297 = vmul.f32 %v1295, %v1295
    %v1298 = vsub.f32 %v1296, %v1297
    %v1299 = vmax.f32 %v1298, 0.0
    %s1300 = sld [smem:[#allocation7 + $0x3]]
    %v1301 = vadd.f32 %v1299, 1e-05
    %v1302 = vrsqrt.pop %v1301
    %v1303 = vmul.f32 %v1302, %v1301
    %v1304 = vmul.f32 %v1303, %v1302
    %v1305 = vmul.f32 0.5, %v1304
    %v1306 = vsub.f32 1.5, %v1305
    %v1307 = vmul.f32 %v1302, %v1306
    %vm1308 = vweird.f32 %v1301
    %vm1309 = vweird.f32 %v1302
    %vm1310 = vmor %vm1308, %vm1309
    %v1311 = vsel %vm1310, %v1302, %v1307
    %v1312 = vstv %s1300
    %v1313 = vmul.f32 %v1312, %v1311
    %s1314 = sld [smem:[#allocation8 + $0x3]]
    %v1315 = vmul.f32 %v1295, %v1313
    %v1316 = vstv %s1314
    %v1317 = vsub.f32 %v1316, %v1315
    %v1318 = vmul.f32 %v1263, %v1313
    %v1319 = vadd.f32 %v1318, %v1317
    %v1320 = vmul.f32 %v1264, %v1313
    %v1321 = vadd.f32 %v1320, %v1317
    %vm1322 = vcmp.ge.f32.partialorder %v1319, 0.0
    %v1323 = vmul.f32 %v1113, %v1319
    %v1324 = vsel %vm1322, %v1319, %v1323
    %vm1325 = vcmp.ge.f32.partialorder %v1321, 0.0
    %v1326 = vmul.f32 %v1113, %v1321
    %v1327 = vsel %vm1325, %v1321, %v1326
    %v1328 = vmax.f32 %v1324, %v1327
    %s1329 = scalar_lea.vmem %s6, 6
    %1330 = vst.msk [vmem:[%s1329] sm:$0x3] %vm1046, %v1328
    %s1331 = sld [smem:[#allocation5 + $0x4]]
    %v1332 = vstv %s1331
    %v1333 = vadd.f32 %v569, %v1332
    %v1334 = vadd.f32 %v1023, %v1332
    %v1335 = vsel %vm1046, %v1333, 0.0
    %1336 = vadd.xlane.f32.xlu0 %v1335
    %v1337 = vpop.xlane.xlu0 %1336
    %v1338 = vsel %vm1046, %v1334, 0.0
    %1339 = vadd.xlane.f32.xlu0 %v1338
    %v1340 = vpop.xlane.xlu0 %1339
    %v1341 = vmul.f32 %v1333, %v1333
    %v1342 = vsel %vm1046, %v1341, 0.0
    %1343 = vadd.xlane.f32.xlu0 %v1342
    %v1344 = vpop.xlane.xlu0 %1343
    %v1345 = vmul.f32 %v1334, %v1334
    %v1346 = vsel %vm1046, %v1345, 0.0
    %1347 = vadd.xlane.f32.xlu0 %v1346
    %v1348 = vpop.xlane.xlu0 %1347
    %v1349 = vadd.f32 %v1337, %v1340
    %v1350 = vsel %vm1062, %v1349, 0.0
    %v1351 = vrot.slane %v1350, 4
    %v1352 = vadd.f32 %v1350, %v1351
    %v1353 = vrot.slane %v1352, 2
    %v1354 = vadd.f32 %v1352, %v1353
    %v1355 = vrot.slane %v1354, 1
    %v1356 = vadd.f32 %v1354, %v1355
    %v1357 = vadd.f32 %v1344, %v1348
    %v1358 = vsel %vm1062, %v1357, 0.0
    %v1359 = vrot.slane %v1358, 4
    %v1360 = vadd.f32 %v1358, %v1359
    %v1361 = vrot.slane %v1360, 2
    %v1362 = vadd.f32 %v1360, %v1361
    %v1363 = vrot.slane %v1362, 1
    %v1364 = vadd.f32 %v1362, %v1363
    %v1365 = vmul.f32 %v1356, %v1084
    %v1366 = vmul.f32 %v1364, %v1084
    %v1367 = vmul.f32 %v1365, %v1365
    %v1368 = vsub.f32 %v1366, %v1367
    %v1369 = vmax.f32 %v1368, 0.0
    %s1370 = sld [smem:[#allocation7 + $0x4]]
    %v1371 = vadd.f32 %v1369, 1e-05
    %v1372 = vrsqrt.pop %v1371
    %v1373 = vmul.f32 %v1372, %v1371
    %v1374 = vmul.f32 %v1373, %v1372
    %v1375 = vmul.f32 0.5, %v1374
    %v1376 = vsub.f32 1.5, %v1375
    %v1377 = vmul.f32 %v1372, %v1376
    %vm1378 = vweird.f32 %v1371
    %vm1379 = vweird.f32 %v1372
    %vm1380 = vmor %vm1378, %vm1379
    %v1381 = vsel %vm1380, %v1372, %v1377
    %v1382 = vstv %s1370
    %v1383 = vmul.f32 %v1382, %v1381
    %s1384 = sld [smem:[#allocation8 + $0x4]]
    %v1385 = vmul.f32 %v1365, %v1383
    %v1386 = vstv %s1384
    %v1387 = vsub.f32 %v1386, %v1385
    %v1388 = vmul.f32 %v1333, %v1383
    %v1389 = vadd.f32 %v1388, %v1387
    %v1390 = vmul.f32 %v1334, %v1383
    %v1391 = vadd.f32 %v1390, %v1387
    %vm1392 = vcmp.ge.f32.partialorder %v1389, 0.0
    %v1393 = vmul.f32 %v1113, %v1389
    %v1394 = vsel %vm1392, %v1389, %v1393
    %vm1395 = vcmp.ge.f32.partialorder %v1391, 0.0
    %v1396 = vmul.f32 %v1113, %v1391
    %v1397 = vsel %vm1395, %v1391, %v1396
    %v1398 = vmax.f32 %v1394, %v1397
    %s1399 = scalar_lea.vmem %s6, 8
    %1400 = vst.msk [vmem:[%s1399] sm:$0x3] %vm1046, %v1398
    %s1401 = sld [smem:[#allocation5 + $0x5]]
    %v1402 = vstv %s1401
    %v1403 = vadd.f32 %v577, %v1402
    %v1404 = vadd.f32 %v1029, %v1402
    %v1405 = vsel %vm1046, %v1403, 0.0
    %1406 = vadd.xlane.f32.xlu0 %v1405
    %v1407 = vpop.xlane.xlu0 %1406
    %v1408 = vsel %vm1046, %v1404, 0.0
    %1409 = vadd.xlane.f32.xlu0 %v1408
    %v1410 = vpop.xlane.xlu0 %1409
    %v1411 = vmul.f32 %v1403, %v1403
    %v1412 = vsel %vm1046, %v1411, 0.0
    %1413 = vadd.xlane.f32.xlu0 %v1412
    %v1414 = vpop.xlane.xlu0 %1413
    %v1415 = vmul.f32 %v1404, %v1404
    %v1416 = vsel %vm1046, %v1415, 0.0
    %1417 = vadd.xlane.f32.xlu0 %v1416
    %v1418 = vpop.xlane.xlu0 %1417
    %v1419 = vadd.f32 %v1407, %v1410
    %v1420 = vsel %vm1062, %v1419, 0.0
    %v1421 = vrot.slane %v1420, 4
    %v1422 = vadd.f32 %v1420, %v1421
    %v1423 = vrot.slane %v1422, 2
    %v1424 = vadd.f32 %v1422, %v1423
    %v1425 = vrot.slane %v1424, 1
    %v1426 = vadd.f32 %v1424, %v1425
    %v1427 = vadd.f32 %v1414, %v1418
    %v1428 = vsel %vm1062, %v1427, 0.0
    %v1429 = vrot.slane %v1428, 4
    %v1430 = vadd.f32 %v1428, %v1429
    %v1431 = vrot.slane %v1430, 2
    %v1432 = vadd.f32 %v1430, %v1431
    %v1433 = vrot.slane %v1432, 1
    %v1434 = vadd.f32 %v1432, %v1433
    %v1435 = vmul.f32 %v1426, %v1084
    %v1436 = vmul.f32 %v1434, %v1084
    %v1437 = vmul.f32 %v1435, %v1435
    %v1438 = vsub.f32 %v1436, %v1437
    %v1439 = vmax.f32 %v1438, 0.0
    %s1440 = sld [smem:[#allocation7 + $0x5]]
    %v1441 = vadd.f32 %v1439, 1e-05
    %v1442 = vrsqrt.pop %v1441
    %v1443 = vmul.f32 %v1442, %v1441
    %v1444 = vmul.f32 %v1443, %v1442
    %v1445 = vmul.f32 0.5, %v1444
    %v1446 = vsub.f32 1.5, %v1445
    %v1447 = vmul.f32 %v1442, %v1446
    %vm1448 = vweird.f32 %v1441
    %vm1449 = vweird.f32 %v1442
    %vm1450 = vmor %vm1448, %vm1449
    %v1451 = vsel %vm1450, %v1442, %v1447
    %v1452 = vstv %s1440
    %v1453 = vmul.f32 %v1452, %v1451
    %s1454 = sld [smem:[#allocation8 + $0x5]]
    %v1455 = vmul.f32 %v1435, %v1453
    %v1456 = vstv %s1454
    %v1457 = vsub.f32 %v1456, %v1455
    %v1458 = vmul.f32 %v1403, %v1453
    %v1459 = vadd.f32 %v1458, %v1457
    %v1460 = vmul.f32 %v1404, %v1453
    %v1461 = vadd.f32 %v1460, %v1457
    %vm1462 = vcmp.ge.f32.partialorder %v1459, 0.0
    %v1463 = vmul.f32 %v1113, %v1459
    %v1464 = vsel %vm1462, %v1459, %v1463
    %vm1465 = vcmp.ge.f32.partialorder %v1461, 0.0
    %v1466 = vmul.f32 %v1113, %v1461
    %v1467 = vsel %vm1465, %v1461, %v1466
    %v1468 = vmax.f32 %v1464, %v1467
    %s1469 = scalar_lea.vmem %s6, 10
    %1470 = vst.msk [vmem:[%s1469] sm:$0x3] %vm1046, %v1468
    %s1471 = sld [smem:[#allocation5 + $0x6]]
    %v1472 = vstv %s1471
    %v1473 = vadd.f32 %v585, %v1472
    %v1474 = vadd.f32 %v1035, %v1472
    %v1475 = vsel %vm1046, %v1473, 0.0
    %1476 = vadd.xlane.f32.xlu0 %v1475
    %v1477 = vpop.xlane.xlu0 %1476
    %v1478 = vsel %vm1046, %v1474, 0.0
    %1479 = vadd.xlane.f32.xlu0 %v1478
    %v1480 = vpop.xlane.xlu0 %1479
    %v1481 = vmul.f32 %v1473, %v1473
    %v1482 = vsel %vm1046, %v1481, 0.0
    %1483 = vadd.xlane.f32.xlu0 %v1482
    %v1484 = vpop.xlane.xlu0 %1483
    %v1485 = vmul.f32 %v1474, %v1474
    %v1486 = vsel %vm1046, %v1485, 0.0
    %1487 = vadd.xlane.f32.xlu0 %v1486
    %v1488 = vpop.xlane.xlu0 %1487
    %v1489 = vadd.f32 %v1477, %v1480
    %v1490 = vsel %vm1062, %v1489, 0.0
    %v1491 = vrot.slane %v1490, 4
    %v1492 = vadd.f32 %v1490, %v1491
    %v1493 = vrot.slane %v1492, 2
    %v1494 = vadd.f32 %v1492, %v1493
    %v1495 = vrot.slane %v1494, 1
    %v1496 = vadd.f32 %v1494, %v1495
    %v1497 = vadd.f32 %v1484, %v1488
    %v1498 = vsel %vm1062, %v1497, 0.0
    %v1499 = vrot.slane %v1498, 4
    %v1500 = vadd.f32 %v1498, %v1499
    %v1501 = vrot.slane %v1500, 2
    %v1502 = vadd.f32 %v1500, %v1501
    %v1503 = vrot.slane %v1502, 1
    %v1504 = vadd.f32 %v1502, %v1503
    %v1505 = vmul.f32 %v1496, %v1084
    %v1506 = vmul.f32 %v1504, %v1084
    %v1507 = vmul.f32 %v1505, %v1505
    %v1508 = vsub.f32 %v1506, %v1507
    %v1509 = vmax.f32 %v1508, 0.0
    %s1510 = sld [smem:[#allocation7 + $0x6]]
    %v1511 = vadd.f32 %v1509, 1e-05
    %v1512 = vrsqrt.pop %v1511
    %v1513 = vmul.f32 %v1512, %v1511
    %v1514 = vmul.f32 %v1513, %v1512
    %v1515 = vmul.f32 0.5, %v1514
    %v1516 = vsub.f32 1.5, %v1515
    %v1517 = vmul.f32 %v1512, %v1516
    %vm1518 = vweird.f32 %v1511
    %vm1519 = vweird.f32 %v1512
    %vm1520 = vmor %vm1518, %vm1519
    %v1521 = vsel %vm1520, %v1512, %v1517
    %v1522 = vstv %s1510
    %v1523 = vmul.f32 %v1522, %v1521
    %s1524 = sld [smem:[#allocation8 + $0x6]]
    %v1525 = vmul.f32 %v1505, %v1523
    %v1526 = vstv %s1524
    %v1527 = vsub.f32 %v1526, %v1525
    %v1528 = vmul.f32 %v1473, %v1523
    %v1529 = vadd.f32 %v1528, %v1527
    %v1530 = vmul.f32 %v1474, %v1523
    %v1531 = vadd.f32 %v1530, %v1527
    %vm1532 = vcmp.ge.f32.partialorder %v1529, 0.0
    %v1533 = vmul.f32 %v1113, %v1529
    %v1534 = vsel %vm1532, %v1529, %v1533
    %vm1535 = vcmp.ge.f32.partialorder %v1531, 0.0
    %v1536 = vmul.f32 %v1113, %v1531
    %v1537 = vsel %vm1535, %v1531, %v1536
    %v1538 = vmax.f32 %v1534, %v1537
    %s1539 = scalar_lea.vmem %s6, 12
    %1540 = vst.msk [vmem:[%s1539] sm:$0x3] %vm1046, %v1538
    %s1541 = sld [smem:[#allocation5 + $0x7]]
    %v1542 = vstv %s1541
    %v1543 = vadd.f32 %v593, %v1542
    %v1544 = vadd.f32 %v1041, %v1542
    %v1545 = vsel %vm1046, %v1543, 0.0
    %1546 = vadd.xlane.f32.xlu0 %v1545
    %v1547 = vpop.xlane.xlu0 %1546
    %v1548 = vsel %vm1046, %v1544, 0.0
    %1549 = vadd.xlane.f32.xlu0 %v1548
    %v1550 = vpop.xlane.xlu0 %1549
    %v1551 = vmul.f32 %v1543, %v1543
    %v1552 = vsel %vm1046, %v1551, 0.0
    %1553 = vadd.xlane.f32.xlu0 %v1552
    %v1554 = vpop.xlane.xlu0 %1553
    %v1555 = vmul.f32 %v1544, %v1544
    %v1556 = vsel %vm1046, %v1555, 0.0
    %1557 = vadd.xlane.f32.xlu0 %v1556
    %v1558 = vpop.xlane.xlu0 %1557
    %v1559 = vadd.f32 %v1547, %v1550
    %v1560 = vsel %vm1062, %v1559, 0.0
    %v1561 = vrot.slane %v1560, 4
    %v1562 = vadd.f32 %v1560, %v1561
    %v1563 = vrot.slane %v1562, 2
    %v1564 = vadd.f32 %v1562, %v1563
    %v1565 = vrot.slane %v1564, 1
    %v1566 = vadd.f32 %v1564, %v1565
    %v1567 = vadd.f32 %v1554, %v1558
    %v1568 = vsel %vm1062, %v1567, 0.0
    %v1569 = vrot.slane %v1568, 4
    %v1570 = vadd.f32 %v1568, %v1569
    %v1571 = vrot.slane %v1570, 2
    %v1572 = vadd.f32 %v1570, %v1571
    %v1573 = vrot.slane %v1572, 1
    %v1574 = vadd.f32 %v1572, %v1573
    %v1575 = vmul.f32 %v1566, %v1084
    %v1576 = vmul.f32 %v1574, %v1084
    %v1577 = vmul.f32 %v1575, %v1575
    %v1578 = vsub.f32 %v1576, %v1577
    %v1579 = vmax.f32 %v1578, 0.0
    %s1580 = sld [smem:[#allocation7 + $0x7]]
    %v1581 = vadd.f32 %v1579, 1e-05
    %v1582 = vrsqrt.pop %v1581
    %v1583 = vmul.f32 %v1582, %v1581
    %v1584 = vmul.f32 %v1583, %v1582
    %v1585 = vmul.f32 0.5, %v1584
    %v1586 = vsub.f32 1.5, %v1585
    %v1587 = vmul.f32 %v1582, %v1586
    %vm1588 = vweird.f32 %v1581
    %vm1589 = vweird.f32 %v1582
    %vm1590 = vmor %vm1588, %vm1589
    %v1591 = vsel %vm1590, %v1582, %v1587
    %v1592 = vstv %s1580
    %v1593 = vmul.f32 %v1592, %v1591
    %s1594 = sld [smem:[#allocation8 + $0x7]]
    %v1595 = vmul.f32 %v1575, %v1593
    %v1596 = vstv %s1594
    %v1597 = vsub.f32 %v1596, %v1595
    %v1598 = vmul.f32 %v1543, %v1593
    %v1599 = vadd.f32 %v1598, %v1597
    %v1600 = vmul.f32 %v1544, %v1593
    %v1601 = vadd.f32 %v1600, %v1597
    %vm1602 = vcmp.ge.f32.partialorder %v1599, 0.0
    %v1603 = vmul.f32 %v1113, %v1599
    %v1604 = vsel %vm1602, %v1599, %v1603
    %vm1605 = vcmp.ge.f32.partialorder %v1601, 0.0
    %v1606 = vmul.f32 %v1113, %v1601
    %v1607 = vsel %vm1605, %v1601, %v1606
    %v1608 = vmax.f32 %v1604, %v1607
    %s1609 = scalar_lea.vmem %s6, 14
    %1610 = vst.msk [vmem:[%s1609] sm:$0x3] %vm1046, %v1608
    // Predicated region
    $region42: #{cnn_forward.1} parent=1 // pred_check
      _
    $region43: #{cnn_forward.1} parent=1 // pred_check_branch
      %1612 = sbr.rel (0) target = $region45
    $region44: #{cnn_forward.1} parent=1 // pred_region
      _
    $region45: #{cnn_forward.1} parent=1 // pred_fallthru
      _
    // Predicated region
    $region46: #{cnn_forward.1} parent=1 // pred_check
      _
    $region47: #{cnn_forward.1} parent=1 // pred_check_branch
      %1614 = sbr.rel (0) target = $region49
    $region48: #{cnn_forward.1} parent=1 // pred_region
      _
    $region49: #{cnn_forward.1} parent=1 // pred_fallthru
      _
    %1615 = vsyncpa [#allocation4], 1
    %1616 = vsyncpa [#allocation6], 1
    %1617 = vsyncpa [#allocation9], 1

</llo_original>
